<compile_context>
chip_gen: v7x
topology: tpu7x:2x2x1
jax: 0.10.0
libtpu: 0.0.40
codegen_flags: <defaults>
</compile_context>

<pallas_src>
import functools

import jax
import jax.numpy as jnp
from jax.experimental import pallas as pl
from jax.experimental.pallas import tpu as pltpu


# -----------------------------------------------------------------------------
# Fused Pallas kernel
# -----------------------------------------------------------------------------
def _fused_forward_kernel(T, B, H, R,
                          lam_ref,      # SMEM (3,)   softmax(lambda_params)
                          x_ref,        # (N=T*B, E)  bf16 time-major embeddings
                          w_in_ref,     # (E, 9H)     bf16 [w_ih_fwd | w_ih_bwd | proj_w]
                          b_in_ref,     # (1, 9H)     f32  [b_fwd    | b_bwd    | proj_b]
                          whh_bd_ref,   # (2H, 8H)    bf16 block-diag [whh_f ; whh_b]
                          rnn_wih_ref,  # (H, 4R)     bf16 classifier LSTM input weights
                          rnn_whh_ref,  # (R, 4R)     bf16 classifier LSTM recurrent weights
                          rnn_b_ref,    # (1, 4R)     f32
                          fc_w_ref,     # (R, C)      f32
                          fc_b_ref,     # (1, C)      f32
                          out_ref):     # (B, C)      f32 logits
    f32 = jnp.float32
    bf16 = jnp.bfloat16

    # --- hoisted input projection: fwd gates + bwd gates + e0_proj in ONE matmul
    xg = jnp.dot(x_ref[...], w_in_ref[...],
                 preferred_element_type=f32) + b_in_ref[...]          # (N, 9H) f32

    def lstm_cell(gates, c, n):
        # gate order (i, f, o, g): one contiguous sigmoid + one tanh.
        sig = jax.nn.sigmoid(gates[:, 0:3 * n])
        g = jnp.tanh(gates[:, 3 * n:4 * n])
        c = sig[:, n:2 * n] * c + sig[:, 0:n] * g
        h = sig[:, 2 * n:3 * n] * jnp.tanh(c)
        return h, c

    # --- frozen "ELMo" recurrences (fwd + bwd fused), h/c live in vregs --------
    whh_bd = whh_bd_ref[...]                                          # (2H, 8H) bf16
    h_f = jnp.zeros((B, H), f32)
    c_f = jnp.zeros((B, H), f32)
    h_b = jnp.zeros((B, H), f32)
    c_b = jnp.zeros((B, H), f32)
    hf_steps = []                      # hidden at time t = s
    hb_steps = []                      # hidden at time t = T-1-s (processing order)
    for s in range(T):                 # static T -> fully unrolled
        tf = s
        tb = T - 1 - s
        h_fb = jnp.concatenate([h_f, h_b], axis=1).astype(bf16)      # (B, 2H)
        rec = jnp.dot(h_fb, whh_bd, preferred_element_type=f32)      # (B, 8H) one MXU op
        g_f = xg[tf * B:(tf + 1) * B, 0:4 * H] + rec[:, 0:4 * H]
        g_b = xg[tb * B:(tb + 1) * B, 4 * H:8 * H] + rec[:, 4 * H:8 * H]
        h_f, c_f = lstm_cell(g_f, c_f, H)
        h_b, c_b = lstm_cell(g_b, c_b, H)
        hf_steps.append(h_f)
        hb_steps.append(h_b)

    # --- lambda-weighted combiner (softmax done in wrapper) --------------------
    l0 = lam_ref[0]
    l1 = lam_ref[1]
    l2 = lam_ref[2]
    e0 = xg[:, 8 * H:9 * H]                                           # (N, H)
    hf_all = jnp.concatenate(hf_steps, axis=0)                        # (N, H) time order
    hb_all = jnp.concatenate(hb_steps[::-1], axis=0)                  # (N, H) time order
    combined = l0 * e0 + l1 * hf_all + l2 * hb_all                    # (N, H) f32

    # --- classifier LSTM: hoisted input projection, then recurrence ------------
    rnn_xg = jnp.dot(combined.astype(bf16), rnn_wih_ref[...],
                     preferred_element_type=f32) + rnn_b_ref[...]     # (N, 4R) f32
    h = jnp.zeros((B, R), f32)
    c = jnp.zeros((B, R), f32)
    for t in range(T):
        gates = rnn_xg[t * B:(t + 1) * B, :] + jnp.dot(
            h.astype(bf16), rnn_whh_ref[...], preferred_element_type=f32)
        h, c = lstm_cell(gates, c, R)

    # --- FC head on the final hidden state only (== h_n[-1]) -------------------
    out_ref[...] = jnp.dot(h, fc_w_ref[...],
                           preferred_element_type=f32) + fc_b_ref[...]


def fused_forward(lambdas, x_flat, p, T, B):
    """One pallas_call for the whole classifier forward pass."""
    N, E = x_flat.shape
    H = p["b_in"].shape[1] // 9
    R = p["rnn_whh"].shape[0]
    C = p["fc_w"].shape[1]
    kernel = functools.partial(_fused_forward_kernel, T, B, H, R)
    return pl.pallas_call(
        kernel,
        out_shape=jax.ShapeDtypeStruct((B, C), jnp.float32),
        grid=(1,),
        in_specs=[
            pl.BlockSpec(memory_space=pltpu.MemorySpace.SMEM),   # lambdas (3,)
            pl.BlockSpec((N, E), lambda i: (0, 0)),
            pl.BlockSpec((E, 9 * H), lambda i: (0, 0)),
            pl.BlockSpec((1, 9 * H), lambda i: (0, 0)),
            pl.BlockSpec((2 * H, 8 * H), lambda i: (0, 0)),
            pl.BlockSpec((H, 4 * R), lambda i: (0, 0)),
            pl.BlockSpec((R, 4 * R), lambda i: (0, 0)),
            pl.BlockSpec((1, 4 * R), lambda i: (0, 0)),
            pl.BlockSpec((R, C), lambda i: (0, 0)),
            pl.BlockSpec((1, C), lambda i: (0, 0)),
        ],
        out_specs=pl.BlockSpec((B, C), lambda i: (0, 0)),
    )(lambdas, x_flat, p["w_in"], p["b_in"], p["whh_bd"],
      p["rnn_wih"], p["rnn_whh"], p["rnn_b"], p["fc_w"], p["fc_b"])


# -----------------------------------------------------------------------------
# Parameters (synthetic; a real PyTorch loader must permute gate columns from
# (i,f,g,o) to (i,f,o,g) and sum b_ih + b_hh into the single bias per LSTM).
# -----------------------------------------------------------------------------
def init_params(key, vocab, embed_dim, hidden_dim, rnn_hidden, num_classes):
    ks = jax.random.split(key, 14)

    def w(k, shape, scale=0.08):
        return scale * jax.random.normal(k, shape, jnp.float32)

    H = hidden_dim
    R = rnn_hidden
    # frozen synthetic "ELMo": embedding + fwd LSTM + bwd LSTM, gate order (i,f,o,g)
    w_ih_f = w(ks[1], (embed_dim, 4 * H))
    w_ih_b = w(ks[2], (embed_dim, 4 * H))
    b_f = w(ks[3], (1, 4 * H))
    b_b = w(ks[4], (1, 4 * H))
    # e0_proj Linear(embed_dim, hidden_dim)  (embed_dim != hidden_dim here)
    proj_w = w(ks[5], (embed_dim, H))
    proj_b = w(ks[6], (1, H))
    whh_f = w(ks[7], (H, 4 * H))
    whh_b = w(ks[8], (H, 4 * H))
    # block-diagonal fused recurrent weight: [h_f | h_b] @ whh_bd = [h_f@whh_f | h_b@whh_b]
    whh_bd = jnp.zeros((2 * H, 8 * H), jnp.float32)
    whh_bd = whh_bd.at[0:H, 0:4 * H].set(whh_f)
    whh_bd = whh_bd.at[H:2 * H, 4 * H:8 * H].set(whh_b)
    return {
        "embed": w(ks[0], (vocab, embed_dim)),
        # one bf16 input-projection matmul feeds fwd gates, bwd gates and e0_proj
        "w_in": jnp.concatenate([w_ih_f, w_ih_b, proj_w], axis=1).astype(jnp.bfloat16),
        "b_in": jnp.concatenate([b_f, b_b, proj_b], axis=1),          # (1, 9H) f32
        "whh_bd": whh_bd.astype(jnp.bfloat16),                        # (2H, 8H)
        # trainable lambda mixing weights (zeros, as in the reference module)
        "lambda_params": jnp.zeros((3,), jnp.float32),
        # classifier_rnn LSTM(H -> rnn_hidden), 1 layer, batch_first, gates (i,f,o,g)
        "rnn_wih": w(ks[9], (H, 4 * R)).astype(jnp.bfloat16),
        "rnn_whh": w(ks[10], (R, 4 * R)).astype(jnp.bfloat16),
        "rnn_b": w(ks[11], (1, 4 * R)),                               # = b_ih + b_hh
        # fc Linear(rnn_hidden, num_classes)
        "fc_w": w(ks[12], (R, num_classes)),
        "fc_b": w(ks[13], (1, num_classes)),
    }


# -----------------------------------------------------------------------------
# Wrapper
# -----------------------------------------------------------------------------
@jax.jit
def classifier_forward(params, input_ids):
    B, T = input_ids.shape
    # TODO(synk): embedding gather and the 3-element lambda softmax stay in plain
    # JAX (tiny one-off ops; an in-kernel tiled gather is not worth it at this size).
    emb = jnp.take(params["embed"], input_ids, axis=0)               # (B, T, E)
    x_flat = (jnp.transpose(emb, (1, 0, 2))
              .reshape(T * B, -1).astype(jnp.bfloat16))              # (T*B, E) time-major
    lambdas = jax.nn.softmax(params["lambda_params"])                # (3,)
    return fused_forward(lambdas, x_flat, params, T, B)              # (B, num_classes)


# -----------------------------------------------------------------------------
# Pure-JAX reference (identical math / precision policy) for a sanity check.
# -----------------------------------------------------------------------------
def reference_forward(params, input_ids):
    f32, bf16 = jnp.float32, jnp.bfloat16
    B, T = input_ids.shape
    H = params["b_in"].shape[1] // 9
    R = params["rnn_whh"].shape[0]
    emb = jnp.take(params["embed"], input_ids, axis=0)               # (B, T, E)
    x_flat = jnp.transpose(emb, (1, 0, 2)).reshape(T * B, -1).astype(bf16)
    xg = jnp.dot(x_flat, params["w_in"], preferred_element_type=f32) + params["b_in"]
    xg3 = xg.reshape(T, B, 9 * H)

    def cell(gates, c, n):
        sig = jax.nn.sigmoid(gates[:, 0:3 * n])
        g = jnp.tanh(gates[:, 3 * n:4 * n])
        c = sig[:, n:2 * n] * c + sig[:, 0:n] * g
        return sig[:, 2 * n:3 * n] * jnp.tanh(c), c

    whh_f = params["whh_bd"][0:H, 0:4 * H]
    whh_b = params["whh_bd"][H:2 * H, 4 * H:8 * H]
    h_f = jnp.zeros((B, H), f32); c_f = jnp.zeros((B, H), f32)
    h_b = jnp.zeros((B, H), f32); c_b = jnp.zeros((B, H), f32)
    hf = [None] * T
    hb = [None] * T
    for s in range(T):
        gf = xg3[s, :, 0:4 * H] + jnp.dot(h_f.astype(bf16), whh_f,
                                          preferred_element_type=f32)
        h_f, c_f = cell(gf, c_f, H)
        hf[s] = h_f
        tb = T - 1 - s
        gb = xg3[tb, :, 4 * H:8 * H] + jnp.dot(h_b.astype(bf16), whh_b,
                                               preferred_element_type=f32)
        h_b, c_b = cell(gb, c_b, H)
        hb[tb] = h_b
    e0 = xg3[:, :, 8 * H:9 * H]
    lam = jax.nn.softmax(params["lambda_params"])
    combined = lam[0] * e0 + lam[1] * jnp.stack(hf) + lam[2] * jnp.stack(hb)  # (T,B,H)
    rnn_xg = (jnp.dot(combined.reshape(T * B, H).astype(bf16), params["rnn_wih"],
                      preferred_element_type=f32) + params["rnn_b"]).reshape(T, B, 4 * R)
    h = jnp.zeros((B, R), f32); c = jnp.zeros((B, R), f32)
    for t in range(T):
        gates = rnn_xg[t] + jnp.dot(h.astype(bf16), params["rnn_whh"],
                                    preferred_element_type=f32)
        h, c = cell(gates, c, R)
    return jnp.dot(h, params["fc_w"], preferred_element_type=f32) + params["fc_b"]


# -----------------------------------------------------------------------------
# Main
# -----------------------------------------------------------------------------
if __name__ == "__main__":
    B, T = 2, 8
    VOCAB = 50
    EMBED_DIM = 48      # != hidden_dim -> e0_proj is a real Linear
    HIDDEN_DIM = 32
    RNN_HIDDEN = 128    # PyTorch default rnn_hidden_size
    NUM_CLASSES = 5

    key = jax.random.PRNGKey(0)
    k_params, k_ids = jax.random.split(key)
    params = init_params(k_params, VOCAB, EMBED_DIM, HIDDEN_DIM, RNN_HIDDEN,
                         NUM_CLASSES)
    input_ids = jax.random.randint(k_ids, (B, T), 0, VOCAB, dtype=jnp.int32)

    logits = jax.block_until_ready(classifier_forward(params, input_ids))
    assert logits.shape == (B, NUM_CLASSES)
    assert logits.dtype == jnp.float32

    ref = jax.block_until_ready(reference_forward(params, input_ids))
    max_err = float(jnp.max(jnp.abs(logits - ref)))
    assert max_err < 2e-2, f"kernel/reference mismatch: {max_err}"
    print("KERNEL_OK")
</pallas_src>

<mosaic_0001>
module attributes {stable_mosaic.version = 11 : i64} {
  func.func @_fused_forward_kernel(%arg0: i32, %arg1: memref<3xf32, #tpu.memory_space<smem>>, %arg2: memref<16x48xbf16, #tpu.memory_space<vmem>>, %arg3: memref<48x288xbf16, #tpu.memory_space<vmem>>, %arg4: memref<1x288xf32, #tpu.memory_space<vmem>>, %arg5: memref<64x256xbf16, #tpu.memory_space<vmem>>, %arg6: memref<32x512xbf16, #tpu.memory_space<vmem>>, %arg7: memref<128x512xbf16, #tpu.memory_space<vmem>>, %arg8: memref<1x512xf32, #tpu.memory_space<vmem>>, %arg9: memref<128x5xf32, #tpu.memory_space<vmem>>, %arg10: memref<1x5xf32, #tpu.memory_space<vmem>>, %arg11: memref<2x5xf32, #tpu.memory_space<vmem>>) attributes {dimension_semantics = [#tpu.dimension_semantics<arbitrary>], iteration_bounds = array<i64: 1>, scalar_prefetch = 0 : i64, scratch_operands = 0 : i64, tpu.core_type = #tpu.core_type<tc>, window_params = [{transform_indices = @transform_0, window_bounds = array<i64: 3>}, {pipeline_mode = #tpu.pipeline_mode<synchronous>, transform_indices = @transform_1, window_bounds = array<i64: 16, 48>}, {pipeline_mode = #tpu.pipeline_mode<synchronous>, transform_indices = @transform_2, window_bounds = array<i64: 48, 288>}, {pipeline_mode = #tpu.pipeline_mode<synchronous>, transform_indices = @transform_3, window_bounds = array<i64: 1, 288>}, {pipeline_mode = #tpu.pipeline_mode<synchronous>, transform_indices = @transform_4, window_bounds = array<i64: 64, 256>}, {pipeline_mode = #tpu.pipeline_mode<synchronous>, transform_indices = @transform_5, window_bounds = array<i64: 32, 512>}, {pipeline_mode = #tpu.pipeline_mode<synchronous>, transform_indices = @transform_6, window_bounds = array<i64: 128, 512>}, {pipeline_mode = #tpu.pipeline_mode<synchronous>, transform_indices = @transform_7, window_bounds = array<i64: 1, 512>}, {pipeline_mode = #tpu.pipeline_mode<synchronous>, transform_indices = @transform_8, window_bounds = array<i64: 128, 5>}, {pipeline_mode = #tpu.pipeline_mode<synchronous>, transform_indices = @transform_9, window_bounds = array<i64: 1, 5>}, {pipeline_mode = #tpu.pipeline_mode<synchronous>, transform_indices = @transform_10, window_bounds = array<i64: 2, 5>}]} {
    %c0 = arith.constant 0 : index
    %c0_0 = arith.constant 0 : index
    %0 = vector.load %arg2[%c0, %c0_0] : memref<16x48xbf16, #tpu.memory_space<vmem>>, vector<16x48xbf16>
    %c0_1 = arith.constant 0 : index
    %c0_2 = arith.constant 0 : index
    %1 = vector.load %arg3[%c0_1, %c0_2] : memref<48x288xbf16, #tpu.memory_space<vmem>>, vector<48x288xbf16>
    %cst = arith.constant dense<0.000000e+00> : vector<16x288xf32>
    %2 = tpu.matmul %0, %1, %cst {dimension_numbers = #tpu.dot_dimension_numbers<[1], [0], [0], [1], [0, 0, 1, 1], [], []>} : vector<16x48xbf16>, vector<48x288xbf16>, vector<16x288xf32> -> vector<16x288xf32>
    %c0_3 = arith.constant 0 : index
    %c0_4 = arith.constant 0 : index
    %3 = vector.load %arg4[%c0_3, %c0_4] : memref<1x288xf32, #tpu.memory_space<vmem>>, vector<1x288xf32>
    %4 = vector.broadcast %3 : vector<1x288xf32> to vector<16x288xf32>
    %5 = arith.addf %2, %4 : vector<16x288xf32>
    %c0_5 = arith.constant 0 : index
    %c0_6 = arith.constant 0 : index
    %6 = vector.load %arg5[%c0_5, %c0_6] : memref<64x256xbf16, #tpu.memory_space<vmem>>, vector<64x256xbf16>
    %cst_7 = arith.constant 0.000000e+00 : f32
    %7 = vector.broadcast %cst_7 : f32 to vector<2x32xf32>
    %cst_8 = arith.constant 0.000000e+00 : f32
    %8 = vector.broadcast %cst_8 : f32 to vector<2x32xf32>
    %cst_9 = arith.constant 0.000000e+00 : f32
    %9 = vector.broadcast %cst_9 : f32 to vector<2x32xf32>
    %cst_10 = arith.constant 0.000000e+00 : f32
    %10 = vector.broadcast %cst_10 : f32 to vector<2x32xf32>
    %11 = tpu.concatenate %7, %9 in 1 : vector<2x32xf32>, vector<2x32xf32> -> vector<2x64xf32>
    %12 = arith.truncf %11 : vector<2x64xf32> to vector<2x64xbf16>
    %cst_11 = arith.constant dense<0.000000e+00> : vector<2x256xf32>
    %13 = tpu.matmul %12, %6, %cst_11 {dimension_numbers = #tpu.dot_dimension_numbers<[1], [0], [0], [1], [0, 0, 1, 1], [], []>} : vector<2x64xbf16>, vector<64x256xbf16>, vector<2x256xf32> -> vector<2x256xf32>
    %14 = vector.extract_strided_slice %5 {offsets = [0, 0], sizes = [2, 128], strides = [1, 1]} : vector<16x288xf32> to vector<2x128xf32>
    %15 = vector.extract_strided_slice %13 {offsets = [0, 0], sizes = [2, 128], strides = [1, 1]} : vector<2x256xf32> to vector<2x128xf32>
    %16 = arith.addf %14, %15 : vector<2x128xf32>
    %17 = vector.extract_strided_slice %5 {offsets = [14, 128], sizes = [2, 128], strides = [1, 1]} : vector<16x288xf32> to vector<2x128xf32>
    %18 = vector.extract_strided_slice %13 {offsets = [0, 128], sizes = [2, 128], strides = [1, 1]} : vector<2x256xf32> to vector<2x128xf32>
    %19 = arith.addf %17, %18 : vector<2x128xf32>
    %20 = vector.extract_strided_slice %16 {offsets = [0, 0], sizes = [2, 96], strides = [1, 1]} : vector<2x128xf32> to vector<2x96xf32>
    %21 = arith.negf %20 : vector<2x96xf32>
    %22 = math.exp %21 : vector<2x96xf32>
    %cst_12 = arith.constant 1.000000e+00 : f32
    %23 = vector.broadcast %cst_12 : f32 to vector<2x96xf32>
    %24 = arith.addf %23, %22 : vector<2x96xf32>
    %25 = arith.divf %23, %24 : vector<2x96xf32>
    %26 = vector.extract_strided_slice %16 {offsets = [0, 96], sizes = [2, 32], strides = [1, 1]} : vector<2x128xf32> to vector<2x32xf32>
    %27 = math.tanh %26 : vector<2x32xf32>
    %28 = vector.extract_strided_slice %25 {offsets = [0, 32], sizes = [2, 32], strides = [1, 1]} : vector<2x96xf32> to vector<2x32xf32>
    %29 = arith.mulf %28, %8 : vector<2x32xf32>
    %30 = vector.extract_strided_slice %25 {offsets = [0, 0], sizes = [2, 32], strides = [1, 1]} : vector<2x96xf32> to vector<2x32xf32>
    %31 = arith.mulf %30, %27 : vector<2x32xf32>
    %32 = arith.addf %29, %31 : vector<2x32xf32>
    %33 = vector.extract_strided_slice %25 {offsets = [0, 64], sizes = [2, 32], strides = [1, 1]} : vector<2x96xf32> to vector<2x32xf32>
    %34 = math.tanh %32 : vector<2x32xf32>
    %35 = arith.mulf %33, %34 : vector<2x32xf32>
    %36 = vector.extract_strided_slice %19 {offsets = [0, 0], sizes = [2, 96], strides = [1, 1]} : vector<2x128xf32> to vector<2x96xf32>
    %37 = arith.negf %36 : vector<2x96xf32>
    %38 = math.exp %37 : vector<2x96xf32>
    %cst_13 = arith.constant 1.000000e+00 : f32
    %39 = vector.broadcast %cst_13 : f32 to vector<2x96xf32>
    %40 = arith.addf %39, %38 : vector<2x96xf32>
    %41 = arith.divf %39, %40 : vector<2x96xf32>
    %42 = vector.extract_strided_slice %19 {offsets = [0, 96], sizes = [2, 32], strides = [1, 1]} : vector<2x128xf32> to vector<2x32xf32>
    %43 = math.tanh %42 : vector<2x32xf32>
    %44 = vector.extract_strided_slice %41 {offsets = [0, 32], sizes = [2, 32], strides = [1, 1]} : vector<2x96xf32> to vector<2x32xf32>
    %45 = arith.mulf %44, %10 : vector<2x32xf32>
    %46 = vector.extract_strided_slice %41 {offsets = [0, 0], sizes = [2, 32], strides = [1, 1]} : vector<2x96xf32> to vector<2x32xf32>
    %47 = arith.mulf %46, %43 : vector<2x32xf32>
    %48 = arith.addf %45, %47 : vector<2x32xf32>
    %49 = vector.extract_strided_slice %41 {offsets = [0, 64], sizes = [2, 32], strides = [1, 1]} : vector<2x96xf32> to vector<2x32xf32>
    %50 = math.tanh %48 : vector<2x32xf32>
    %51 = arith.mulf %49, %50 : vector<2x32xf32>
    %52 = tpu.concatenate %35, %51 in 1 : vector<2x32xf32>, vector<2x32xf32> -> vector<2x64xf32>
    %53 = arith.truncf %52 : vector<2x64xf32> to vector<2x64xbf16>
    %cst_14 = arith.constant dense<0.000000e+00> : vector<2x256xf32>
    %54 = tpu.matmul %53, %6, %cst_14 {dimension_numbers = #tpu.dot_dimension_numbers<[1], [0], [0], [1], [0, 0, 1, 1], [], []>} : vector<2x64xbf16>, vector<64x256xbf16>, vector<2x256xf32> -> vector<2x256xf32>
    %55 = vector.extract_strided_slice %5 {offsets = [2, 0], sizes = [2, 128], strides = [1, 1]} : vector<16x288xf32> to vector<2x128xf32>
    %56 = vector.extract_strided_slice %54 {offsets = [0, 0], sizes = [2, 128], strides = [1, 1]} : vector<2x256xf32> to vector<2x128xf32>
    %57 = arith.addf %55, %56 : vector<2x128xf32>
    %58 = vector.extract_strided_slice %5 {offsets = [12, 128], sizes = [2, 128], strides = [1, 1]} : vector<16x288xf32> to vector<2x128xf32>
    %59 = vector.extract_strided_slice %54 {offsets = [0, 128], sizes = [2, 128], strides = [1, 1]} : vector<2x256xf32> to vector<2x128xf32>
    %60 = arith.addf %58, %59 : vector<2x128xf32>
    %61 = vector.extract_strided_slice %57 {offsets = [0, 0], sizes = [2, 96], strides = [1, 1]} : vector<2x128xf32> to vector<2x96xf32>
    %62 = arith.negf %61 : vector<2x96xf32>
    %63 = math.exp %62 : vector<2x96xf32>
    %cst_15 = arith.constant 1.000000e+00 : f32
    %64 = vector.broadcast %cst_15 : f32 to vector<2x96xf32>
    %65 = arith.addf %64, %63 : vector<2x96xf32>
    %66 = arith.divf %64, %65 : vector<2x96xf32>
    %67 = vector.extract_strided_slice %57 {offsets = [0, 96], sizes = [2, 32], strides = [1, 1]} : vector<2x128xf32> to vector<2x32xf32>
    %68 = math.tanh %67 : vector<2x32xf32>
    %69 = vector.extract_strided_slice %66 {offsets = [0, 32], sizes = [2, 32], strides = [1, 1]} : vector<2x96xf32> to vector<2x32xf32>
    %70 = arith.mulf %69, %32 : vector<2x32xf32>
    %71 = vector.extract_strided_slice %66 {offsets = [0, 0], sizes = [2, 32], strides = [1, 1]} : vector<2x96xf32> to vector<2x32xf32>
    %72 = arith.mulf %71, %68 : vector<2x32xf32>
    %73 = arith.addf %70, %72 : vector<2x32xf32>
    %74 = vector.extract_strided_slice %66 {offsets = [0, 64], sizes = [2, 32], strides = [1, 1]} : vector<2x96xf32> to vector<2x32xf32>
    %75 = math.tanh %73 : vector<2x32xf32>
    %76 = arith.mulf %74, %75 : vector<2x32xf32>
    %77 = vector.extract_strided_slice %60 {offsets = [0, 0], sizes = [2, 96], strides = [1, 1]} : vector<2x128xf32> to vector<2x96xf32>
    %78 = arith.negf %77 : vector<2x96xf32>
    %79 = math.exp %78 : vector<2x96xf32>
    %cst_16 = arith.constant 1.000000e+00 : f32
    %80 = vector.broadcast %cst_16 : f32 to vector<2x96xf32>
    %81 = arith.addf %80, %79 : vector<2x96xf32>
    %82 = arith.divf %80, %81 : vector<2x96xf32>
    %83 = vector.extract_strided_slice %60 {offsets = [0, 96], sizes = [2, 32], strides = [1, 1]} : vector<2x128xf32> to vector<2x32xf32>
    %84 = math.tanh %83 : vector<2x32xf32>
    %85 = vector.extract_strided_slice %82 {offsets = [0, 32], sizes = [2, 32], strides = [1, 1]} : vector<2x96xf32> to vector<2x32xf32>
    %86 = arith.mulf %85, %48 : vector<2x32xf32>
    %87 = vector.extract_strided_slice %82 {offsets = [0, 0], sizes = [2, 32], strides = [1, 1]} : vector<2x96xf32> to vector<2x32xf32>
    %88 = arith.mulf %87, %84 : vector<2x32xf32>
    %89 = arith.addf %86, %88 : vector<2x32xf32>
    %90 = vector.extract_strided_slice %82 {offsets = [0, 64], sizes = [2, 32], strides = [1, 1]} : vector<2x96xf32> to vector<2x32xf32>
    %91 = math.tanh %89 : vector<2x32xf32>
    %92 = arith.mulf %90, %91 : vector<2x32xf32>
    %93 = tpu.concatenate %76, %92 in 1 : vector<2x32xf32>, vector<2x32xf32> -> vector<2x64xf32>
    %94 = arith.truncf %93 : vector<2x64xf32> to vector<2x64xbf16>
    %cst_17 = arith.constant dense<0.000000e+00> : vector<2x256xf32>
    %95 = tpu.matmul %94, %6, %cst_17 {dimension_numbers = #tpu.dot_dimension_numbers<[1], [0], [0], [1], [0, 0, 1, 1], [], []>} : vector<2x64xbf16>, vector<64x256xbf16>, vector<2x256xf32> -> vector<2x256xf32>
    %96 = vector.extract_strided_slice %5 {offsets = [4, 0], sizes = [2, 128], strides = [1, 1]} : vector<16x288xf32> to vector<2x128xf32>
    %97 = vector.extract_strided_slice %95 {offsets = [0, 0], sizes = [2, 128], strides = [1, 1]} : vector<2x256xf32> to vector<2x128xf32>
    %98 = arith.addf %96, %97 : vector<2x128xf32>
    %99 = vector.extract_strided_slice %5 {offsets = [10, 128], sizes = [2, 128], strides = [1, 1]} : vector<16x288xf32> to vector<2x128xf32>
    %100 = vector.extract_strided_slice %95 {offsets = [0, 128], sizes = [2, 128], strides = [1, 1]} : vector<2x256xf32> to vector<2x128xf32>
    %101 = arith.addf %99, %100 : vector<2x128xf32>
    %102 = vector.extract_strided_slice %98 {offsets = [0, 0], sizes = [2, 96], strides = [1, 1]} : vector<2x128xf32> to vector<2x96xf32>
    %103 = arith.negf %102 : vector<2x96xf32>
    %104 = math.exp %103 : vector<2x96xf32>
    %cst_18 = arith.constant 1.000000e+00 : f32
    %105 = vector.broadcast %cst_18 : f32 to vector<2x96xf32>
    %106 = arith.addf %105, %104 : vector<2x96xf32>
    %107 = arith.divf %105, %106 : vector<2x96xf32>
    %108 = vector.extract_strided_slice %98 {offsets = [0, 96], sizes = [2, 32], strides = [1, 1]} : vector<2x128xf32> to vector<2x32xf32>
    %109 = math.tanh %108 : vector<2x32xf32>
    %110 = vector.extract_strided_slice %107 {offsets = [0, 32], sizes = [2, 32], strides = [1, 1]} : vector<2x96xf32> to vector<2x32xf32>
    %111 = arith.mulf %110, %73 : vector<2x32xf32>
    %112 = vector.extract_strided_slice %107 {offsets = [0, 0], sizes = [2, 32], strides = [1, 1]} : vector<2x96xf32> to vector<2x32xf32>
    %113 = arith.mulf %112, %109 : vector<2x32xf32>
    %114 = arith.addf %111, %113 : vector<2x32xf32>
    %115 = vector.extract_strided_slice %107 {offsets = [0, 64], sizes = [2, 32], strides = [1, 1]} : vector<2x96xf32> to vector<2x32xf32>
    %116 = math.tanh %114 : vector<2x32xf32>
    %117 = arith.mulf %115, %116 : vector<2x32xf32>
    %118 = vector.extract_strided_slice %101 {offsets = [0, 0], sizes = [2, 96], strides = [1, 1]} : vector<2x128xf32> to vector<2x96xf32>
    %119 = arith.negf %118 : vector<2x96xf32>
    %120 = math.exp %119 : vector<2x96xf32>
    %cst_19 = arith.constant 1.000000e+00 : f32
    %121 = vector.broadcast %cst_19 : f32 to vector<2x96xf32>
    %122 = arith.addf %121, %120 : vector<2x96xf32>
    %123 = arith.divf %121, %122 : vector<2x96xf32>
    %124 = vector.extract_strided_slice %101 {offsets = [0, 96], sizes = [2, 32], strides = [1, 1]} : vector<2x128xf32> to vector<2x32xf32>
    %125 = math.tanh %124 : vector<2x32xf32>
    %126 = vector.extract_strided_slice %123 {offsets = [0, 32], sizes = [2, 32], strides = [1, 1]} : vector<2x96xf32> to vector<2x32xf32>
    %127 = arith.mulf %126, %89 : vector<2x32xf32>
    %128 = vector.extract_strided_slice %123 {offsets = [0, 0], sizes = [2, 32], strides = [1, 1]} : vector<2x96xf32> to vector<2x32xf32>
    %129 = arith.mulf %128, %125 : vector<2x32xf32>
    %130 = arith.addf %127, %129 : vector<2x32xf32>
    %131 = vector.extract_strided_slice %123 {offsets = [0, 64], sizes = [2, 32], strides = [1, 1]} : vector<2x96xf32> to vector<2x32xf32>
    %132 = math.tanh %130 : vector<2x32xf32>
    %133 = arith.mulf %131, %132 : vector<2x32xf32>
    %134 = tpu.concatenate %117, %133 in 1 : vector<2x32xf32>, vector<2x32xf32> -> vector<2x64xf32>
    %135 = arith.truncf %134 : vector<2x64xf32> to vector<2x64xbf16>
    %cst_20 = arith.constant dense<0.000000e+00> : vector<2x256xf32>
    %136 = tpu.matmul %135, %6, %cst_20 {dimension_numbers = #tpu.dot_dimension_numbers<[1], [0], [0], [1], [0, 0, 1, 1], [], []>} : vector<2x64xbf16>, vector<64x256xbf16>, vector<2x256xf32> -> vector<2x256xf32>
    %137 = vector.extract_strided_slice %5 {offsets = [6, 0], sizes = [2, 128], strides = [1, 1]} : vector<16x288xf32> to vector<2x128xf32>
    %138 = vector.extract_strided_slice %136 {offsets = [0, 0], sizes = [2, 128], strides = [1, 1]} : vector<2x256xf32> to vector<2x128xf32>
    %139 = arith.addf %137, %138 : vector<2x128xf32>
    %140 = vector.extract_strided_slice %5 {offsets = [8, 128], sizes = [2, 128], strides = [1, 1]} : vector<16x288xf32> to vector<2x128xf32>
    %141 = vector.extract_strided_slice %136 {offsets = [0, 128], sizes = [2, 128], strides = [1, 1]} : vector<2x256xf32> to vector<2x128xf32>
    %142 = arith.addf %140, %141 : vector<2x128xf32>
    %143 = vector.extract_strided_slice %139 {offsets = [0, 0], sizes = [2, 96], strides = [1, 1]} : vector<2x128xf32> to vector<2x96xf32>
    %144 = arith.negf %143 : vector<2x96xf32>
    %145 = math.exp %144 : vector<2x96xf32>
    %cst_21 = arith.constant 1.000000e+00 : f32
    %146 = vector.broadcast %cst_21 : f32 to vector<2x96xf32>
    %147 = arith.addf %146, %145 : vector<2x96xf32>
    %148 = arith.divf %146, %147 : vector<2x96xf32>
    %149 = vector.extract_strided_slice %139 {offsets = [0, 96], sizes = [2, 32], strides = [1, 1]} : vector<2x128xf32> to vector<2x32xf32>
    %150 = math.tanh %149 : vector<2x32xf32>
    %151 = vector.extract_strided_slice %148 {offsets = [0, 32], sizes = [2, 32], strides = [1, 1]} : vector<2x96xf32> to vector<2x32xf32>
    %152 = arith.mulf %151, %114 : vector<2x32xf32>
    %153 = vector.extract_strided_slice %148 {offsets = [0, 0], sizes = [2, 32], strides = [1, 1]} : vector<2x96xf32> to vector<2x32xf32>
    %154 = arith.mulf %153, %150 : vector<2x32xf32>
    %155 = arith.addf %152, %154 : vector<2x32xf32>
    %156 = vector.extract_strided_slice %148 {offsets = [0, 64], sizes = [2, 32], strides = [1, 1]} : vector<2x96xf32> to vector<2x32xf32>
    %157 = math.tanh %155 : vector<2x32xf32>
    %158 = arith.mulf %156, %157 : vector<2x32xf32>
    %159 = vector.extract_strided_slice %142 {offsets = [0, 0], sizes = [2, 96], strides = [1, 1]} : vector<2x128xf32> to vector<2x96xf32>
    %160 = arith.negf %159 : vector<2x96xf32>
    %161 = math.exp %160 : vector<2x96xf32>
    %cst_22 = arith.constant 1.000000e+00 : f32
    %162 = vector.broadcast %cst_22 : f32 to vector<2x96xf32>
    %163 = arith.addf %162, %161 : vector<2x96xf32>
    %164 = arith.divf %162, %163 : vector<2x96xf32>
    %165 = vector.extract_strided_slice %142 {offsets = [0, 96], sizes = [2, 32], strides = [1, 1]} : vector<2x128xf32> to vector<2x32xf32>
    %166 = math.tanh %165 : vector<2x32xf32>
    %167 = vector.extract_strided_slice %164 {offsets = [0, 32], sizes = [2, 32], strides = [1, 1]} : vector<2x96xf32> to vector<2x32xf32>
    %168 = arith.mulf %167, %130 : vector<2x32xf32>
    %169 = vector.extract_strided_slice %164 {offsets = [0, 0], sizes = [2, 32], strides = [1, 1]} : vector<2x96xf32> to vector<2x32xf32>
    %170 = arith.mulf %169, %166 : vector<2x32xf32>
    %171 = arith.addf %168, %170 : vector<2x32xf32>
    %172 = vector.extract_strided_slice %164 {offsets = [0, 64], sizes = [2, 32], strides = [1, 1]} : vector<2x96xf32> to vector<2x32xf32>
    %173 = math.tanh %171 : vector<2x32xf32>
    %174 = arith.mulf %172, %173 : vector<2x32xf32>
    %175 = tpu.concatenate %158, %174 in 1 : vector<2x32xf32>, vector<2x32xf32> -> vector<2x64xf32>
    %176 = arith.truncf %175 : vector<2x64xf32> to vector<2x64xbf16>
    %cst_23 = arith.constant dense<0.000000e+00> : vector<2x256xf32>
    %177 = tpu.matmul %176, %6, %cst_23 {dimension_numbers = #tpu.dot_dimension_numbers<[1], [0], [0], [1], [0, 0, 1, 1], [], []>} : vector<2x64xbf16>, vector<64x256xbf16>, vector<2x256xf32> -> vector<2x256xf32>
    %178 = vector.extract_strided_slice %5 {offsets = [8, 0], sizes = [2, 128], strides = [1, 1]} : vector<16x288xf32> to vector<2x128xf32>
    %179 = vector.extract_strided_slice %177 {offsets = [0, 0], sizes = [2, 128], strides = [1, 1]} : vector<2x256xf32> to vector<2x128xf32>
    %180 = arith.addf %178, %179 : vector<2x128xf32>
    %181 = vector.extract_strided_slice %5 {offsets = [6, 128], sizes = [2, 128], strides = [1, 1]} : vector<16x288xf32> to vector<2x128xf32>
    %182 = vector.extract_strided_slice %177 {offsets = [0, 128], sizes = [2, 128], strides = [1, 1]} : vector<2x256xf32> to vector<2x128xf32>
    %183 = arith.addf %181, %182 : vector<2x128xf32>
    %184 = vector.extract_strided_slice %180 {offsets = [0, 0], sizes = [2, 96], strides = [1, 1]} : vector<2x128xf32> to vector<2x96xf32>
    %185 = arith.negf %184 : vector<2x96xf32>
    %186 = math.exp %185 : vector<2x96xf32>
    %cst_24 = arith.constant 1.000000e+00 : f32
    %187 = vector.broadcast %cst_24 : f32 to vector<2x96xf32>
    %188 = arith.addf %187, %186 : vector<2x96xf32>
    %189 = arith.divf %187, %188 : vector<2x96xf32>
    %190 = vector.extract_strided_slice %180 {offsets = [0, 96], sizes = [2, 32], strides = [1, 1]} : vector<2x128xf32> to vector<2x32xf32>
    %191 = math.tanh %190 : vector<2x32xf32>
    %192 = vector.extract_strided_slice %189 {offsets = [0, 32], sizes = [2, 32], strides = [1, 1]} : vector<2x96xf32> to vector<2x32xf32>
    %193 = arith.mulf %192, %155 : vector<2x32xf32>
    %194 = vector.extract_strided_slice %189 {offsets = [0, 0], sizes = [2, 32], strides = [1, 1]} : vector<2x96xf32> to vector<2x32xf32>
    %195 = arith.mulf %194, %191 : vector<2x32xf32>
    %196 = arith.addf %193, %195 : vector<2x32xf32>
    %197 = vector.extract_strided_slice %189 {offsets = [0, 64], sizes = [2, 32], strides = [1, 1]} : vector<2x96xf32> to vector<2x32xf32>
    %198 = math.tanh %196 : vector<2x32xf32>
    %199 = arith.mulf %197, %198 : vector<2x32xf32>
    %200 = vector.extract_strided_slice %183 {offsets = [0, 0], sizes = [2, 96], strides = [1, 1]} : vector<2x128xf32> to vector<2x96xf32>
    %201 = arith.negf %200 : vector<2x96xf32>
    %202 = math.exp %201 : vector<2x96xf32>
    %cst_25 = arith.constant 1.000000e+00 : f32
    %203 = vector.broadcast %cst_25 : f32 to vector<2x96xf32>
    %204 = arith.addf %203, %202 : vector<2x96xf32>
    %205 = arith.divf %203, %204 : vector<2x96xf32>
    %206 = vector.extract_strided_slice %183 {offsets = [0, 96], sizes = [2, 32], strides = [1, 1]} : vector<2x128xf32> to vector<2x32xf32>
    %207 = math.tanh %206 : vector<2x32xf32>
    %208 = vector.extract_strided_slice %205 {offsets = [0, 32], sizes = [2, 32], strides = [1, 1]} : vector<2x96xf32> to vector<2x32xf32>
    %209 = arith.mulf %208, %171 : vector<2x32xf32>
    %210 = vector.extract_strided_slice %205 {offsets = [0, 0], sizes = [2, 32], strides = [1, 1]} : vector<2x96xf32> to vector<2x32xf32>
    %211 = arith.mulf %210, %207 : vector<2x32xf32>
    %212 = arith.addf %209, %211 : vector<2x32xf32>
    %213 = vector.extract_strided_slice %205 {offsets = [0, 64], sizes = [2, 32], strides = [1, 1]} : vector<2x96xf32> to vector<2x32xf32>
    %214 = math.tanh %212 : vector<2x32xf32>
    %215 = arith.mulf %213, %214 : vector<2x32xf32>
    %216 = tpu.concatenate %199, %215 in 1 : vector<2x32xf32>, vector<2x32xf32> -> vector<2x64xf32>
    %217 = arith.truncf %216 : vector<2x64xf32> to vector<2x64xbf16>
    %cst_26 = arith.constant dense<0.000000e+00> : vector<2x256xf32>
    %218 = tpu.matmul %217, %6, %cst_26 {dimension_numbers = #tpu.dot_dimension_numbers<[1], [0], [0], [1], [0, 0, 1, 1], [], []>} : vector<2x64xbf16>, vector<64x256xbf16>, vector<2x256xf32> -> vector<2x256xf32>
    %219 = vector.extract_strided_slice %5 {offsets = [10, 0], sizes = [2, 128], strides = [1, 1]} : vector<16x288xf32> to vector<2x128xf32>
    %220 = vector.extract_strided_slice %218 {offsets = [0, 0], sizes = [2, 128], strides = [1, 1]} : vector<2x256xf32> to vector<2x128xf32>
    %221 = arith.addf %219, %220 : vector<2x128xf32>
    %222 = vector.extract_strided_slice %5 {offsets = [4, 128], sizes = [2, 128], strides = [1, 1]} : vector<16x288xf32> to vector<2x128xf32>
    %223 = vector.extract_strided_slice %218 {offsets = [0, 128], sizes = [2, 128], strides = [1, 1]} : vector<2x256xf32> to vector<2x128xf32>
    %224 = arith.addf %222, %223 : vector<2x128xf32>
    %225 = vector.extract_strided_slice %221 {offsets = [0, 0], sizes = [2, 96], strides = [1, 1]} : vector<2x128xf32> to vector<2x96xf32>
    %226 = arith.negf %225 : vector<2x96xf32>
    %227 = math.exp %226 : vector<2x96xf32>
    %cst_27 = arith.constant 1.000000e+00 : f32
    %228 = vector.broadcast %cst_27 : f32 to vector<2x96xf32>
    %229 = arith.addf %228, %227 : vector<2x96xf32>
    %230 = arith.divf %228, %229 : vector<2x96xf32>
    %231 = vector.extract_strided_slice %221 {offsets = [0, 96], sizes = [2, 32], strides = [1, 1]} : vector<2x128xf32> to vector<2x32xf32>
    %232 = math.tanh %231 : vector<2x32xf32>
    %233 = vector.extract_strided_slice %230 {offsets = [0, 32], sizes = [2, 32], strides = [1, 1]} : vector<2x96xf32> to vector<2x32xf32>
    %234 = arith.mulf %233, %196 : vector<2x32xf32>
    %235 = vector.extract_strided_slice %230 {offsets = [0, 0], sizes = [2, 32], strides = [1, 1]} : vector<2x96xf32> to vector<2x32xf32>
    %236 = arith.mulf %235, %232 : vector<2x32xf32>
    %237 = arith.addf %234, %236 : vector<2x32xf32>
    %238 = vector.extract_strided_slice %230 {offsets = [0, 64], sizes = [2, 32], strides = [1, 1]} : vector<2x96xf32> to vector<2x32xf32>
    %239 = math.tanh %237 : vector<2x32xf32>
    %240 = arith.mulf %238, %239 : vector<2x32xf32>
    %241 = vector.extract_strided_slice %224 {offsets = [0, 0], sizes = [2, 96], strides = [1, 1]} : vector<2x128xf32> to vector<2x96xf32>
    %242 = arith.negf %241 : vector<2x96xf32>
    %243 = math.exp %242 : vector<2x96xf32>
    %cst_28 = arith.constant 1.000000e+00 : f32
    %244 = vector.broadcast %cst_28 : f32 to vector<2x96xf32>
    %245 = arith.addf %244, %243 : vector<2x96xf32>
    %246 = arith.divf %244, %245 : vector<2x96xf32>
    %247 = vector.extract_strided_slice %224 {offsets = [0, 96], sizes = [2, 32], strides = [1, 1]} : vector<2x128xf32> to vector<2x32xf32>
    %248 = math.tanh %247 : vector<2x32xf32>
    %249 = vector.extract_strided_slice %246 {offsets = [0, 32], sizes = [2, 32], strides = [1, 1]} : vector<2x96xf32> to vector<2x32xf32>
    %250 = arith.mulf %249, %212 : vector<2x32xf32>
    %251 = vector.extract_strided_slice %246 {offsets = [0, 0], sizes = [2, 32], strides = [1, 1]} : vector<2x96xf32> to vector<2x32xf32>
    %252 = arith.mulf %251, %248 : vector<2x32xf32>
    %253 = arith.addf %250, %252 : vector<2x32xf32>
    %254 = vector.extract_strided_slice %246 {offsets = [0, 64], sizes = [2, 32], strides = [1, 1]} : vector<2x96xf32> to vector<2x32xf32>
    %255 = math.tanh %253 : vector<2x32xf32>
    %256 = arith.mulf %254, %255 : vector<2x32xf32>
    %257 = tpu.concatenate %240, %256 in 1 : vector<2x32xf32>, vector<2x32xf32> -> vector<2x64xf32>
    %258 = arith.truncf %257 : vector<2x64xf32> to vector<2x64xbf16>
    %cst_29 = arith.constant dense<0.000000e+00> : vector<2x256xf32>
    %259 = tpu.matmul %258, %6, %cst_29 {dimension_numbers = #tpu.dot_dimension_numbers<[1], [0], [0], [1], [0, 0, 1, 1], [], []>} : vector<2x64xbf16>, vector<64x256xbf16>, vector<2x256xf32> -> vector<2x256xf32>
    %260 = vector.extract_strided_slice %5 {offsets = [12, 0], sizes = [2, 128], strides = [1, 1]} : vector<16x288xf32> to vector<2x128xf32>
    %261 = vector.extract_strided_slice %259 {offsets = [0, 0], sizes = [2, 128], strides = [1, 1]} : vector<2x256xf32> to vector<2x128xf32>
    %262 = arith.addf %260, %261 : vector<2x128xf32>
    %263 = vector.extract_strided_slice %5 {offsets = [2, 128], sizes = [2, 128], strides = [1, 1]} : vector<16x288xf32> to vector<2x128xf32>
    %264 = vector.extract_strided_slice %259 {offsets = [0, 128], sizes = [2, 128], strides = [1, 1]} : vector<2x256xf32> to vector<2x128xf32>
    %265 = arith.addf %263, %264 : vector<2x128xf32>
    %266 = vector.extract_strided_slice %262 {offsets = [0, 0], sizes = [2, 96], strides = [1, 1]} : vector<2x128xf32> to vector<2x96xf32>
    %267 = arith.negf %266 : vector<2x96xf32>
    %268 = math.exp %267 : vector<2x96xf32>
    %cst_30 = arith.constant 1.000000e+00 : f32
    %269 = vector.broadcast %cst_30 : f32 to vector<2x96xf32>
    %270 = arith.addf %269, %268 : vector<2x96xf32>
    %271 = arith.divf %269, %270 : vector<2x96xf32>
    %272 = vector.extract_strided_slice %262 {offsets = [0, 96], sizes = [2, 32], strides = [1, 1]} : vector<2x128xf32> to vector<2x32xf32>
    %273 = math.tanh %272 : vector<2x32xf32>
    %274 = vector.extract_strided_slice %271 {offsets = [0, 32], sizes = [2, 32], strides = [1, 1]} : vector<2x96xf32> to vector<2x32xf32>
    %275 = arith.mulf %274, %237 : vector<2x32xf32>
    %276 = vector.extract_strided_slice %271 {offsets = [0, 0], sizes = [2, 32], strides = [1, 1]} : vector<2x96xf32> to vector<2x32xf32>
    %277 = arith.mulf %276, %273 : vector<2x32xf32>
    %278 = arith.addf %275, %277 : vector<2x32xf32>
    %279 = vector.extract_strided_slice %271 {offsets = [0, 64], sizes = [2, 32], strides = [1, 1]} : vector<2x96xf32> to vector<2x32xf32>
    %280 = math.tanh %278 : vector<2x32xf32>
    %281 = arith.mulf %279, %280 : vector<2x32xf32>
    %282 = vector.extract_strided_slice %265 {offsets = [0, 0], sizes = [2, 96], strides = [1, 1]} : vector<2x128xf32> to vector<2x96xf32>
    %283 = arith.negf %282 : vector<2x96xf32>
    %284 = math.exp %283 : vector<2x96xf32>
    %cst_31 = arith.constant 1.000000e+00 : f32
    %285 = vector.broadcast %cst_31 : f32 to vector<2x96xf32>
    %286 = arith.addf %285, %284 : vector<2x96xf32>
    %287 = arith.divf %285, %286 : vector<2x96xf32>
    %288 = vector.extract_strided_slice %265 {offsets = [0, 96], sizes = [2, 32], strides = [1, 1]} : vector<2x128xf32> to vector<2x32xf32>
    %289 = math.tanh %288 : vector<2x32xf32>
    %290 = vector.extract_strided_slice %287 {offsets = [0, 32], sizes = [2, 32], strides = [1, 1]} : vector<2x96xf32> to vector<2x32xf32>
    %291 = arith.mulf %290, %253 : vector<2x32xf32>
    %292 = vector.extract_strided_slice %287 {offsets = [0, 0], sizes = [2, 32], strides = [1, 1]} : vector<2x96xf32> to vector<2x32xf32>
    %293 = arith.mulf %292, %289 : vector<2x32xf32>
    %294 = arith.addf %291, %293 : vector<2x32xf32>
    %295 = vector.extract_strided_slice %287 {offsets = [0, 64], sizes = [2, 32], strides = [1, 1]} : vector<2x96xf32> to vector<2x32xf32>
    %296 = math.tanh %294 : vector<2x32xf32>
    %297 = arith.mulf %295, %296 : vector<2x32xf32>
    %298 = tpu.concatenate %281, %297 in 1 : vector<2x32xf32>, vector<2x32xf32> -> vector<2x64xf32>
    %299 = arith.truncf %298 : vector<2x64xf32> to vector<2x64xbf16>
    %cst_32 = arith.constant dense<0.000000e+00> : vector<2x256xf32>
    %300 = tpu.matmul %299, %6, %cst_32 {dimension_numbers = #tpu.dot_dimension_numbers<[1], [0], [0], [1], [0, 0, 1, 1], [], []>} : vector<2x64xbf16>, vector<64x256xbf16>, vector<2x256xf32> -> vector<2x256xf32>
    %301 = vector.extract_strided_slice %5 {offsets = [14, 0], sizes = [2, 128], strides = [1, 1]} : vector<16x288xf32> to vector<2x128xf32>
    %302 = vector.extract_strided_slice %300 {offsets = [0, 0], sizes = [2, 128], strides = [1, 1]} : vector<2x256xf32> to vector<2x128xf32>
    %303 = arith.addf %301, %302 : vector<2x128xf32>
    %304 = vector.extract_strided_slice %5 {offsets = [0, 128], sizes = [2, 128], strides = [1, 1]} : vector<16x288xf32> to vector<2x128xf32>
    %305 = vector.extract_strided_slice %300 {offsets = [0, 128], sizes = [2, 128], strides = [1, 1]} : vector<2x256xf32> to vector<2x128xf32>
    %306 = arith.addf %304, %305 : vector<2x128xf32>
    %307 = vector.extract_strided_slice %303 {offsets = [0, 0], sizes = [2, 96], strides = [1, 1]} : vector<2x128xf32> to vector<2x96xf32>
    %308 = arith.negf %307 : vector<2x96xf32>
    %309 = math.exp %308 : vector<2x96xf32>
    %cst_33 = arith.constant 1.000000e+00 : f32
    %310 = vector.broadcast %cst_33 : f32 to vector<2x96xf32>
    %311 = arith.addf %310, %309 : vector<2x96xf32>
    %312 = arith.divf %310, %311 : vector<2x96xf32>
    %313 = vector.extract_strided_slice %303 {offsets = [0, 96], sizes = [2, 32], strides = [1, 1]} : vector<2x128xf32> to vector<2x32xf32>
    %314 = math.tanh %313 : vector<2x32xf32>
    %315 = vector.extract_strided_slice %312 {offsets = [0, 32], sizes = [2, 32], strides = [1, 1]} : vector<2x96xf32> to vector<2x32xf32>
    %316 = arith.mulf %315, %278 : vector<2x32xf32>
    %317 = vector.extract_strided_slice %312 {offsets = [0, 0], sizes = [2, 32], strides = [1, 1]} : vector<2x96xf32> to vector<2x32xf32>
    %318 = arith.mulf %317, %314 : vector<2x32xf32>
    %319 = arith.addf %316, %318 : vector<2x32xf32>
    %320 = vector.extract_strided_slice %312 {offsets = [0, 64], sizes = [2, 32], strides = [1, 1]} : vector<2x96xf32> to vector<2x32xf32>
    %321 = math.tanh %319 : vector<2x32xf32>
    %322 = arith.mulf %320, %321 : vector<2x32xf32>
    %323 = vector.extract_strided_slice %306 {offsets = [0, 0], sizes = [2, 96], strides = [1, 1]} : vector<2x128xf32> to vector<2x96xf32>
    %324 = arith.negf %323 : vector<2x96xf32>
    %325 = math.exp %324 : vector<2x96xf32>
    %cst_34 = arith.constant 1.000000e+00 : f32
    %326 = vector.broadcast %cst_34 : f32 to vector<2x96xf32>
    %327 = arith.addf %326, %325 : vector<2x96xf32>
    %328 = arith.divf %326, %327 : vector<2x96xf32>
    %329 = vector.extract_strided_slice %306 {offsets = [0, 96], sizes = [2, 32], strides = [1, 1]} : vector<2x128xf32> to vector<2x32xf32>
    %330 = math.tanh %329 : vector<2x32xf32>
    %331 = vector.extract_strided_slice %328 {offsets = [0, 32], sizes = [2, 32], strides = [1, 1]} : vector<2x96xf32> to vector<2x32xf32>
    %332 = arith.mulf %331, %294 : vector<2x32xf32>
    %333 = vector.extract_strided_slice %328 {offsets = [0, 0], sizes = [2, 32], strides = [1, 1]} : vector<2x96xf32> to vector<2x32xf32>
    %334 = arith.mulf %333, %330 : vector<2x32xf32>
    %335 = arith.addf %332, %334 : vector<2x32xf32>
    %336 = vector.extract_strided_slice %328 {offsets = [0, 64], sizes = [2, 32], strides = [1, 1]} : vector<2x96xf32> to vector<2x32xf32>
    %337 = math.tanh %335 : vector<2x32xf32>
    %338 = arith.mulf %336, %337 : vector<2x32xf32>
    %c0_35 = arith.constant 0 : index
    %339 = memref.load %arg1[%c0_35] : memref<3xf32, #tpu.memory_space<smem>>
    %c1 = arith.constant 1 : index
    %340 = memref.load %arg1[%c1] : memref<3xf32, #tpu.memory_space<smem>>
    %c2 = arith.constant 2 : index
    %341 = memref.load %arg1[%c2] : memref<3xf32, #tpu.memory_space<smem>>
    %342 = vector.extract_strided_slice %5 {offsets = [0, 256], sizes = [16, 32], strides = [1, 1]} : vector<16x288xf32> to vector<16x32xf32>
    %343 = tpu.concatenate %35, %76, %117, %158, %199, %240, %281, %322 in 0 : vector<2x32xf32>, vector<2x32xf32>, vector<2x32xf32>, vector<2x32xf32>, vector<2x32xf32>, vector<2x32xf32>, vector<2x32xf32>, vector<2x32xf32> -> vector<16x32xf32>
    %344 = tpu.concatenate %338, %297, %256, %215, %174, %133, %92, %51 in 0 : vector<2x32xf32>, vector<2x32xf32>, vector<2x32xf32>, vector<2x32xf32>, vector<2x32xf32>, vector<2x32xf32>, vector<2x32xf32>, vector<2x32xf32> -> vector<16x32xf32>
    %345 = vector.broadcast %339 : f32 to vector<16x32xf32>
    %346 = arith.mulf %345, %342 : vector<16x32xf32>
    %347 = vector.broadcast %340 : f32 to vector<16x32xf32>
    %348 = arith.mulf %347, %343 : vector<16x32xf32>
    %349 = arith.addf %346, %348 : vector<16x32xf32>
    %350 = vector.broadcast %341 : f32 to vector<16x32xf32>
    %351 = arith.mulf %350, %344 : vector<16x32xf32>
    %352 = arith.addf %349, %351 : vector<16x32xf32>
    %353 = arith.truncf %352 : vector<16x32xf32> to vector<16x32xbf16>
    %c0_36 = arith.constant 0 : index
    %c0_37 = arith.constant 0 : index
    %354 = vector.load %arg6[%c0_36, %c0_37] : memref<32x512xbf16, #tpu.memory_space<vmem>>, vector<32x512xbf16>
    %cst_38 = arith.constant dense<0.000000e+00> : vector<16x512xf32>
    %355 = tpu.matmul %353, %354, %cst_38 {dimension_numbers = #tpu.dot_dimension_numbers<[1], [0], [0], [1], [0, 0, 1, 1], [], []>} : vector<16x32xbf16>, vector<32x512xbf16>, vector<16x512xf32> -> vector<16x512xf32>
    %c0_39 = arith.constant 0 : index
    %c0_40 = arith.constant 0 : index
    %356 = vector.load %arg8[%c0_39, %c0_40] : memref<1x512xf32, #tpu.memory_space<vmem>>, vector<1x512xf32>
    %357 = vector.broadcast %356 : vector<1x512xf32> to vector<16x512xf32>
    %358 = arith.addf %355, %357 : vector<16x512xf32>
    %cst_41 = arith.constant 0.000000e+00 : f32
    %359 = vector.broadcast %cst_41 : f32 to vector<2x128xf32>
    %cst_42 = arith.constant 0.000000e+00 : f32
    %360 = vector.broadcast %cst_42 : f32 to vector<2x128xf32>
    %361 = vector.extract_strided_slice %358 {offsets = [0, 0], sizes = [2, 512], strides = [1, 1]} : vector<16x512xf32> to vector<2x512xf32>
    %362 = arith.truncf %359 : vector<2x128xf32> to vector<2x128xbf16>
    %c0_43 = arith.constant 0 : index
    %c0_44 = arith.constant 0 : index
    %363 = vector.load %arg7[%c0_43, %c0_44] : memref<128x512xbf16, #tpu.memory_space<vmem>>, vector<128x512xbf16>
    %cst_45 = arith.constant dense<0.000000e+00> : vector<2x512xf32>
    %364 = tpu.matmul %362, %363, %cst_45 {dimension_numbers = #tpu.dot_dimension_numbers<[1], [0], [0], [1], [0, 0, 1, 1], [], []>} : vector<2x128xbf16>, vector<128x512xbf16>, vector<2x512xf32> -> vector<2x512xf32>
    %365 = arith.addf %361, %364 : vector<2x512xf32>
    %366 = vector.extract_strided_slice %365 {offsets = [0, 0], sizes = [2, 384], strides = [1, 1]} : vector<2x512xf32> to vector<2x384xf32>
    %367 = arith.negf %366 : vector<2x384xf32>
    %368 = math.exp %367 : vector<2x384xf32>
    %cst_46 = arith.constant 1.000000e+00 : f32
    %369 = vector.broadcast %cst_46 : f32 to vector<2x384xf32>
    %370 = arith.addf %369, %368 : vector<2x384xf32>
    %371 = arith.divf %369, %370 : vector<2x384xf32>
    %372 = vector.extract_strided_slice %365 {offsets = [0, 384], sizes = [2, 128], strides = [1, 1]} : vector<2x512xf32> to vector<2x128xf32>
    %373 = math.tanh %372 : vector<2x128xf32>
    %374 = vector.extract_strided_slice %371 {offsets = [0, 128], sizes = [2, 128], strides = [1, 1]} : vector<2x384xf32> to vector<2x128xf32>
    %375 = arith.mulf %374, %360 : vector<2x128xf32>
    %376 = vector.extract_strided_slice %371 {offsets = [0, 0], sizes = [2, 128], strides = [1, 1]} : vector<2x384xf32> to vector<2x128xf32>
    %377 = arith.mulf %376, %373 : vector<2x128xf32>
    %378 = arith.addf %375, %377 : vector<2x128xf32>
    %379 = vector.extract_strided_slice %371 {offsets = [0, 256], sizes = [2, 128], strides = [1, 1]} : vector<2x384xf32> to vector<2x128xf32>
    %380 = math.tanh %378 : vector<2x128xf32>
    %381 = arith.mulf %379, %380 : vector<2x128xf32>
    %382 = vector.extract_strided_slice %358 {offsets = [2, 0], sizes = [2, 512], strides = [1, 1]} : vector<16x512xf32> to vector<2x512xf32>
    %383 = arith.truncf %381 : vector<2x128xf32> to vector<2x128xbf16>
    %c0_47 = arith.constant 0 : index
    %c0_48 = arith.constant 0 : index
    %384 = vector.load %arg7[%c0_47, %c0_48] : memref<128x512xbf16, #tpu.memory_space<vmem>>, vector<128x512xbf16>
    %cst_49 = arith.constant dense<0.000000e+00> : vector<2x512xf32>
    %385 = tpu.matmul %383, %384, %cst_49 {dimension_numbers = #tpu.dot_dimension_numbers<[1], [0], [0], [1], [0, 0, 1, 1], [], []>} : vector<2x128xbf16>, vector<128x512xbf16>, vector<2x512xf32> -> vector<2x512xf32>
    %386 = arith.addf %382, %385 : vector<2x512xf32>
    %387 = vector.extract_strided_slice %386 {offsets = [0, 0], sizes = [2, 384], strides = [1, 1]} : vector<2x512xf32> to vector<2x384xf32>
    %388 = arith.negf %387 : vector<2x384xf32>
    %389 = math.exp %388 : vector<2x384xf32>
    %cst_50 = arith.constant 1.000000e+00 : f32
    %390 = vector.broadcast %cst_50 : f32 to vector<2x384xf32>
    %391 = arith.addf %390, %389 : vector<2x384xf32>
    %392 = arith.divf %390, %391 : vector<2x384xf32>
    %393 = vector.extract_strided_slice %386 {offsets = [0, 384], sizes = [2, 128], strides = [1, 1]} : vector<2x512xf32> to vector<2x128xf32>
    %394 = math.tanh %393 : vector<2x128xf32>
    %395 = vector.extract_strided_slice %392 {offsets = [0, 128], sizes = [2, 128], strides = [1, 1]} : vector<2x384xf32> to vector<2x128xf32>
    %396 = arith.mulf %395, %378 : vector<2x128xf32>
    %397 = vector.extract_strided_slice %392 {offsets = [0, 0], sizes = [2, 128], strides = [1, 1]} : vector<2x384xf32> to vector<2x128xf32>
    %398 = arith.mulf %397, %394 : vector<2x128xf32>
    %399 = arith.addf %396, %398 : vector<2x128xf32>
    %400 = vector.extract_strided_slice %392 {offsets = [0, 256], sizes = [2, 128], strides = [1, 1]} : vector<2x384xf32> to vector<2x128xf32>
    %401 = math.tanh %399 : vector<2x128xf32>
    %402 = arith.mulf %400, %401 : vector<2x128xf32>
    %403 = vector.extract_strided_slice %358 {offsets = [4, 0], sizes = [2, 512], strides = [1, 1]} : vector<16x512xf32> to vector<2x512xf32>
    %404 = arith.truncf %402 : vector<2x128xf32> to vector<2x128xbf16>
    %c0_51 = arith.constant 0 : index
    %c0_52 = arith.constant 0 : index
    %405 = vector.load %arg7[%c0_51, %c0_52] : memref<128x512xbf16, #tpu.memory_space<vmem>>, vector<128x512xbf16>
    %cst_53 = arith.constant dense<0.000000e+00> : vector<2x512xf32>
    %406 = tpu.matmul %404, %405, %cst_53 {dimension_numbers = #tpu.dot_dimension_numbers<[1], [0], [0], [1], [0, 0, 1, 1], [], []>} : vector<2x128xbf16>, vector<128x512xbf16>, vector<2x512xf32> -> vector<2x512xf32>
    %407 = arith.addf %403, %406 : vector<2x512xf32>
    %408 = vector.extract_strided_slice %407 {offsets = [0, 0], sizes = [2, 384], strides = [1, 1]} : vector<2x512xf32> to vector<2x384xf32>
    %409 = arith.negf %408 : vector<2x384xf32>
    %410 = math.exp %409 : vector<2x384xf32>
    %cst_54 = arith.constant 1.000000e+00 : f32
    %411 = vector.broadcast %cst_54 : f32 to vector<2x384xf32>
    %412 = arith.addf %411, %410 : vector<2x384xf32>
    %413 = arith.divf %411, %412 : vector<2x384xf32>
    %414 = vector.extract_strided_slice %407 {offsets = [0, 384], sizes = [2, 128], strides = [1, 1]} : vector<2x512xf32> to vector<2x128xf32>
    %415 = math.tanh %414 : vector<2x128xf32>
    %416 = vector.extract_strided_slice %413 {offsets = [0, 128], sizes = [2, 128], strides = [1, 1]} : vector<2x384xf32> to vector<2x128xf32>
    %417 = arith.mulf %416, %399 : vector<2x128xf32>
    %418 = vector.extract_strided_slice %413 {offsets = [0, 0], sizes = [2, 128], strides = [1, 1]} : vector<2x384xf32> to vector<2x128xf32>
    %419 = arith.mulf %418, %415 : vector<2x128xf32>
    %420 = arith.addf %417, %419 : vector<2x128xf32>
    %421 = vector.extract_strided_slice %413 {offsets = [0, 256], sizes = [2, 128], strides = [1, 1]} : vector<2x384xf32> to vector<2x128xf32>
    %422 = math.tanh %420 : vector<2x128xf32>
    %423 = arith.mulf %421, %422 : vector<2x128xf32>
    %424 = vector.extract_strided_slice %358 {offsets = [6, 0], sizes = [2, 512], strides = [1, 1]} : vector<16x512xf32> to vector<2x512xf32>
    %425 = arith.truncf %423 : vector<2x128xf32> to vector<2x128xbf16>
    %c0_55 = arith.constant 0 : index
    %c0_56 = arith.constant 0 : index
    %426 = vector.load %arg7[%c0_55, %c0_56] : memref<128x512xbf16, #tpu.memory_space<vmem>>, vector<128x512xbf16>
    %cst_57 = arith.constant dense<0.000000e+00> : vector<2x512xf32>
    %427 = tpu.matmul %425, %426, %cst_57 {dimension_numbers = #tpu.dot_dimension_numbers<[1], [0], [0], [1], [0, 0, 1, 1], [], []>} : vector<2x128xbf16>, vector<128x512xbf16>, vector<2x512xf32> -> vector<2x512xf32>
    %428 = arith.addf %424, %427 : vector<2x512xf32>
    %429 = vector.extract_strided_slice %428 {offsets = [0, 0], sizes = [2, 384], strides = [1, 1]} : vector<2x512xf32> to vector<2x384xf32>
    %430 = arith.negf %429 : vector<2x384xf32>
    %431 = math.exp %430 : vector<2x384xf32>
    %cst_58 = arith.constant 1.000000e+00 : f32
    %432 = vector.broadcast %cst_58 : f32 to vector<2x384xf32>
    %433 = arith.addf %432, %431 : vector<2x384xf32>
    %434 = arith.divf %432, %433 : vector<2x384xf32>
    %435 = vector.extract_strided_slice %428 {offsets = [0, 384], sizes = [2, 128], strides = [1, 1]} : vector<2x512xf32> to vector<2x128xf32>
    %436 = math.tanh %435 : vector<2x128xf32>
    %437 = vector.extract_strided_slice %434 {offsets = [0, 128], sizes = [2, 128], strides = [1, 1]} : vector<2x384xf32> to vector<2x128xf32>
    %438 = arith.mulf %437, %420 : vector<2x128xf32>
    %439 = vector.extract_strided_slice %434 {offsets = [0, 0], sizes = [2, 128], strides = [1, 1]} : vector<2x384xf32> to vector<2x128xf32>
    %440 = arith.mulf %439, %436 : vector<2x128xf32>
    %441 = arith.addf %438, %440 : vector<2x128xf32>
    %442 = vector.extract_strided_slice %434 {offsets = [0, 256], sizes = [2, 128], strides = [1, 1]} : vector<2x384xf32> to vector<2x128xf32>
    %443 = math.tanh %441 : vector<2x128xf32>
    %444 = arith.mulf %442, %443 : vector<2x128xf32>
    %445 = vector.extract_strided_slice %358 {offsets = [8, 0], sizes = [2, 512], strides = [1, 1]} : vector<16x512xf32> to vector<2x512xf32>
    %446 = arith.truncf %444 : vector<2x128xf32> to vector<2x128xbf16>
    %c0_59 = arith.constant 0 : index
    %c0_60 = arith.constant 0 : index
    %447 = vector.load %arg7[%c0_59, %c0_60] : memref<128x512xbf16, #tpu.memory_space<vmem>>, vector<128x512xbf16>
    %cst_61 = arith.constant dense<0.000000e+00> : vector<2x512xf32>
    %448 = tpu.matmul %446, %447, %cst_61 {dimension_numbers = #tpu.dot_dimension_numbers<[1], [0], [0], [1], [0, 0, 1, 1], [], []>} : vector<2x128xbf16>, vector<128x512xbf16>, vector<2x512xf32> -> vector<2x512xf32>
    %449 = arith.addf %445, %448 : vector<2x512xf32>
    %450 = vector.extract_strided_slice %449 {offsets = [0, 0], sizes = [2, 384], strides = [1, 1]} : vector<2x512xf32> to vector<2x384xf32>
    %451 = arith.negf %450 : vector<2x384xf32>
    %452 = math.exp %451 : vector<2x384xf32>
    %cst_62 = arith.constant 1.000000e+00 : f32
    %453 = vector.broadcast %cst_62 : f32 to vector<2x384xf32>
    %454 = arith.addf %453, %452 : vector<2x384xf32>
    %455 = arith.divf %453, %454 : vector<2x384xf32>
    %456 = vector.extract_strided_slice %449 {offsets = [0, 384], sizes = [2, 128], strides = [1, 1]} : vector<2x512xf32> to vector<2x128xf32>
    %457 = math.tanh %456 : vector<2x128xf32>
    %458 = vector.extract_strided_slice %455 {offsets = [0, 128], sizes = [2, 128], strides = [1, 1]} : vector<2x384xf32> to vector<2x128xf32>
    %459 = arith.mulf %458, %441 : vector<2x128xf32>
    %460 = vector.extract_strided_slice %455 {offsets = [0, 0], sizes = [2, 128], strides = [1, 1]} : vector<2x384xf32> to vector<2x128xf32>
    %461 = arith.mulf %460, %457 : vector<2x128xf32>
    %462 = arith.addf %459, %461 : vector<2x128xf32>
    %463 = vector.extract_strided_slice %455 {offsets = [0, 256], sizes = [2, 128], strides = [1, 1]} : vector<2x384xf32> to vector<2x128xf32>
    %464 = math.tanh %462 : vector<2x128xf32>
    %465 = arith.mulf %463, %464 : vector<2x128xf32>
    %466 = vector.extract_strided_slice %358 {offsets = [10, 0], sizes = [2, 512], strides = [1, 1]} : vector<16x512xf32> to vector<2x512xf32>
    %467 = arith.truncf %465 : vector<2x128xf32> to vector<2x128xbf16>
    %c0_63 = arith.constant 0 : index
    %c0_64 = arith.constant 0 : index
    %468 = vector.load %arg7[%c0_63, %c0_64] : memref<128x512xbf16, #tpu.memory_space<vmem>>, vector<128x512xbf16>
    %cst_65 = arith.constant dense<0.000000e+00> : vector<2x512xf32>
    %469 = tpu.matmul %467, %468, %cst_65 {dimension_numbers = #tpu.dot_dimension_numbers<[1], [0], [0], [1], [0, 0, 1, 1], [], []>} : vector<2x128xbf16>, vector<128x512xbf16>, vector<2x512xf32> -> vector<2x512xf32>
    %470 = arith.addf %466, %469 : vector<2x512xf32>
    %471 = vector.extract_strided_slice %470 {offsets = [0, 0], sizes = [2, 384], strides = [1, 1]} : vector<2x512xf32> to vector<2x384xf32>
    %472 = arith.negf %471 : vector<2x384xf32>
    %473 = math.exp %472 : vector<2x384xf32>
    %cst_66 = arith.constant 1.000000e+00 : f32
    %474 = vector.broadcast %cst_66 : f32 to vector<2x384xf32>
    %475 = arith.addf %474, %473 : vector<2x384xf32>
    %476 = arith.divf %474, %475 : vector<2x384xf32>
    %477 = vector.extract_strided_slice %470 {offsets = [0, 384], sizes = [2, 128], strides = [1, 1]} : vector<2x512xf32> to vector<2x128xf32>
    %478 = math.tanh %477 : vector<2x128xf32>
    %479 = vector.extract_strided_slice %476 {offsets = [0, 128], sizes = [2, 128], strides = [1, 1]} : vector<2x384xf32> to vector<2x128xf32>
    %480 = arith.mulf %479, %462 : vector<2x128xf32>
    %481 = vector.extract_strided_slice %476 {offsets = [0, 0], sizes = [2, 128], strides = [1, 1]} : vector<2x384xf32> to vector<2x128xf32>
    %482 = arith.mulf %481, %478 : vector<2x128xf32>
    %483 = arith.addf %480, %482 : vector<2x128xf32>
    %484 = vector.extract_strided_slice %476 {offsets = [0, 256], sizes = [2, 128], strides = [1, 1]} : vector<2x384xf32> to vector<2x128xf32>
    %485 = math.tanh %483 : vector<2x128xf32>
    %486 = arith.mulf %484, %485 : vector<2x128xf32>
    %487 = vector.extract_strided_slice %358 {offsets = [12, 0], sizes = [2, 512], strides = [1, 1]} : vector<16x512xf32> to vector<2x512xf32>
    %488 = arith.truncf %486 : vector<2x128xf32> to vector<2x128xbf16>
    %c0_67 = arith.constant 0 : index
    %c0_68 = arith.constant 0 : index
    %489 = vector.load %arg7[%c0_67, %c0_68] : memref<128x512xbf16, #tpu.memory_space<vmem>>, vector<128x512xbf16>
    %cst_69 = arith.constant dense<0.000000e+00> : vector<2x512xf32>
    %490 = tpu.matmul %488, %489, %cst_69 {dimension_numbers = #tpu.dot_dimension_numbers<[1], [0], [0], [1], [0, 0, 1, 1], [], []>} : vector<2x128xbf16>, vector<128x512xbf16>, vector<2x512xf32> -> vector<2x512xf32>
    %491 = arith.addf %487, %490 : vector<2x512xf32>
    %492 = vector.extract_strided_slice %491 {offsets = [0, 0], sizes = [2, 384], strides = [1, 1]} : vector<2x512xf32> to vector<2x384xf32>
    %493 = arith.negf %492 : vector<2x384xf32>
    %494 = math.exp %493 : vector<2x384xf32>
    %cst_70 = arith.constant 1.000000e+00 : f32
    %495 = vector.broadcast %cst_70 : f32 to vector<2x384xf32>
    %496 = arith.addf %495, %494 : vector<2x384xf32>
    %497 = arith.divf %495, %496 : vector<2x384xf32>
    %498 = vector.extract_strided_slice %491 {offsets = [0, 384], sizes = [2, 128], strides = [1, 1]} : vector<2x512xf32> to vector<2x128xf32>
    %499 = math.tanh %498 : vector<2x128xf32>
    %500 = vector.extract_strided_slice %497 {offsets = [0, 128], sizes = [2, 128], strides = [1, 1]} : vector<2x384xf32> to vector<2x128xf32>
    %501 = arith.mulf %500, %483 : vector<2x128xf32>
    %502 = vector.extract_strided_slice %497 {offsets = [0, 0], sizes = [2, 128], strides = [1, 1]} : vector<2x384xf32> to vector<2x128xf32>
    %503 = arith.mulf %502, %499 : vector<2x128xf32>
    %504 = arith.addf %501, %503 : vector<2x128xf32>
    %505 = vector.extract_strided_slice %497 {offsets = [0, 256], sizes = [2, 128], strides = [1, 1]} : vector<2x384xf32> to vector<2x128xf32>
    %506 = math.tanh %504 : vector<2x128xf32>
    %507 = arith.mulf %505, %506 : vector<2x128xf32>
    %508 = vector.extract_strided_slice %358 {offsets = [14, 0], sizes = [2, 512], strides = [1, 1]} : vector<16x512xf32> to vector<2x512xf32>
    %509 = arith.truncf %507 : vector<2x128xf32> to vector<2x128xbf16>
    %c0_71 = arith.constant 0 : index
    %c0_72 = arith.constant 0 : index
    %510 = vector.load %arg7[%c0_71, %c0_72] : memref<128x512xbf16, #tpu.memory_space<vmem>>, vector<128x512xbf16>
    %cst_73 = arith.constant dense<0.000000e+00> : vector<2x512xf32>
    %511 = tpu.matmul %509, %510, %cst_73 {dimension_numbers = #tpu.dot_dimension_numbers<[1], [0], [0], [1], [0, 0, 1, 1], [], []>} : vector<2x128xbf16>, vector<128x512xbf16>, vector<2x512xf32> -> vector<2x512xf32>
    %512 = arith.addf %508, %511 : vector<2x512xf32>
    %513 = vector.extract_strided_slice %512 {offsets = [0, 0], sizes = [2, 384], strides = [1, 1]} : vector<2x512xf32> to vector<2x384xf32>
    %514 = arith.negf %513 : vector<2x384xf32>
    %515 = math.exp %514 : vector<2x384xf32>
    %cst_74 = arith.constant 1.000000e+00 : f32
    %516 = vector.broadcast %cst_74 : f32 to vector<2x384xf32>
    %517 = arith.addf %516, %515 : vector<2x384xf32>
    %518 = arith.divf %516, %517 : vector<2x384xf32>
    %519 = vector.extract_strided_slice %512 {offsets = [0, 384], sizes = [2, 128], strides = [1, 1]} : vector<2x512xf32> to vector<2x128xf32>
    %520 = math.tanh %519 : vector<2x128xf32>
    %521 = vector.extract_strided_slice %518 {offsets = [0, 128], sizes = [2, 128], strides = [1, 1]} : vector<2x384xf32> to vector<2x128xf32>
    %522 = arith.mulf %521, %504 : vector<2x128xf32>
    %523 = vector.extract_strided_slice %518 {offsets = [0, 0], sizes = [2, 128], strides = [1, 1]} : vector<2x384xf32> to vector<2x128xf32>
    %524 = arith.mulf %523, %520 : vector<2x128xf32>
    %525 = arith.addf %522, %524 : vector<2x128xf32>
    %526 = vector.extract_strided_slice %518 {offsets = [0, 256], sizes = [2, 128], strides = [1, 1]} : vector<2x384xf32> to vector<2x128xf32>
    %527 = math.tanh %525 : vector<2x128xf32>
    %528 = arith.mulf %526, %527 : vector<2x128xf32>
    %c0_75 = arith.constant 0 : index
    %c0_76 = arith.constant 0 : index
    %529 = vector.load %arg9[%c0_75, %c0_76] : memref<128x5xf32, #tpu.memory_space<vmem>>, vector<128x5xf32>
    %cst_77 = arith.constant dense<0.000000e+00> : vector<2x5xf32>
    %530 = tpu.matmul %528, %529, %cst_77 {dimension_numbers = #tpu.dot_dimension_numbers<[1], [0], [0], [1], [0, 0, 1, 1], [], []>} : vector<2x128xf32>, vector<128x5xf32>, vector<2x5xf32> -> vector<2x5xf32>
    %c0_78 = arith.constant 0 : index
    %c0_79 = arith.constant 0 : index
    %531 = vector.load %arg10[%c0_78, %c0_79] : memref<1x5xf32, #tpu.memory_space<vmem>>, vector<1x5xf32>
    %532 = vector.broadcast %531 : vector<1x5xf32> to vector<2x5xf32>
    %533 = arith.addf %530, %532 : vector<2x5xf32>
    %c0_80 = arith.constant 0 : index
    %c0_81 = arith.constant 0 : index
    %534 = vector.load %arg11[%c0_80, %c0_81] : memref<2x5xf32, #tpu.memory_space<vmem>>, vector<2x5xf32>
    tpu.vector_store %arg11[%c0_80, %c0_81], %533 {strides = array<i32>} : memref<2x5xf32, #tpu.memory_space<vmem>>, vector<2x5xf32>,
    return
  }
  func.func @transform_0(%arg0: i32) -> i32 {
    %c0_i32 = arith.constant 0 : i32
    %c0_i32_0 = arith.constant 0 : i32
    return %c0_i32 : i32
  }
  func.func @transform_1(%arg0: i32) -> (i32, i32) {
    %c0_i32 = arith.constant 0 : i32
    %c0_i32_0 = arith.constant 0 : i32
    %c0_i32_1 = arith.constant 0 : i32
    return %c0_i32, %c0_i32_0 : i32, i32
  }
  func.func @transform_2(%arg0: i32) -> (i32, i32) {
    %c0_i32 = arith.constant 0 : i32
    %c0_i32_0 = arith.constant 0 : i32
    %c0_i32_1 = arith.constant 0 : i32
    return %c0_i32, %c0_i32_0 : i32, i32
  }
  func.func @transform_3(%arg0: i32) -> (i32, i32) {
    %c0_i32 = arith.constant 0 : i32
    %c0_i32_0 = arith.constant 0 : i32
    %c0_i32_1 = arith.constant 0 : i32
    return %c0_i32, %c0_i32_0 : i32, i32
  }
  func.func @transform_4(%arg0: i32) -> (i32, i32) {
    %c0_i32 = arith.constant 0 : i32
    %c0_i32_0 = arith.constant 0 : i32
    %c0_i32_1 = arith.constant 0 : i32
    return %c0_i32, %c0_i32_0 : i32, i32
  }
  func.func @transform_5(%arg0: i32) -> (i32, i32) {
    %c0_i32 = arith.constant 0 : i32
    %c0_i32_0 = arith.constant 0 : i32
    %c0_i32_1 = arith.constant 0 : i32
    return %c0_i32, %c0_i32_0 : i32, i32
  }
  func.func @transform_6(%arg0: i32) -> (i32, i32) {
    %c0_i32 = arith.constant 0 : i32
    %c0_i32_0 = arith.constant 0 : i32
    %c0_i32_1 = arith.constant 0 : i32
    return %c0_i32, %c0_i32_0 : i32, i32
  }
  func.func @transform_7(%arg0: i32) -> (i32, i32) {
    %c0_i32 = arith.constant 0 : i32
    %c0_i32_0 = arith.constant 0 : i32
    %c0_i32_1 = arith.constant 0 : i32
    return %c0_i32, %c0_i32_0 : i32, i32
  }
  func.func @transform_8(%arg0: i32) -> (i32, i32) {
    %c0_i32 = arith.constant 0 : i32
    %c0_i32_0 = arith.constant 0 : i32
    %c0_i32_1 = arith.constant 0 : i32
    return %c0_i32, %c0_i32_0 : i32, i32
  }
  func.func @transform_9(%arg0: i32) -> (i32, i32) {
    %c0_i32 = arith.constant 0 : i32
    %c0_i32_0 = arith.constant 0 : i32
    %c0_i32_1 = arith.constant 0 : i32
    return %c0_i32, %c0_i32_0 : i32, i32
  }
  func.func @transform_10(%arg0: i32) -> (i32, i32) {
    %c0_i32 = arith.constant 0 : i32
    %c0_i32_0 = arith.constant 0 : i32
    %c0_i32_1 = arith.constant 0 : i32
    return %c0_i32, %c0_i32_0 : i32, i32
  }
}

</mosaic_0001>

<llo_original>
// kernel: classifier_forward.1
$region0: #{classifier_forward.1}
  #allocation0 [shape = 'u32[]', space=smem, size = 0x4, offset = 0x4, fixed_abs, tag = 'smem constant byte address 0x4 - core index']
  #allocation1 [shape = 'u32[144,128]{1,0:T(1,128)}', space=vmem, size = 0x12000, scoped, tag = 'internal scratch']
  %s0 = inlined_call_operand.vmem [shape: f32[3], index: 0, kind: input, shape index: {}]
  %s1 = inlined_call_operand.vmem [shape: bf16[16,48], index: 1, kind: input, shape index: {}]
  %s2 = inlined_call_operand.vmem [shape: bf16[48,288], index: 2, kind: input, shape index: {}]
  %s3 = inlined_call_operand.vmem [shape: f32[1,288], index: 3, kind: input, shape index: {}]
  %s4 = inlined_call_operand.hbm [shape: bf16[64,256], index: 4, kind: input, shape index: {}]
  %s5 = inlined_call_operand.hbm [shape: bf16[32,512], index: 5, kind: input, shape index: {}]
  %s6 = inlined_call_operand.vmem [shape: bf16[128,512], index: 6, kind: input, shape index: {}]
  %s7 = inlined_call_operand.vmem [shape: f32[1,512], index: 7, kind: input, shape index: {}]
  %s8 = inlined_call_operand.vmem [shape: f32[128,5], index: 8, kind: input, shape index: {}]
  %s9 = inlined_call_operand.vmem [shape: f32[1,5], index: 9, kind: input, shape index: {}]
  %s10 = inlined_call_operand.hbm [shape: f32[2,5], index: 10, kind: output, shape index: {}]
  %s11 = sld [smem:[#allocation0]]
  $region62: #{classifier_forward.1} parent=0
    _
  %s13 = ssub.s32 1, %s11
  %s14 = scalar_select 0, %s13, %s11
  $region1: #{classifier_forward.1} parent=0
    #allocation2 [shape = 'u8[512]{0}', space=smem, size = 0x200, scoped, tag = 'input window, operand 0, single buffered']
    #allocation3 [shape = 's32[1]{0}', space=sflag, size = 0x4, scoped, tag = 'scoped memory for classifier_forward.1']
    #allocation4 [shape = 's32[1]{0}', space=sflag, size = 0x4, scoped, tag = 'scoped memory for classifier_forward.1']
    #allocation5 [shape = 's32[1]{0}', space=sflag, size = 0x4, scoped, tag = 'scoped memory for classifier_forward.1']
    #allocation6 [shape = 'u8[32768]{0}', space=vmem, size = 0x8000, scoped, tag = 'input window, operand 4, single buffered']
    #allocation7 [shape = 'u8[32768]{0}', space=vmem, size = 0x8000, scoped, tag = 'input window, operand 5, single buffered']
    #allocation8 [shape = 's32[1]{0}', space=sflag, size = 0x4, scoped, tag = 'scoped memory for classifier_forward.1']
    #allocation9 [shape = 'u8[1024]{0}', space=vmem, size = 0x400, scoped, tag = 'output window, operand 0, single buffered']
    %15 = vsyncpa [#allocation5], 0
    %16 = vsyncpa [#allocation3], 0
    %17 = vsyncpa [#allocation8], 0
    %18 = vsyncpa [#allocation4], 0
    // Predicated region
    $region2: #{classifier_forward.1} parent=1 // pred_check
      _
    $region3: #{classifier_forward.1} parent=1 // pred_check_branch
      %20 = sbr.rel (0) target = $region5
    $region4: #{classifier_forward.1} parent=1 // pred_region
      %s22 = ssub.s32 16, 16
      %23 = vsyncadd [#allocation5], %s22
      %s25 = sshll.u32 %s0, 4
      %s26 = int_to_ptr.vmem [resolvable:$true] %s25
      %28 = dma.vmem_to_smem %s26, 16, [#allocation2], [#allocation5]
    $region5: #{classifier_forward.1} parent=1 // pred_fallthru
      _
    // Predicated region
    $region6: #{classifier_forward.1} parent=1 // pred_check
      _
    $region7: #{classifier_forward.1} parent=1 // pred_check_branch
      %30 = sbr.rel (0) target = $region9
    $region8: #{classifier_forward.1} parent=1 // pred_region
      _
    $region9: #{classifier_forward.1} parent=1 // pred_fallthru
      _
    // Predicated region
    $region10: #{classifier_forward.1} parent=1 // pred_check
      _
    $region11: #{classifier_forward.1} parent=1 // pred_check_branch
      %32 = sbr.rel (0) target = $region13
    $region12: #{classifier_forward.1} parent=1 // pred_region
      _
    $region13: #{classifier_forward.1} parent=1 // pred_fallthru
      _
    // Predicated region
    $region14: #{classifier_forward.1} parent=1 // pred_check
      _
    $region15: #{classifier_forward.1} parent=1 // pred_check_branch
      %34 = sbr.rel (0) target = $region17
    $region16: #{classifier_forward.1} parent=1 // pred_region
      _
    $region17: #{classifier_forward.1} parent=1 // pred_fallthru
      _
    // Predicated region
    $region18: #{classifier_forward.1} parent=1 // pred_check
      _
    $region19: #{classifier_forward.1} parent=1 // pred_check_branch
      %36 = sbr.rel (0) target = $region21
    $region20: #{classifier_forward.1} parent=1 // pred_region
      %s38 = ssub.s32 1024, 1024
      %39 = vsyncadd [#allocation3], %s38
      %s40 = sshll.u32 [#allocation6], 4
      %s41 = int_to_ptr.vmem [resolvable:$true] %s40
      %46 = dma.hbm_to_vmem [thread:$0]  %s4, 1024, %s41, [#allocation3], 128, 128, 8
    $region21: #{classifier_forward.1} parent=1 // pred_fallthru
      _
    // Predicated region
    $region22: #{classifier_forward.1} parent=1 // pred_check
      _
    $region23: #{classifier_forward.1} parent=1 // pred_check_branch
      %48 = sbr.rel (0) target = $region25
    $region24: #{classifier_forward.1} parent=1 // pred_region
      %s50 = ssub.s32 1024, 1024
      %51 = vsyncadd [#allocation8], %s50
      %s52 = sshll.u32 [#allocation7], 4
      %s53 = int_to_ptr.vmem [resolvable:$true] %s52
      %58 = dma.hbm_to_vmem [thread:$0]  %s5, 1024, %s53, [#allocation8], 256, 256, 16
    $region25: #{classifier_forward.1} parent=1 // pred_fallthru
      _
    // Predicated region
    $region26: #{classifier_forward.1} parent=1 // pred_check
      _
    $region27: #{classifier_forward.1} parent=1 // pred_check_branch
      %60 = sbr.rel (0) target = $region29
    $region28: #{classifier_forward.1} parent=1 // pred_region
      _
    $region29: #{classifier_forward.1} parent=1 // pred_fallthru
      _
    // Predicated region
    $region30: #{classifier_forward.1} parent=1 // pred_check
      _
    $region31: #{classifier_forward.1} parent=1 // pred_check_branch
      %62 = sbr.rel (0) target = $region33
    $region32: #{classifier_forward.1} parent=1 // pred_region
      _
    $region33: #{classifier_forward.1} parent=1 // pred_fallthru
      _
    // Predicated region
    $region34: #{classifier_forward.1} parent=1 // pred_check
      _
    $region35: #{classifier_forward.1} parent=1 // pred_check_branch
      %64 = sbr.rel (0) target = $region37
    $region36: #{classifier_forward.1} parent=1 // pred_region
      _
    $region37: #{classifier_forward.1} parent=1 // pred_fallthru
      _
    // Predicated region
    $region38: #{classifier_forward.1} parent=1 // pred_check
      _
    $region39: #{classifier_forward.1} parent=1 // pred_check_branch
      %66 = sbr.rel (0) target = $region41
    $region40: #{classifier_forward.1} parent=1 // pred_region
      _
    $region41: #{classifier_forward.1} parent=1 // pred_fallthru
      _
    // Predicated region
    $region42: #{classifier_forward.1} parent=1 // pred_check
      _
    $region43: #{classifier_forward.1} parent=1 // pred_check_branch
      %68 = sbr.rel (0) target = $region45
    $region44: #{classifier_forward.1} parent=1 // pred_region
      %69 = dma.done [#allocation5], 16
    $region45: #{classifier_forward.1} parent=1 // pred_fallthru
      _
    // Predicated region
    $region46: #{classifier_forward.1} parent=1 // pred_check
      _
    $region47: #{classifier_forward.1} parent=1 // pred_check_branch
      %71 = sbr.rel (0) target = $region49
    $region48: #{classifier_forward.1} parent=1 // pred_region
      %72 = dma.done [#allocation3], 1024
    $region49: #{classifier_forward.1} parent=1 // pred_fallthru
      _
    // Predicated region
    $region50: #{classifier_forward.1} parent=1 // pred_check
      _
    $region51: #{classifier_forward.1} parent=1 // pred_check_branch
      %74 = sbr.rel (0) target = $region53
    $region52: #{classifier_forward.1} parent=1 // pred_region
      %75 = dma.done [#allocation8], 1024
    $region53: #{classifier_forward.1} parent=1 // pred_fallthru
      _
    %76 = sfence
    %v78 = vld [vmem:[%s1] sm:$0xf]
    %v79 = vld [vmem:[%s1 + $0x4] sm:$0xf]
    %v80 = vld [vmem:[%s2] sm:$0xff]
    %v81 = vld [vmem:[%s2 + $0x8] sm:$0xf]
    %v82 = vld [vmem:[%s2 + $0xc] sm:$0xff]
    %v83 = vld [vmem:[%s2 + $0x14] sm:$0xf]
    %v84 = vld [vmem:[%s2 + $0x18] sm:$0xff]
    %v85 = vld [vmem:[%s2 + $0x20] sm:$0xf]
    %v86 = vld [vmem:[%s2 + $0x24] sm:$0xff]
    %v87 = vld [vmem:[%s2 + $0x2c] sm:$0xf]
    %v88 = vld [vmem:[%s2 + $0x30] sm:$0xff]
    %v89 = vld [vmem:[%s2 + $0x38] sm:$0xf]
    %v90 = vld [vmem:[%s2 + $0x3c] sm:$0xff]
    %v91 = vld [vmem:[%s2 + $0x44] sm:$0xf]
    %v92 = vld [vmem:[%s3] sm:$0x7]
    %v94 = vlaneseq
    %v95 = vshrl.u32 %v94, 7
    %v96 = vsub.s32 0, %v95
    %v97 = vrot.slane %v92, %v96
    %v98 = vlaneseq
    %v99 = vshrl.u32 %v98, 7
    %v100 = vsub.s32 1, %v99
    %v101 = vrot.slane %v92, %v100
    %v102 = vlaneseq
    %v103 = vshrl.u32 %v102, 7
    %v104 = vsub.s32 2, %v103
    %v105 = vrot.slane %v92, %v104
    %v111 = vunpack.c.l.b16 %v78
    %v112 = vunpack.c.l.b16 %v79
    %v113 = vpack.c.b16 %v112, %v111
    %v126 = vunpack.c.l.b16 %v80
    %v127 = vunpack.c.h.b16 %v80
    %v128 = vunpack.c.l.b16 %v81
    %v129 = vunpack.c.l.b16 %v82
    %v130 = vunpack.c.h.b16 %v82
    %v131 = vunpack.c.l.b16 %v83
    %v132 = vunpack.c.l.b16 %v84
    %v133 = vunpack.c.h.b16 %v84
    %v134 = vunpack.c.l.b16 %v85
    %v135 = vunpack.c.l.b16 %v86
    %v136 = vunpack.c.h.b16 %v86
    %v137 = vunpack.c.l.b16 %v87
    %v138 = vunpack.c.l.b16 %v88
    %v139 = vunpack.c.h.b16 %v88
    %v140 = vunpack.c.l.b16 %v89
    %v141 = vunpack.c.l.b16 %v90
    %v142 = vunpack.c.h.b16 %v90
    %v143 = vunpack.c.l.b16 %v91
    %v144 = vpack.c.b16 %v129, %v126
    %v145 = vpack.c.b16 %v130, %v127
    %v146 = vpack.c.b16 %v131, %v128
    %v147 = vpack.c.b16 %v135, %v132
    %v148 = vpack.c.b16 %v136, %v133
    %v149 = vpack.c.b16 %v137, %v134
    %v150 = vpack.c.b16 %v141, %v138
    %v151 = vpack.c.b16 %v142, %v139
    %v152 = vpack.c.b16 %v143, %v140
    %vm162 = vcmask 392192
    %v164 = vsel %vm162, %v113, 0
    %166 = vmatprep.subr.bf16.mxu0 %v145
    %167 = vmatpush1.bf16.msra.mxu0 %v144
    %168 = vmatprep.subr.bf16.mxu0 %v148
    %169 = vmatpush1.bf16.msra.mxu0 %v147
    %170 = vmatprep.subr.bf16.mxu0 %v151
    %171 = vmatpush1.bf16.msra.mxu0 %v150
    %172 = vmatprep.subr.bf16.mxu0 0
    %173 = vmatpush1.bf16.msra.mxu0 0
    %174 = vmatprep.subr.bf16.mxu0 0
    %175 = vmatpush1.bf16.msra.mxu0 0
    %176 = vmatprep.subr.bf16.mxu0 0
    %177 = vmatpush1.bf16.msra.mxu0 0
    %178 = vmatprep.subr.bf16.mxu0 0
    %179 = vmatpush1.bf16.msra.mxu0 0
    %180 = vmatprep.subr.bf16.mxu0 0
    %181 = vmatpush1.bf16.msra.mxu0 0
    %182 = vmatprep.subr.bf16.mxu0 0
    %183 = vmatpush1.bf16.msra.mxu0 0
    %184 = vmatprep.subr.bf16.mxu0 0
    %185 = vmatpush1.bf16.msra.mxu0 0
    %186 = vmatprep.subr.bf16.mxu0 0
    %187 = vmatpush1.bf16.msra.mxu0 0
    %188 = vmatprep.subr.bf16.mxu0 0
    %189 = vmatpush1.bf16.msra.mxu0 0
    %190 = vmatprep.subr.bf16.mxu0 0
    %191 = vmatpush1.bf16.msra.mxu0 0
    %192 = vmatprep.subr.bf16.mxu0 0
    %193 = vmatpush1.bf16.msra.mxu0 0
    %194 = vmatprep.subr.bf16.mxu0 0
    %195 = vmatpush1.bf16.msra.mxu0 0
    %196 = vmatprep.subr.bf16.mxu0 0
    %197 = vmatpush1.bf16.msra.mxu0 0
    %198 = vmatprep.mubr.bf16.mxu0 0
    %199 = vmatmul.mubr.bf16.gmra.mrb[0].mxu0 %v164
    %v200 = vpop.f32.mrb[0].mxu0
    %v201 = vadd.f32 %v97, %v200
    %v202 = vpop.f32.mrb[0].mxu0
    %v203 = vadd.f32 %v101, %v202
    %v204 = vpop.f32.mrb[0].mxu0
    %v205 = vadd.f32 %v97, %v204
    %v206 = vpop.f32.mrb[0].mxu0
    %v207 = vadd.f32 %v101, %v206
    %208 = vdwg.mxu0
    %209 = vmatprep.subr.bf16.mxu0 0
    %210 = vmatpush1.bf16.msra.mxu0 %v146
    %211 = vmatprep.subr.bf16.mxu0 0
    %212 = vmatpush1.bf16.msra.mxu0 %v149
    %213 = vmatprep.subr.bf16.mxu0 0
    %214 = vmatpush1.bf16.msra.mxu0 %v152
    %215 = vmatprep.subr.bf16.mxu0 0
    %216 = vmatpush1.bf16.msra.mxu0 0
    %217 = vmatprep.subr.bf16.mxu0 0
    %218 = vmatpush1.bf16.msra.mxu0 0
    %219 = vmatprep.subr.bf16.mxu0 0
    %220 = vmatpush1.bf16.msra.mxu0 0
    %221 = vmatprep.subr.bf16.mxu0 0
    %222 = vmatpush1.bf16.msra.mxu0 0
    %223 = vmatprep.subr.bf16.mxu0 0
    %224 = vmatpush1.bf16.msra.mxu0 0
    %225 = vmatprep.subr.bf16.mxu0 0
    %226 = vmatpush1.bf16.msra.mxu0 0
    %227 = vmatprep.subr.bf16.mxu0 0
    %228 = vmatpush1.bf16.msra.mxu0 0
    %229 = vmatprep.subr.bf16.mxu0 0
    %230 = vmatpush1.bf16.msra.mxu0 0
    %231 = vmatprep.subr.bf16.mxu0 0
    %232 = vmatpush1.bf16.msra.mxu0 0
    %233 = vmatprep.subr.bf16.mxu0 0
    %234 = vmatpush1.bf16.msra.mxu0 0
    %235 = vmatprep.subr.bf16.mxu0 0
    %236 = vmatpush1.bf16.msra.mxu0 0
    %237 = vmatprep.subr.bf16.mxu0 0
    %238 = vmatpush1.bf16.msra.mxu0 0
    %239 = vmatprep.subr.bf16.mxu0 0
    %240 = vmatpush1.bf16.msra.mxu0 0
    %241 = vmatprep.mubr.bf16.mxu0 0
    %242 = vmatmul.mubr.bf16.gmra.mrb[0].mxu0 %v164
    %v243 = vpop.f32.mrb[0].mxu0
    %v244 = vadd.f32 %v105, %v243
    %v245 = vpop.f32.mrb[0].mxu0
    %v246 = vpop.f32.mrb[0].mxu0
    %v247 = vadd.f32 %v105, %v246
    %v248 = vpop.f32.mrb[0].mxu0
    %249 = vdwg.mxu0
    %v250 = vld [vmem:[#allocation6] sm:$0xff]
    %v251 = vld [vmem:[#allocation6 + $0x8] sm:$0xff]
    %v252 = vld [vmem:[#allocation6 + $0x10] sm:$0xff]
    %v253 = vld [vmem:[#allocation6 + $0x18] sm:$0xff]
    %v254 = vld [vmem:[#allocation6 + $0x20] sm:$0xff]
    %v255 = vld [vmem:[#allocation6 + $0x28] sm:$0xff]
    %v256 = vld [vmem:[#allocation6 + $0x30] sm:$0xff]
    %v257 = vld [vmem:[#allocation6 + $0x38] sm:$0xff]
    %v258 = vpack.c.bf16 0.0, 0.0
    %v267 = vunpack.c.l.b16 %v250
    %v268 = vunpack.c.h.b16 %v250
    %v269 = vunpack.c.l.b16 %v251
    %v270 = vunpack.c.h.b16 %v251
    %v271 = vunpack.c.l.b16 %v252
    %v272 = vunpack.c.h.b16 %v252
    %v273 = vunpack.c.l.b16 %v253
    %v274 = vunpack.c.h.b16 %v253
    %v275 = vunpack.c.l.b16 %v254
    %v276 = vunpack.c.h.b16 %v254
    %v277 = vunpack.c.l.b16 %v255
    %v278 = vunpack.c.h.b16 %v255
    %v279 = vunpack.c.l.b16 %v256
    %v280 = vunpack.c.h.b16 %v256
    %v281 = vunpack.c.l.b16 %v257
    %v282 = vunpack.c.h.b16 %v257
    %v283 = vpack.c.b16 %v269, %v267
    %v284 = vpack.c.b16 %v270, %v268
    %v285 = vpack.c.b16 %v273, %v271
    %v286 = vpack.c.b16 %v274, %v272
    %v287 = vpack.c.b16 %v277, %v275
    %v288 = vpack.c.b16 %v278, %v276
    %v289 = vpack.c.b16 %v281, %v279
    %v290 = vpack.c.b16 %v282, %v280
    %vm299 = vcmask 523264
    %v301 = vsel %vm299, %v258, 0
    %303 = vmatprep.subr.bf16.mxu0 %v284
    %304 = vmatpush1.bf16.msra.mxu0 %v283
    %305 = vmatprep.subr.bf16.mxu0 %v286
    %306 = vmatpush1.bf16.msra.mxu0 %v285
    %307 = vmatprep.subr.bf16.mxu0 %v288
    %308 = vmatpush1.bf16.msra.mxu0 %v287
    %309 = vmatprep.subr.bf16.mxu0 %v290
    %310 = vmatpush1.bf16.msra.mxu0 %v289
    %311 = vmatprep.subr.bf16.mxu0 0
    %312 = vmatpush1.bf16.msra.mxu0 0
    %313 = vmatprep.subr.bf16.mxu0 0
    %314 = vmatpush1.bf16.msra.mxu0 0
    %315 = vmatprep.subr.bf16.mxu0 0
    %316 = vmatpush1.bf16.msra.mxu0 0
    %317 = vmatprep.subr.bf16.mxu0 0
    %318 = vmatpush1.bf16.msra.mxu0 0
    %319 = vmatprep.subr.bf16.mxu0 0
    %320 = vmatpush1.bf16.msra.mxu0 0
    %321 = vmatprep.subr.bf16.mxu0 0
    %322 = vmatpush1.bf16.msra.mxu0 0
    %323 = vmatprep.subr.bf16.mxu0 0
    %324 = vmatpush1.bf16.msra.mxu0 0
    %325 = vmatprep.subr.bf16.mxu0 0
    %326 = vmatpush1.bf16.msra.mxu0 0
    %327 = vmatprep.subr.bf16.mxu0 0
    %328 = vmatpush1.bf16.msra.mxu0 0
    %329 = vmatprep.subr.bf16.mxu0 0
    %330 = vmatpush1.bf16.msra.mxu0 0
    %331 = vmatprep.subr.bf16.mxu0 0
    %332 = vmatpush1.bf16.msra.mxu0 0
    %333 = vmatprep.subr.bf16.mxu0 0
    %334 = vmatpush1.bf16.msra.mxu0 0
    %335 = vmatprep.mubr.bf16.mxu0 0
    %336 = vmatmul.mubr.bf16.gmra.mrb[0].mxu0 %v301
    %v337 = vpop.f32.mrb[0].mxu0
    %v338 = vadd.f32 0.0, %v337
    %v339 = vpop.f32.mrb[0].mxu0
    %v340 = vadd.f32 0.0, %v339
    %v341 = vpop.f32.mrb[0].mxu0
    %v342 = vpop.f32.mrb[0].mxu0
    %343 = vdwg.mxu0
    %v344 = vadd.f32 %v201, %v338
    %v346 = vrot.slane %v340, 2
    %v348 = vadd.f32 %v207, %v346
    %v349 = vxor.u32 %v344, 2147483648
    %v350 = vmul.f32 %v349, 1.442695
    %v351 = vpow.pop %v350
    %v352 = vadd.f32 %v351, 1.0
    %v353 = vrcp.pop %v352
    %v354 = vmul.f32 1.0, %v353
    %v355 = vtanh.pop %v344
    %v356 = vmul.f32 %v354, 0.0
    %358 = vrot.lane.b32.xlu0 %v355, 32
    %v359 = vpop.permute.xlu0 %358
    %v361 = vmul.f32 %v354, %v359
    %363 = vrot.lane.b32.xlu0 %v361, 32
    %v364 = vpop.permute.xlu0 %363
    %v366 = vadd.f32 %v356, %v364
    %v367 = vtanh.pop %v366
    %369 = vrot.lane.b32.xlu0 %v367, 32
    %v370 = vpop.permute.xlu0 %369
    %v372 = vmul.f32 %v354, %v370
    %v373 = vxor.u32 %v348, 2147483648
    %v374 = vmul.f32 %v373, 1.442695
    %v375 = vpow.pop %v374
    %v376 = vadd.f32 %v375, 1.0
    %v377 = vrcp.pop %v376
    %v378 = vmul.f32 1.0, %v377
    %v379 = vtanh.pop %v348
    %v380 = vmul.f32 %v378, 0.0
    %382 = vrot.lane.b32.xlu0 %v379, 32
    %v383 = vpop.permute.xlu0 %382
    %v385 = vmul.f32 %v378, %v383
    %387 = vrot.lane.b32.xlu0 %v385, 32
    %v388 = vpop.permute.xlu0 %387
    %v390 = vadd.f32 %v380, %v388
    %v391 = vtanh.pop %v390
    %393 = vrot.lane.b32.xlu0 %v391, 32
    %v394 = vpop.permute.xlu0 %393
    %v396 = vmul.f32 %v378, %v394
    %398 = vrot.lane.b32.xlu0 %v372, 64
    %v399 = vpop.permute.xlu0 %398
    %v402 = vrot.slane %v396, 6
    %403 = vrot.lane.b32.xlu0 %v402, 96
    %v404 = vpop.permute.xlu0 %403
    %vm406 = vcmask 261120
    %v407 = vsel %vm406, %v399, %v404
    %v408 = vpack.c.bf16 %v407, %v407
    %v410 = vsel %vm299, %v408, 0
    %412 = vmatprep.subr.bf16.mxu0 %v284
    %413 = vmatpush1.bf16.msra.mxu0 %v283
    %414 = vmatprep.subr.bf16.mxu0 %v286
    %415 = vmatpush1.bf16.msra.mxu0 %v285
    %416 = vmatprep.subr.bf16.mxu0 %v288
    %417 = vmatpush1.bf16.msra.mxu0 %v287
    %418 = vmatprep.subr.bf16.mxu0 %v290
    %419 = vmatpush1.bf16.msra.mxu0 %v289
    %420 = vmatprep.subr.bf16.mxu0 0
    %421 = vmatpush1.bf16.msra.mxu0 0
    %422 = vmatprep.subr.bf16.mxu0 0
    %423 = vmatpush1.bf16.msra.mxu0 0
    %424 = vmatprep.subr.bf16.mxu0 0
    %425 = vmatpush1.bf16.msra.mxu0 0
    %426 = vmatprep.subr.bf16.mxu0 0
    %427 = vmatpush1.bf16.msra.mxu0 0
    %428 = vmatprep.subr.bf16.mxu0 0
    %429 = vmatpush1.bf16.msra.mxu0 0
    %430 = vmatprep.subr.bf16.mxu0 0
    %431 = vmatpush1.bf16.msra.mxu0 0
    %432 = vmatprep.subr.bf16.mxu0 0
    %433 = vmatpush1.bf16.msra.mxu0 0
    %434 = vmatprep.subr.bf16.mxu0 0
    %435 = vmatpush1.bf16.msra.mxu0 0
    %436 = vmatprep.subr.bf16.mxu0 0
    %437 = vmatpush1.bf16.msra.mxu0 0
    %438 = vmatprep.subr.bf16.mxu0 0
    %439 = vmatpush1.bf16.msra.mxu0 0
    %440 = vmatprep.subr.bf16.mxu0 0
    %441 = vmatpush1.bf16.msra.mxu0 0
    %442 = vmatprep.subr.bf16.mxu0 0
    %443 = vmatpush1.bf16.msra.mxu0 0
    %444 = vmatprep.mubr.bf16.mxu0 0
    %445 = vmatmul.mubr.bf16.gmra.mrb[0].mxu0 %v410
    %v446 = vpop.f32.mrb[0].mxu0
    %v447 = vadd.f32 0.0, %v446
    %v448 = vpop.f32.mrb[0].mxu0
    %v449 = vadd.f32 0.0, %v448
    %v450 = vpop.f32.mrb[0].mxu0
    %v451 = vpop.f32.mrb[0].mxu0
    %452 = vdwg.mxu0
    %v454 = vrot.slane %v447, 6
    %v456 = vadd.f32 %v201, %v454
    %v458 = vrot.slane %v449, 4
    %v460 = vadd.f32 %v207, %v458
    %v461 = vxor.u32 %v456, 2147483648
    %v462 = vmul.f32 %v461, 1.442695
    %v463 = vpow.pop %v462
    %v464 = vadd.f32 %v463, 1.0
    %v465 = vrcp.pop %v464
    %v466 = vmul.f32 1.0, %v465
    %v467 = vtanh.pop %v456
    %v469 = vrot.slane %v366, 6
    %v471 = vmul.f32 %v466, %v469
    %473 = vrot.lane.b32.xlu0 %v467, 32
    %v474 = vpop.permute.xlu0 %473
    %v476 = vmul.f32 %v466, %v474
    %478 = vrot.lane.b32.xlu0 %v476, 32
    %v479 = vpop.permute.xlu0 %478
    %v481 = vadd.f32 %v471, %v479
    %v482 = vtanh.pop %v481
    %484 = vrot.lane.b32.xlu0 %v482, 32
    %v485 = vpop.permute.xlu0 %484
    %v487 = vmul.f32 %v466, %v485
    %v488 = vxor.u32 %v460, 2147483648
    %v489 = vmul.f32 %v488, 1.442695
    %v490 = vpow.pop %v489
    %v491 = vadd.f32 %v490, 1.0
    %v492 = vrcp.pop %v491
    %v493 = vmul.f32 1.0, %v492
    %v494 = vtanh.pop %v460
    %v496 = vrot.slane %v390, 2
    %v498 = vmul.f32 %v493, %v496
    %500 = vrot.lane.b32.xlu0 %v494, 32
    %v501 = vpop.permute.xlu0 %500
    %v503 = vmul.f32 %v493, %v501
    %505 = vrot.lane.b32.xlu0 %v503, 32
    %v506 = vpop.permute.xlu0 %505
    %v508 = vadd.f32 %v498, %v506
    %v509 = vtanh.pop %v508
    %511 = vrot.lane.b32.xlu0 %v509, 32
    %v512 = vpop.permute.xlu0 %511
    %v514 = vmul.f32 %v493, %v512
    %516 = vrot.lane.b32.xlu0 %v487, 64
    %v517 = vpop.permute.xlu0 %516
    %v520 = vrot.slane %v514, 2
    %521 = vrot.lane.b32.xlu0 %v520, 96
    %v522 = vpop.permute.xlu0 %521
    %v524 = vsel %vm406, %v517, %v522
    %v525 = vpack.c.bf16 %v524, %v524
    %v527 = vrot.slane %v525, 1
    %v529 = vsel %vm299, %v527, 0
    %531 = vmatprep.subr.bf16.mxu0 %v284
    %532 = vmatpush1.bf16.msra.mxu0 %v283
    %533 = vmatprep.subr.bf16.mxu0 %v286
    %534 = vmatpush1.bf16.msra.mxu0 %v285
    %535 = vmatprep.subr.bf16.mxu0 %v288
    %536 = vmatpush1.bf16.msra.mxu0 %v287
    %537 = vmatprep.subr.bf16.mxu0 %v290
    %538 = vmatpush1.bf16.msra.mxu0 %v289
    %539 = vmatprep.subr.bf16.mxu0 0
    %540 = vmatpush1.bf16.msra.mxu0 0
    %541 = vmatprep.subr.bf16.mxu0 0
    %542 = vmatpush1.bf16.msra.mxu0 0
    %543 = vmatprep.subr.bf16.mxu0 0
    %544 = vmatpush1.bf16.msra.mxu0 0
    %545 = vmatprep.subr.bf16.mxu0 0
    %546 = vmatpush1.bf16.msra.mxu0 0
    %547 = vmatprep.subr.bf16.mxu0 0
    %548 = vmatpush1.bf16.msra.mxu0 0
    %549 = vmatprep.subr.bf16.mxu0 0
    %550 = vmatpush1.bf16.msra.mxu0 0
    %551 = vmatprep.subr.bf16.mxu0 0
    %552 = vmatpush1.bf16.msra.mxu0 0
    %553 = vmatprep.subr.bf16.mxu0 0
    %554 = vmatpush1.bf16.msra.mxu0 0
    %555 = vmatprep.subr.bf16.mxu0 0
    %556 = vmatpush1.bf16.msra.mxu0 0
    %557 = vmatprep.subr.bf16.mxu0 0
    %558 = vmatpush1.bf16.msra.mxu0 0
    %559 = vmatprep.subr.bf16.mxu0 0
    %560 = vmatpush1.bf16.msra.mxu0 0
    %561 = vmatprep.subr.bf16.mxu0 0
    %562 = vmatpush1.bf16.msra.mxu0 0
    %563 = vmatprep.mubr.bf16.mxu0 0
    %564 = vmatmul.mubr.bf16.gmra.mrb[0].mxu0 %v529
    %v565 = vpop.f32.mrb[0].mxu0
    %v566 = vadd.f32 0.0, %v565
    %v567 = vpop.f32.mrb[0].mxu0
    %v568 = vadd.f32 0.0, %v567
    %v569 = vpop.f32.mrb[0].mxu0
    %v570 = vpop.f32.mrb[0].mxu0
    %571 = vdwg.mxu0
    %v573 = vrot.slane %v566, 4
    %v575 = vadd.f32 %v201, %v573
    %v577 = vrot.slane %v568, 6
    %v579 = vadd.f32 %v207, %v577
    %v580 = vxor.u32 %v575, 2147483648
    %v581 = vmul.f32 %v580, 1.442695
    %v582 = vpow.pop %v581
    %v583 = vadd.f32 %v582, 1.0
    %v584 = vrcp.pop %v583
    %v585 = vmul.f32 1.0, %v584
    %v586 = vtanh.pop %v575
    %v588 = vrot.slane %v481, 6
    %v590 = vmul.f32 %v585, %v588
    %592 = vrot.lane.b32.xlu0 %v586, 32
    %v593 = vpop.permute.xlu0 %592
    %v595 = vmul.f32 %v585, %v593
    %597 = vrot.lane.b32.xlu0 %v595, 32
    %v598 = vpop.permute.xlu0 %597
    %v600 = vadd.f32 %v590, %v598
    %v601 = vtanh.pop %v600
    %603 = vrot.lane.b32.xlu0 %v601, 32
    %v604 = vpop.permute.xlu0 %603
    %v606 = vmul.f32 %v585, %v604
    %v607 = vxor.u32 %v579, 2147483648
    %v608 = vmul.f32 %v607, 1.442695
    %v609 = vpow.pop %v608
    %v610 = vadd.f32 %v609, 1.0
    %v611 = vrcp.pop %v610
    %v612 = vmul.f32 1.0, %v611
    %v613 = vtanh.pop %v579
    %v615 = vrot.slane %v508, 2
    %v617 = vmul.f32 %v612, %v615
    %619 = vrot.lane.b32.xlu0 %v613, 32
    %v620 = vpop.permute.xlu0 %619
    %v622 = vmul.f32 %v612, %v620
    %624 = vrot.lane.b32.xlu0 %v622, 32
    %v625 = vpop.permute.xlu0 %624
    %v627 = vadd.f32 %v617, %v625
    %v628 = vtanh.pop %v627
    %630 = vrot.lane.b32.xlu0 %v628, 32
    %v631 = vpop.permute.xlu0 %630
    %v633 = vmul.f32 %v612, %v631
    %635 = vrot.lane.b32.xlu0 %v606, 64
    %v636 = vpop.permute.xlu0 %635
    %v639 = vrot.slane %v633, 6
    %640 = vrot.lane.b32.xlu0 %v639, 96
    %v641 = vpop.permute.xlu0 %640
    %v643 = vsel %vm406, %v636, %v641
    %v644 = vpack.c.bf16 %v643, %v643
    %v646 = vrot.slane %v644, 2
    %v648 = vsel %vm299, %v646, 0
    %650 = vmatprep.subr.bf16.mxu0 %v284
    %651 = vmatpush1.bf16.msra.mxu0 %v283
    %652 = vmatprep.subr.bf16.mxu0 %v286
    %653 = vmatpush1.bf16.msra.mxu0 %v285
    %654 = vmatprep.subr.bf16.mxu0 %v288
    %655 = vmatpush1.bf16.msra.mxu0 %v287
    %656 = vmatprep.subr.bf16.mxu0 %v290
    %657 = vmatpush1.bf16.msra.mxu0 %v289
    %658 = vmatprep.subr.bf16.mxu0 0
    %659 = vmatpush1.bf16.msra.mxu0 0
    %660 = vmatprep.subr.bf16.mxu0 0
    %661 = vmatpush1.bf16.msra.mxu0 0
    %662 = vmatprep.subr.bf16.mxu0 0
    %663 = vmatpush1.bf16.msra.mxu0 0
    %664 = vmatprep.subr.bf16.mxu0 0
    %665 = vmatpush1.bf16.msra.mxu0 0
    %666 = vmatprep.subr.bf16.mxu0 0
    %667 = vmatpush1.bf16.msra.mxu0 0
    %668 = vmatprep.subr.bf16.mxu0 0
    %669 = vmatpush1.bf16.msra.mxu0 0
    %670 = vmatprep.subr.bf16.mxu0 0
    %671 = vmatpush1.bf16.msra.mxu0 0
    %672 = vmatprep.subr.bf16.mxu0 0
    %673 = vmatpush1.bf16.msra.mxu0 0
    %674 = vmatprep.subr.bf16.mxu0 0
    %675 = vmatpush1.bf16.msra.mxu0 0
    %676 = vmatprep.subr.bf16.mxu0 0
    %677 = vmatpush1.bf16.msra.mxu0 0
    %678 = vmatprep.subr.bf16.mxu0 0
    %679 = vmatpush1.bf16.msra.mxu0 0
    %680 = vmatprep.subr.bf16.mxu0 0
    %681 = vmatpush1.bf16.msra.mxu0 0
    %682 = vmatprep.mubr.bf16.mxu0 0
    %683 = vmatmul.mubr.bf16.gmra.mrb[0].mxu0 %v648
    %v684 = vpop.f32.mrb[0].mxu0
    %v685 = vadd.f32 0.0, %v684
    %v686 = vpop.f32.mrb[0].mxu0
    %v687 = vadd.f32 0.0, %v686
    %v688 = vpop.f32.mrb[0].mxu0
    %v689 = vpop.f32.mrb[0].mxu0
    %690 = vdwg.mxu0
    %v692 = vrot.slane %v685, 2
    %v694 = vadd.f32 %v201, %v692
    %v695 = vadd.f32 %v207, %v687
    %v696 = vxor.u32 %v694, 2147483648
    %v697 = vmul.f32 %v696, 1.442695
    %v698 = vpow.pop %v697
    %v699 = vadd.f32 %v698, 1.0
    %v700 = vrcp.pop %v699
    %v701 = vmul.f32 1.0, %v700
    %v702 = vtanh.pop %v694
    %v704 = vrot.slane %v600, 6
    %v706 = vmul.f32 %v701, %v704
    %708 = vrot.lane.b32.xlu0 %v702, 32
    %v709 = vpop.permute.xlu0 %708
    %v711 = vmul.f32 %v701, %v709
    %713 = vrot.lane.b32.xlu0 %v711, 32
    %v714 = vpop.permute.xlu0 %713
    %v716 = vadd.f32 %v706, %v714
    %v717 = vtanh.pop %v716
    %719 = vrot.lane.b32.xlu0 %v717, 32
    %v720 = vpop.permute.xlu0 %719
    %v722 = vmul.f32 %v701, %v720
    %v723 = vxor.u32 %v695, 2147483648
    %v724 = vmul.f32 %v723, 1.442695
    %v725 = vpow.pop %v724
    %v726 = vadd.f32 %v725, 1.0
    %v727 = vrcp.pop %v726
    %v728 = vmul.f32 1.0, %v727
    %v729 = vtanh.pop %v695
    %v731 = vrot.slane %v627, 2
    %v733 = vmul.f32 %v728, %v731
    %735 = vrot.lane.b32.xlu0 %v729, 32
    %v736 = vpop.permute.xlu0 %735
    %v738 = vmul.f32 %v728, %v736
    %740 = vrot.lane.b32.xlu0 %v738, 32
    %v741 = vpop.permute.xlu0 %740
    %v743 = vadd.f32 %v733, %v741
    %v744 = vtanh.pop %v743
    %746 = vrot.lane.b32.xlu0 %v744, 32
    %v747 = vpop.permute.xlu0 %746
    %v749 = vmul.f32 %v728, %v747
    %751 = vrot.lane.b32.xlu0 %v722, 64
    %v752 = vpop.permute.xlu0 %751
    %v755 = vrot.slane %v749, 2
    %756 = vrot.lane.b32.xlu0 %v755, 96
    %v757 = vpop.permute.xlu0 %756
    %v759 = vsel %vm406, %v752, %v757
    %v760 = vpack.c.bf16 %v759, %v759
    %v762 = vrot.slane %v760, 3
    %v764 = vsel %vm299, %v762, 0
    %766 = vmatprep.subr.bf16.mxu0 %v284
    %767 = vmatpush1.bf16.msra.mxu0 %v283
    %768 = vmatprep.subr.bf16.mxu0 %v286
    %769 = vmatpush1.bf16.msra.mxu0 %v285
    %770 = vmatprep.subr.bf16.mxu0 %v288
    %771 = vmatpush1.bf16.msra.mxu0 %v287
    %772 = vmatprep.subr.bf16.mxu0 %v290
    %773 = vmatpush1.bf16.msra.mxu0 %v289
    %774 = vmatprep.subr.bf16.mxu0 0
    %775 = vmatpush1.bf16.msra.mxu0 0
    %776 = vmatprep.subr.bf16.mxu0 0
    %777 = vmatpush1.bf16.msra.mxu0 0
    %778 = vmatprep.subr.bf16.mxu0 0
    %779 = vmatpush1.bf16.msra.mxu0 0
    %780 = vmatprep.subr.bf16.mxu0 0
    %781 = vmatpush1.bf16.msra.mxu0 0
    %782 = vmatprep.subr.bf16.mxu0 0
    %783 = vmatpush1.bf16.msra.mxu0 0
    %784 = vmatprep.subr.bf16.mxu0 0
    %785 = vmatpush1.bf16.msra.mxu0 0
    %786 = vmatprep.subr.bf16.mxu0 0
    %787 = vmatpush1.bf16.msra.mxu0 0
    %788 = vmatprep.subr.bf16.mxu0 0
    %789 = vmatpush1.bf16.msra.mxu0 0
    %790 = vmatprep.subr.bf16.mxu0 0
    %791 = vmatpush1.bf16.msra.mxu0 0
    %792 = vmatprep.subr.bf16.mxu0 0
    %793 = vmatpush1.bf16.msra.mxu0 0
    %794 = vmatprep.subr.bf16.mxu0 0
    %795 = vmatpush1.bf16.msra.mxu0 0
    %796 = vmatprep.subr.bf16.mxu0 0
    %797 = vmatpush1.bf16.msra.mxu0 0
    %798 = vmatprep.mubr.bf16.mxu0 0
    %799 = vmatmul.mubr.bf16.gmra.mrb[0].mxu0 %v764
    %v800 = vpop.f32.mrb[0].mxu0
    %v801 = vadd.f32 0.0, %v800
    %v802 = vpop.f32.mrb[0].mxu0
    %v803 = vadd.f32 0.0, %v802
    %v804 = vpop.f32.mrb[0].mxu0
    %v805 = vpop.f32.mrb[0].mxu0
    %806 = vdwg.mxu0
    %v807 = vadd.f32 %v205, %v801
    %v809 = vrot.slane %v803, 2
    %v811 = vadd.f32 %v203, %v809
    %v812 = vxor.u32 %v807, 2147483648
    %v813 = vmul.f32 %v812, 1.442695
    %v814 = vpow.pop %v813
    %v815 = vadd.f32 %v814, 1.0
    %v816 = vrcp.pop %v815
    %v817 = vmul.f32 1.0, %v816
    %v818 = vtanh.pop %v807
    %v820 = vrot.slane %v716, 6
    %v822 = vmul.f32 %v817, %v820
    %824 = vrot.lane.b32.xlu0 %v818, 32
    %v825 = vpop.permute.xlu0 %824
    %v827 = vmul.f32 %v817, %v825
    %829 = vrot.lane.b32.xlu0 %v827, 32
    %v830 = vpop.permute.xlu0 %829
    %v832 = vadd.f32 %v822, %v830
    %v833 = vtanh.pop %v832
    %835 = vrot.lane.b32.xlu0 %v833, 32
    %v836 = vpop.permute.xlu0 %835
    %v838 = vmul.f32 %v817, %v836
    %v839 = vxor.u32 %v811, 2147483648
    %v840 = vmul.f32 %v839, 1.442695
    %v841 = vpow.pop %v840
    %v842 = vadd.f32 %v841, 1.0
    %v843 = vrcp.pop %v842
    %v844 = vmul.f32 1.0, %v843
    %v845 = vtanh.pop %v811
    %v847 = vrot.slane %v743, 2
    %v849 = vmul.f32 %v844, %v847
    %851 = vrot.lane.b32.xlu0 %v845, 32
    %v852 = vpop.permute.xlu0 %851
    %v854 = vmul.f32 %v844, %v852
    %856 = vrot.lane.b32.xlu0 %v854, 32
    %v857 = vpop.permute.xlu0 %856
    %v859 = vadd.f32 %v849, %v857
    %v860 = vtanh.pop %v859
    %862 = vrot.lane.b32.xlu0 %v860, 32
    %v863 = vpop.permute.xlu0 %862
    %v865 = vmul.f32 %v844, %v863
    %867 = vrot.lane.b32.xlu0 %v838, 64
    %v868 = vpop.permute.xlu0 %867
    %v871 = vrot.slane %v865, 6
    %872 = vrot.lane.b32.xlu0 %v871, 96
    %v873 = vpop.permute.xlu0 %872
    %v875 = vsel %vm406, %v868, %v873
    %v876 = vpack.c.bf16 %v875, %v875
    %v878 = vsel %vm299, %v876, 0
    %880 = vmatprep.subr.bf16.mxu0 %v284
    %881 = vmatpush1.bf16.msra.mxu0 %v283
    %882 = vmatprep.subr.bf16.mxu0 %v286
    %883 = vmatpush1.bf16.msra.mxu0 %v285
    %884 = vmatprep.subr.bf16.mxu0 %v288
    %885 = vmatpush1.bf16.msra.mxu0 %v287
    %886 = vmatprep.subr.bf16.mxu0 %v290
    %887 = vmatpush1.bf16.msra.mxu0 %v289
    %888 = vmatprep.subr.bf16.mxu0 0
    %889 = vmatpush1.bf16.msra.mxu0 0
    %890 = vmatprep.subr.bf16.mxu0 0
    %891 = vmatpush1.bf16.msra.mxu0 0
    %892 = vmatprep.subr.bf16.mxu0 0
    %893 = vmatpush1.bf16.msra.mxu0 0
    %894 = vmatprep.subr.bf16.mxu0 0
    %895 = vmatpush1.bf16.msra.mxu0 0
    %896 = vmatprep.subr.bf16.mxu0 0
    %897 = vmatpush1.bf16.msra.mxu0 0
    %898 = vmatprep.subr.bf16.mxu0 0
    %899 = vmatpush1.bf16.msra.mxu0 0
    %900 = vmatprep.subr.bf16.mxu0 0
    %901 = vmatpush1.bf16.msra.mxu0 0
    %902 = vmatprep.subr.bf16.mxu0 0
    %903 = vmatpush1.bf16.msra.mxu0 0
    %904 = vmatprep.subr.bf16.mxu0 0
    %905 = vmatpush1.bf16.msra.mxu0 0
    %906 = vmatprep.subr.bf16.mxu0 0
    %907 = vmatpush1.bf16.msra.mxu0 0
    %908 = vmatprep.subr.bf16.mxu0 0
    %909 = vmatpush1.bf16.msra.mxu0 0
    %910 = vmatprep.subr.bf16.mxu0 0
    %911 = vmatpush1.bf16.msra.mxu0 0
    %912 = vmatprep.mubr.bf16.mxu0 0
    %913 = vmatmul.mubr.bf16.gmra.mrb[0].mxu0 %v878
    %v914 = vpop.f32.mrb[0].mxu0
    %v915 = vadd.f32 0.0, %v914
    %v916 = vpop.f32.mrb[0].mxu0
    %v917 = vadd.f32 0.0, %v916
    %v918 = vpop.f32.mrb[0].mxu0
    %v919 = vpop.f32.mrb[0].mxu0
    %920 = vdwg.mxu0
    %v922 = vrot.slane %v915, 6
    %v924 = vadd.f32 %v205, %v922
    %v926 = vrot.slane %v917, 4
    %v928 = vadd.f32 %v203, %v926
    %v929 = vxor.u32 %v924, 2147483648
    %v930 = vmul.f32 %v929, 1.442695
    %v931 = vpow.pop %v930
    %v932 = vadd.f32 %v931, 1.0
    %v933 = vrcp.pop %v932
    %v934 = vmul.f32 1.0, %v933
    %v935 = vtanh.pop %v924
    %v937 = vrot.slane %v832, 6
    %v939 = vmul.f32 %v934, %v937
    %941 = vrot.lane.b32.xlu0 %v935, 32
    %v942 = vpop.permute.xlu0 %941
    %v944 = vmul.f32 %v934, %v942
    %946 = vrot.lane.b32.xlu0 %v944, 32
    %v947 = vpop.permute.xlu0 %946
    %v949 = vadd.f32 %v939, %v947
    %v950 = vtanh.pop %v949
    %952 = vrot.lane.b32.xlu0 %v950, 32
    %v953 = vpop.permute.xlu0 %952
    %v955 = vmul.f32 %v934, %v953
    %v956 = vxor.u32 %v928, 2147483648
    %v957 = vmul.f32 %v956, 1.442695
    %v958 = vpow.pop %v957
    %v959 = vadd.f32 %v958, 1.0
    %v960 = vrcp.pop %v959
    %v961 = vmul.f32 1.0, %v960
    %v962 = vtanh.pop %v928
    %v964 = vrot.slane %v859, 2
    %v966 = vmul.f32 %v961, %v964
    %968 = vrot.lane.b32.xlu0 %v962, 32
    %v969 = vpop.permute.xlu0 %968
    %v971 = vmul.f32 %v961, %v969
    %973 = vrot.lane.b32.xlu0 %v971, 32
    %v974 = vpop.permute.xlu0 %973
    %v976 = vadd.f32 %v966, %v974
    %v977 = vtanh.pop %v976
    %979 = vrot.lane.b32.xlu0 %v977, 32
    %v980 = vpop.permute.xlu0 %979
    %v982 = vmul.f32 %v961, %v980
    %984 = vrot.lane.b32.xlu0 %v955, 64
    %v985 = vpop.permute.xlu0 %984
    %v988 = vrot.slane %v982, 2
    %989 = vrot.lane.b32.xlu0 %v988, 96
    %v990 = vpop.permute.xlu0 %989
    %v992 = vsel %vm406, %v985, %v990
    %v993 = vpack.c.bf16 %v992, %v992
    %v995 = vrot.slane %v993, 1
    %v997 = vsel %vm299, %v995, 0
    %999 = vmatprep.subr.bf16.mxu0 %v284
    %1000 = vmatpush1.bf16.msra.mxu0 %v283
    %1001 = vmatprep.subr.bf16.mxu0 %v286
    %1002 = vmatpush1.bf16.msra.mxu0 %v285
    %1003 = vmatprep.subr.bf16.mxu0 %v288
    %1004 = vmatpush1.bf16.msra.mxu0 %v287
    %1005 = vmatprep.subr.bf16.mxu0 %v290
    %1006 = vmatpush1.bf16.msra.mxu0 %v289
    %1007 = vmatprep.subr.bf16.mxu0 0
    %1008 = vmatpush1.bf16.msra.mxu0 0
    %1009 = vmatprep.subr.bf16.mxu0 0
    %1010 = vmatpush1.bf16.msra.mxu0 0
    %1011 = vmatprep.subr.bf16.mxu0 0
    %1012 = vmatpush1.bf16.msra.mxu0 0
    %1013 = vmatprep.subr.bf16.mxu0 0
    %1014 = vmatpush1.bf16.msra.mxu0 0
    %1015 = vmatprep.subr.bf16.mxu0 0
    %1016 = vmatpush1.bf16.msra.mxu0 0
    %1017 = vmatprep.subr.bf16.mxu0 0
    %1018 = vmatpush1.bf16.msra.mxu0 0
    %1019 = vmatprep.subr.bf16.mxu0 0
    %1020 = vmatpush1.bf16.msra.mxu0 0
    %1021 = vmatprep.subr.bf16.mxu0 0
    %1022 = vmatpush1.bf16.msra.mxu0 0
    %1023 = vmatprep.subr.bf16.mxu0 0
    %1024 = vmatpush1.bf16.msra.mxu0 0
    %1025 = vmatprep.subr.bf16.mxu0 0
    %1026 = vmatpush1.bf16.msra.mxu0 0
    %1027 = vmatprep.subr.bf16.mxu0 0
    %1028 = vmatpush1.bf16.msra.mxu0 0
    %1029 = vmatprep.subr.bf16.mxu0 0
    %1030 = vmatpush1.bf16.msra.mxu0 0
    %1031 = vmatprep.mubr.bf16.mxu0 0
    %1032 = vmatmul.mubr.bf16.gmra.mrb[0].mxu0 %v997
    %v1033 = vpop.f32.mrb[0].mxu0
    %v1034 = vadd.f32 0.0, %v1033
    %v1035 = vpop.f32.mrb[0].mxu0
    %v1036 = vadd.f32 0.0, %v1035
    %v1037 = vpop.f32.mrb[0].mxu0
    %v1038 = vpop.f32.mrb[0].mxu0
    %1039 = vdwg.mxu0
    %v1041 = vrot.slane %v1034, 4
    %v1043 = vadd.f32 %v205, %v1041
    %v1045 = vrot.slane %v1036, 6
    %v1047 = vadd.f32 %v203, %v1045
    %v1048 = vxor.u32 %v1043, 2147483648
    %v1049 = vmul.f32 %v1048, 1.442695
    %v1050 = vpow.pop %v1049
    %v1051 = vadd.f32 %v1050, 1.0
    %v1052 = vrcp.pop %v1051
    %v1053 = vmul.f32 1.0, %v1052
    %v1054 = vtanh.pop %v1043
    %v1056 = vrot.slane %v949, 6
    %v1058 = vmul.f32 %v1053, %v1056
    %1060 = vrot.lane.b32.xlu0 %v1054, 32
    %v1061 = vpop.permute.xlu0 %1060
    %v1063 = vmul.f32 %v1053, %v1061
    %1065 = vrot.lane.b32.xlu0 %v1063, 32
    %v1066 = vpop.permute.xlu0 %1065
    %v1068 = vadd.f32 %v1058, %v1066
    %v1069 = vtanh.pop %v1068
    %1071 = vrot.lane.b32.xlu0 %v1069, 32
    %v1072 = vpop.permute.xlu0 %1071
    %v1074 = vmul.f32 %v1053, %v1072
    %v1075 = vxor.u32 %v1047, 2147483648
    %v1076 = vmul.f32 %v1075, 1.442695
    %v1077 = vpow.pop %v1076
    %v1078 = vadd.f32 %v1077, 1.0
    %v1079 = vrcp.pop %v1078
    %v1080 = vmul.f32 1.0, %v1079
    %v1081 = vtanh.pop %v1047
    %v1083 = vrot.slane %v976, 2
    %v1085 = vmul.f32 %v1080, %v1083
    %1087 = vrot.lane.b32.xlu0 %v1081, 32
    %v1088 = vpop.permute.xlu0 %1087
    %v1090 = vmul.f32 %v1080, %v1088
    %1092 = vrot.lane.b32.xlu0 %v1090, 32
    %v1093 = vpop.permute.xlu0 %1092
    %v1095 = vadd.f32 %v1085, %v1093
    %v1096 = vtanh.pop %v1095
    %1098 = vrot.lane.b32.xlu0 %v1096, 32
    %v1099 = vpop.permute.xlu0 %1098
    %v1101 = vmul.f32 %v1080, %v1099
    %1103 = vrot.lane.b32.xlu0 %v1074, 64
    %v1104 = vpop.permute.xlu0 %1103
    %v1107 = vrot.slane %v1101, 6
    %1108 = vrot.lane.b32.xlu0 %v1107, 96
    %v1109 = vpop.permute.xlu0 %1108
    %v1111 = vsel %vm406, %v1104, %v1109
    %v1112 = vpack.c.bf16 %v1111, %v1111
    %v1114 = vrot.slane %v1112, 2
    %v1116 = vsel %vm299, %v1114, 0
    %1118 = vmatprep.subr.bf16.mxu0 %v284
    %1119 = vmatpush1.bf16.msra.mxu0 %v283
    %1120 = vmatprep.subr.bf16.mxu0 %v286
    %1121 = vmatpush1.bf16.msra.mxu0 %v285
    %1122 = vmatprep.subr.bf16.mxu0 %v288
    %1123 = vmatpush1.bf16.msra.mxu0 %v287
    %1124 = vmatprep.subr.bf16.mxu0 %v290
    %1125 = vmatpush1.bf16.msra.mxu0 %v289
    %1126 = vmatprep.subr.bf16.mxu0 0
    %1127 = vmatpush1.bf16.msra.mxu0 0
    %1128 = vmatprep.subr.bf16.mxu0 0
    %1129 = vmatpush1.bf16.msra.mxu0 0
    %1130 = vmatprep.subr.bf16.mxu0 0
    %1131 = vmatpush1.bf16.msra.mxu0 0
    %1132 = vmatprep.subr.bf16.mxu0 0
    %1133 = vmatpush1.bf16.msra.mxu0 0
    %1134 = vmatprep.subr.bf16.mxu0 0
    %1135 = vmatpush1.bf16.msra.mxu0 0
    %1136 = vmatprep.subr.bf16.mxu0 0
    %1137 = vmatpush1.bf16.msra.mxu0 0
    %1138 = vmatprep.subr.bf16.mxu0 0
    %1139 = vmatpush1.bf16.msra.mxu0 0
    %1140 = vmatprep.subr.bf16.mxu0 0
    %1141 = vmatpush1.bf16.msra.mxu0 0
    %1142 = vmatprep.subr.bf16.mxu0 0
    %1143 = vmatpush1.bf16.msra.mxu0 0
    %1144 = vmatprep.subr.bf16.mxu0 0
    %1145 = vmatpush1.bf16.msra.mxu0 0
    %1146 = vmatprep.subr.bf16.mxu0 0
    %1147 = vmatpush1.bf16.msra.mxu0 0
    %1148 = vmatprep.subr.bf16.mxu0 0
    %1149 = vmatpush1.bf16.msra.mxu0 0
    %1150 = vmatprep.mubr.bf16.mxu0 0
    %1151 = vmatmul.mubr.bf16.gmra.mrb[0].mxu0 %v1116
    %v1152 = vpop.f32.mrb[0].mxu0
    %v1153 = vadd.f32 0.0, %v1152
    %v1154 = vpop.f32.mrb[0].mxu0
    %v1155 = vadd.f32 0.0, %v1154
    %v1156 = vpop.f32.mrb[0].mxu0
    %v1157 = vpop.f32.mrb[0].mxu0
    %1158 = vdwg.mxu0
    %v1160 = vrot.slane %v1153, 2
    %v1162 = vadd.f32 %v205, %v1160
    %v1163 = vadd.f32 %v203, %v1155
    %v1164 = vxor.u32 %v1162, 2147483648
    %v1165 = vmul.f32 %v1164, 1.442695
    %v1166 = vpow.pop %v1165
    %v1167 = vadd.f32 %v1166, 1.0
    %v1168 = vrcp.pop %v1167
    %v1169 = vmul.f32 1.0, %v1168
    %v1170 = vtanh.pop %v1162
    %v1172 = vrot.slane %v1068, 6
    %v1174 = vmul.f32 %v1169, %v1172
    %1176 = vrot.lane.b32.xlu0 %v1170, 32
    %v1177 = vpop.permute.xlu0 %1176
    %v1179 = vmul.f32 %v1169, %v1177
    %1181 = vrot.lane.b32.xlu0 %v1179, 32
    %v1182 = vpop.permute.xlu0 %1181
    %v1184 = vadd.f32 %v1174, %v1182
    %v1185 = vtanh.pop %v1184
    %1187 = vrot.lane.b32.xlu0 %v1185, 32
    %v1188 = vpop.permute.xlu0 %1187
    %v1190 = vmul.f32 %v1169, %v1188
    %v1191 = vxor.u32 %v1163, 2147483648
    %v1192 = vmul.f32 %v1191, 1.442695
    %v1193 = vpow.pop %v1192
    %v1194 = vadd.f32 %v1193, 1.0
    %v1195 = vrcp.pop %v1194
    %v1196 = vmul.f32 1.0, %v1195
    %v1197 = vtanh.pop %v1163
    %v1199 = vrot.slane %v1095, 2
    %v1201 = vmul.f32 %v1196, %v1199
    %1203 = vrot.lane.b32.xlu0 %v1197, 32
    %v1204 = vpop.permute.xlu0 %1203
    %v1206 = vmul.f32 %v1196, %v1204
    %1208 = vrot.lane.b32.xlu0 %v1206, 32
    %v1209 = vpop.permute.xlu0 %1208
    %v1211 = vadd.f32 %v1201, %v1209
    %v1212 = vtanh.pop %v1211
    %1214 = vrot.lane.b32.xlu0 %v1212, 32
    %v1215 = vpop.permute.xlu0 %1214
    %v1217 = vmul.f32 %v1196, %v1215
    %s1218 = sld [smem:[#allocation2]]
    %s1219 = sld [smem:[#allocation2 + $0x1]]
    %s1220 = sld [smem:[#allocation2 + $0x2]]
    %vm1221 = vcmask 1041408
    %v1222 = vsel %vm1221, %v372, %v487
    %vm1223 = vcmask 1043456
    %v1224 = vsel %vm1223, %v1222, %v606
    %vm1225 = vcmask 1045504
    %v1226 = vsel %vm1225, %v1224, %v722
    %v1227 = vsel %vm1221, %v838, %v955
    %v1228 = vsel %vm1223, %v1227, %v1074
    %v1229 = vsel %vm1225, %v1228, %v1190
    %v1230 = vsel %vm1221, %v1217, %v1101
    %v1231 = vsel %vm1223, %v1230, %v982
    %v1232 = vsel %vm1225, %v1231, %v865
    %v1233 = vsel %vm1221, %v749, %v633
    %v1234 = vsel %vm1223, %v1233, %v514
    %v1235 = vsel %vm1225, %v1234, %v396
    %v1236 = vstv %s1218
    %v1237 = vmul.f32 %v1236, %v244
    %v1238 = vmul.f32 %v1236, %v247
    %v1239 = vstv %s1219
    %v1240 = vmul.f32 %v1239, %v1226
    %v1241 = vmul.f32 %v1239, %v1229
    %1244 = vrot.lane.b32.xlu0 %v1240, 64
    %v1245 = vpop.permute.xlu0 %1244
    %1246 = vrot.lane.b32.xlu0 %v1241, 64
    %v1247 = vpop.permute.xlu0 %1246
    %v1250 = vadd.f32 %v1237, %v1245
    %v1251 = vadd.f32 %v1238, %v1247
    %v1252 = vstv %s1220
    %v1253 = vmul.f32 %v1252, %v1232
    %v1254 = vmul.f32 %v1252, %v1235
    %1257 = vrot.lane.b32.xlu0 %v1253, 64
    %v1258 = vpop.permute.xlu0 %1257
    %1259 = vrot.lane.b32.xlu0 %v1254, 64
    %v1260 = vpop.permute.xlu0 %1259
    %v1263 = vadd.f32 %v1250, %v1258
    %v1264 = vadd.f32 %v1251, %v1260
    %v1265 = vpack.c.bf16 %v1264, %v1263
    %v1266 = vld [vmem:[#allocation7] sm:$0xff]
    %v1267 = vld [vmem:[#allocation7 + $0x8] sm:$0xff]
    %v1268 = vld [vmem:[#allocation7 + $0x10] sm:$0xff]
    %v1269 = vld [vmem:[#allocation7 + $0x18] sm:$0xff]
    %v1270 = vld [vmem:[#allocation7 + $0x20] sm:$0xff]
    %v1271 = vld [vmem:[#allocation7 + $0x28] sm:$0xff]
    %v1272 = vld [vmem:[#allocation7 + $0x30] sm:$0xff]
    %v1273 = vld [vmem:[#allocation7 + $0x38] sm:$0xff]
    %v1274 = vld [vmem:[%s7] sm:$0xf]
    %v1276 = vlaneseq
    %v1277 = vshrl.u32 %v1276, 7
    %v1278 = vsub.s32 0, %v1277
    %v1279 = vrot.slane %v1274, %v1278
    %v1280 = vlaneseq
    %v1281 = vshrl.u32 %v1280, 7
    %v1282 = vsub.s32 1, %v1281
    %v1283 = vrot.slane %v1274, %v1282
    %v1284 = vlaneseq
    %v1285 = vshrl.u32 %v1284, 7
    %v1286 = vsub.s32 2, %v1285
    %v1287 = vrot.slane %v1274, %v1286
    %v1288 = vlaneseq
    %v1289 = vshrl.u32 %v1288, 7
    %v1290 = vsub.s32 3, %v1289
    %v1291 = vrot.slane %v1274, %v1290
    %v1304 = vunpack.c.l.b16 %v1266
    %v1305 = vunpack.c.h.b16 %v1266
    %v1306 = vunpack.c.l.b16 %v1267
    %v1307 = vunpack.c.h.b16 %v1267
    %v1308 = vunpack.c.l.b16 %v1268
    %v1309 = vunpack.c.h.b16 %v1268
    %v1310 = vunpack.c.l.b16 %v1269
    %v1311 = vunpack.c.h.b16 %v1269
    %v1312 = vunpack.c.l.b16 %v1270
    %v1313 = vunpack.c.h.b16 %v1270
    %v1314 = vunpack.c.l.b16 %v1271
    %v1315 = vunpack.c.h.b16 %v1271
    %v1316 = vunpack.c.l.b16 %v1272
    %v1317 = vunpack.c.h.b16 %v1272
    %v1318 = vunpack.c.l.b16 %v1273
    %v1319 = vunpack.c.h.b16 %v1273
    %v1320 = vpack.c.b16 %v1308, %v1304
    %v1321 = vpack.c.b16 %v1309, %v1305
    %v1322 = vpack.c.b16 %v1310, %v1306
    %v1323 = vpack.c.b16 %v1311, %v1307
    %v1324 = vpack.c.b16 %v1316, %v1312
    %v1325 = vpack.c.b16 %v1317, %v1313
    %v1326 = vpack.c.b16 %v1318, %v1314
    %v1327 = vpack.c.b16 %v1319, %v1315
    %v1337 = vsel %vm406, %v1265, 0
    %1339 = vmatprep.subr.bf16.mxu0 %v1321
    %1340 = vmatpush1.bf16.msra.mxu0 %v1320
    %1341 = vmatprep.subr.bf16.mxu0 %v1325
    %1342 = vmatpush1.bf16.msra.mxu0 %v1324
    %1343 = vmatprep.subr.bf16.mxu0 0
    %1344 = vmatpush1.bf16.msra.mxu0 0
    %1345 = vmatprep.subr.bf16.mxu0 0
    %1346 = vmatpush1.bf16.msra.mxu0 0
    %1347 = vmatprep.subr.bf16.mxu0 0
    %1348 = vmatpush1.bf16.msra.mxu0 0
    %1349 = vmatprep.subr.bf16.mxu0 0
    %1350 = vmatpush1.bf16.msra.mxu0 0
    %1351 = vmatprep.subr.bf16.mxu0 0
    %1352 = vmatpush1.bf16.msra.mxu0 0
    %1353 = vmatprep.subr.bf16.mxu0 0
    %1354 = vmatpush1.bf16.msra.mxu0 0
    %1355 = vmatprep.subr.bf16.mxu0 0
    %1356 = vmatpush1.bf16.msra.mxu0 0
    %1357 = vmatprep.subr.bf16.mxu0 0
    %1358 = vmatpush1.bf16.msra.mxu0 0
    %1359 = vmatprep.subr.bf16.mxu0 0
    %1360 = vmatpush1.bf16.msra.mxu0 0
    %1361 = vmatprep.subr.bf16.mxu0 0
    %1362 = vmatpush1.bf16.msra.mxu0 0
    %1363 = vmatprep.subr.bf16.mxu0 0
    %1364 = vmatpush1.bf16.msra.mxu0 0
    %1365 = vmatprep.subr.bf16.mxu0 0
    %1366 = vmatpush1.bf16.msra.mxu0 0
    %1367 = vmatprep.subr.bf16.mxu0 0
    %1368 = vmatpush1.bf16.msra.mxu0 0
    %1369 = vmatprep.subr.bf16.mxu0 0
    %1370 = vmatpush1.bf16.msra.mxu0 0
    %1371 = vmatprep.mubr.bf16.mxu0 0
    %1372 = vmatmul.mubr.bf16.gmra.mrb[0].mxu0 %v1337
    %v1373 = vpop.f32.mrb[0].mxu0
    %v1374 = vadd.f32 %v1279, %v1373
    %v1375 = vpop.f32.mrb[0].mxu0
    %v1376 = vadd.f32 %v1283, %v1375
    %v1377 = vpop.f32.mrb[0].mxu0
    %v1378 = vadd.f32 %v1279, %v1377
    %v1379 = vpop.f32.mrb[0].mxu0
    %v1380 = vadd.f32 %v1283, %v1379
    %1381 = vdwg.mxu0
    %1382 = vmatprep.subr.bf16.mxu0 %v1323
    %1383 = vmatpush1.bf16.msra.mxu0 %v1322
    %1384 = vmatprep.subr.bf16.mxu0 %v1327
    %1385 = vmatpush1.bf16.msra.mxu0 %v1326
    %1386 = vmatprep.subr.bf16.mxu0 0
    %1387 = vmatpush1.bf16.msra.mxu0 0
    %1388 = vmatprep.subr.bf16.mxu0 0
    %1389 = vmatpush1.bf16.msra.mxu0 0
    %1390 = vmatprep.subr.bf16.mxu0 0
    %1391 = vmatpush1.bf16.msra.mxu0 0
    %1392 = vmatprep.subr.bf16.mxu0 0
    %1393 = vmatpush1.bf16.msra.mxu0 0
    %1394 = vmatprep.subr.bf16.mxu0 0
    %1395 = vmatpush1.bf16.msra.mxu0 0
    %1396 = vmatprep.subr.bf16.mxu0 0
    %1397 = vmatpush1.bf16.msra.mxu0 0
    %1398 = vmatprep.subr.bf16.mxu0 0
    %1399 = vmatpush1.bf16.msra.mxu0 0
    %1400 = vmatprep.subr.bf16.mxu0 0
    %1401 = vmatpush1.bf16.msra.mxu0 0
    %1402 = vmatprep.subr.bf16.mxu0 0
    %1403 = vmatpush1.bf16.msra.mxu0 0
    %1404 = vmatprep.subr.bf16.mxu0 0
    %1405 = vmatpush1.bf16.msra.mxu0 0
    %1406 = vmatprep.subr.bf16.mxu0 0
    %1407 = vmatpush1.bf16.msra.mxu0 0
    %1408 = vmatprep.subr.bf16.mxu0 0
    %1409 = vmatpush1.bf16.msra.mxu0 0
    %1410 = vmatprep.subr.bf16.mxu0 0
    %1411 = vmatpush1.bf16.msra.mxu0 0
    %1412 = vmatprep.subr.bf16.mxu0 0
    %1413 = vmatpush1.bf16.msra.mxu0 0
    %1414 = vmatprep.mubr.bf16.mxu0 0
    %1415 = vmatmul.mubr.bf16.gmra.mrb[0].mxu0 %v1337
    %v1416 = vpop.f32.mrb[0].mxu0
    %v1417 = vadd.f32 %v1287, %v1416
    %v1418 = vpop.f32.mrb[0].mxu0
    %v1419 = vadd.f32 %v1291, %v1418
    %v1420 = vpop.f32.mrb[0].mxu0
    %v1421 = vadd.f32 %v1287, %v1420
    %v1422 = vpop.f32.mrb[0].mxu0
    %v1423 = vadd.f32 %v1291, %v1422
    %1424 = vdwg.mxu0
    %v1425 = vld [vmem:[%s6] sm:$0xff]
    %v1426 = vld [vmem:[%s6 + $0x8] sm:$0xff]
    %v1427 = vld [vmem:[%s6 + $0x10] sm:$0xff]
    %v1428 = vld [vmem:[%s6 + $0x18] sm:$0xff]
    %v1429 = vld [vmem:[%s6 + $0x20] sm:$0xff]
    %v1430 = vld [vmem:[%s6 + $0x28] sm:$0xff]
    %v1431 = vld [vmem:[%s6 + $0x30] sm:$0xff]
    %v1432 = vld [vmem:[%s6 + $0x38] sm:$0xff]
    %v1433 = vld [vmem:[%s6 + $0x40] sm:$0xff]
    %v1434 = vld [vmem:[%s6 + $0x48] sm:$0xff]
    %v1435 = vld [vmem:[%s6 + $0x50] sm:$0xff]
    %v1436 = vld [vmem:[%s6 + $0x58] sm:$0xff]
    %v1437 = vld [vmem:[%s6 + $0x60] sm:$0xff]
    %v1438 = vld [vmem:[%s6 + $0x68] sm:$0xff]
    %v1439 = vld [vmem:[%s6 + $0x70] sm:$0xff]
    %v1440 = vld [vmem:[%s6 + $0x78] sm:$0xff]
    %v1441 = vld [vmem:[%s6 + $0x80] sm:$0xff]
    %v1442 = vld [vmem:[%s6 + $0x88] sm:$0xff]
    %v1443 = vld [vmem:[%s6 + $0x90] sm:$0xff]
    %v1444 = vld [vmem:[%s6 + $0x98] sm:$0xff]
    %v1445 = vld [vmem:[%s6 + $0xa0] sm:$0xff]
    %v1446 = vld [vmem:[%s6 + $0xa8] sm:$0xff]
    %v1447 = vld [vmem:[%s6 + $0xb0] sm:$0xff]
    %v1448 = vld [vmem:[%s6 + $0xb8] sm:$0xff]
    %v1449 = vld [vmem:[%s6 + $0xc0] sm:$0xff]
    %v1450 = vld [vmem:[%s6 + $0xc8] sm:$0xff]
    %v1451 = vld [vmem:[%s6 + $0xd0] sm:$0xff]
    %v1452 = vld [vmem:[%s6 + $0xd8] sm:$0xff]
    %v1453 = vld [vmem:[%s6 + $0xe0] sm:$0xff]
    %v1454 = vld [vmem:[%s6 + $0xe8] sm:$0xff]
    %v1455 = vld [vmem:[%s6 + $0xf0] sm:$0xff]
    %v1456 = vld [vmem:[%s6 + $0xf8] sm:$0xff]
    %v1489 = vunpack.c.l.b16 %v1425
    %v1490 = vunpack.c.h.b16 %v1425
    %v1491 = vunpack.c.l.b16 %v1426
    %v1492 = vunpack.c.h.b16 %v1426
    %v1493 = vunpack.c.l.b16 %v1427
    %v1494 = vunpack.c.h.b16 %v1427
    %v1495 = vunpack.c.l.b16 %v1428
    %v1496 = vunpack.c.h.b16 %v1428
    %v1497 = vunpack.c.l.b16 %v1429
    %v1498 = vunpack.c.h.b16 %v1429
    %v1499 = vunpack.c.l.b16 %v1430
    %v1500 = vunpack.c.h.b16 %v1430
    %v1501 = vunpack.c.l.b16 %v1431
    %v1502 = vunpack.c.h.b16 %v1431
    %v1503 = vunpack.c.l.b16 %v1432
    %v1504 = vunpack.c.h.b16 %v1432
    %v1505 = vunpack.c.l.b16 %v1433
    %v1506 = vunpack.c.h.b16 %v1433
    %v1507 = vunpack.c.l.b16 %v1434
    %v1508 = vunpack.c.h.b16 %v1434
    %v1509 = vunpack.c.l.b16 %v1435
    %v1510 = vunpack.c.h.b16 %v1435
    %v1511 = vunpack.c.l.b16 %v1436
    %v1512 = vunpack.c.h.b16 %v1436
    %v1513 = vunpack.c.l.b16 %v1437
    %v1514 = vunpack.c.h.b16 %v1437
    %v1515 = vunpack.c.l.b16 %v1438
    %v1516 = vunpack.c.h.b16 %v1438
    %v1517 = vunpack.c.l.b16 %v1439
    %v1518 = vunpack.c.h.b16 %v1439
    %v1519 = vunpack.c.l.b16 %v1440
    %v1520 = vunpack.c.h.b16 %v1440
    %v1521 = vunpack.c.l.b16 %v1441
    %v1522 = vunpack.c.h.b16 %v1441
    %v1523 = vunpack.c.l.b16 %v1442
    %v1524 = vunpack.c.h.b16 %v1442
    %v1525 = vunpack.c.l.b16 %v1443
    %v1526 = vunpack.c.h.b16 %v1443
    %v1527 = vunpack.c.l.b16 %v1444
    %v1528 = vunpack.c.h.b16 %v1444
    %v1529 = vunpack.c.l.b16 %v1445
    %v1530 = vunpack.c.h.b16 %v1445
    %v1531 = vunpack.c.l.b16 %v1446
    %v1532 = vunpack.c.h.b16 %v1446
    %v1533 = vunpack.c.l.b16 %v1447
    %v1534 = vunpack.c.h.b16 %v1447
    %v1535 = vunpack.c.l.b16 %v1448
    %v1536 = vunpack.c.h.b16 %v1448
    %v1537 = vunpack.c.l.b16 %v1449
    %v1538 = vunpack.c.h.b16 %v1449
    %v1539 = vunpack.c.l.b16 %v1450
    %v1540 = vunpack.c.h.b16 %v1450
    %v1541 = vunpack.c.l.b16 %v1451
    %v1542 = vunpack.c.h.b16 %v1451
    %v1543 = vunpack.c.l.b16 %v1452
    %v1544 = vunpack.c.h.b16 %v1452
    %v1545 = vunpack.c.l.b16 %v1453
    %v1546 = vunpack.c.h.b16 %v1453
    %v1547 = vunpack.c.l.b16 %v1454
    %v1548 = vunpack.c.h.b16 %v1454
    %v1549 = vunpack.c.l.b16 %v1455
    %v1550 = vunpack.c.h.b16 %v1455
    %v1551 = vunpack.c.l.b16 %v1456
    %v1552 = vunpack.c.h.b16 %v1456
    %v1553 = vpack.c.b16 %v1493, %v1489
    %v1554 = vpack.c.b16 %v1494, %v1490
    %v1555 = vpack.c.b16 %v1495, %v1491
    %v1556 = vpack.c.b16 %v1496, %v1492
    %v1557 = vpack.c.b16 %v1501, %v1497
    %v1558 = vpack.c.b16 %v1502, %v1498
    %v1559 = vpack.c.b16 %v1503, %v1499
    %v1560 = vpack.c.b16 %v1504, %v1500
    %v1561 = vpack.c.b16 %v1509, %v1505
    %v1562 = vpack.c.b16 %v1510, %v1506
    %v1563 = vpack.c.b16 %v1511, %v1507
    %v1564 = vpack.c.b16 %v1512, %v1508
    %v1565 = vpack.c.b16 %v1517, %v1513
    %v1566 = vpack.c.b16 %v1518, %v1514
    %v1567 = vpack.c.b16 %v1519, %v1515
    %v1568 = vpack.c.b16 %v1520, %v1516
    %v1569 = vpack.c.b16 %v1525, %v1521
    %v1570 = vpack.c.b16 %v1526, %v1522
    %v1571 = vpack.c.b16 %v1527, %v1523
    %v1572 = vpack.c.b16 %v1528, %v1524
    %v1573 = vpack.c.b16 %v1533, %v1529
    %v1574 = vpack.c.b16 %v1534, %v1530
    %v1575 = vpack.c.b16 %v1535, %v1531
    %v1576 = vpack.c.b16 %v1536, %v1532
    %v1577 = vpack.c.b16 %v1541, %v1537
    %v1578 = vpack.c.b16 %v1542, %v1538
    %v1579 = vpack.c.b16 %v1543, %v1539
    %v1580 = vpack.c.b16 %v1544, %v1540
    %v1581 = vpack.c.b16 %v1549, %v1545
    %v1582 = vpack.c.b16 %v1550, %v1546
    %v1583 = vpack.c.b16 %v1551, %v1547
    %v1584 = vpack.c.b16 %v1552, %v1548
    %1617 = vmatprep.subr.bf16.mxu0 %v1554
    %1618 = vmatpush1.bf16.msra.mxu0 %v1553
    %1619 = vmatprep.subr.bf16.mxu0 %v1558
    %1620 = vmatpush1.bf16.msra.mxu0 %v1557
    %1621 = vmatprep.subr.bf16.mxu0 %v1562
    %1622 = vmatpush1.bf16.msra.mxu0 %v1561
    %1623 = vmatprep.subr.bf16.mxu0 %v1566
    %1624 = vmatpush1.bf16.msra.mxu0 %v1565
    %1625 = vmatprep.subr.bf16.mxu0 %v1570
    %1626 = vmatpush1.bf16.msra.mxu0 %v1569
    %1627 = vmatprep.subr.bf16.mxu0 %v1574
    %1628 = vmatpush1.bf16.msra.mxu0 %v1573
    %1629 = vmatprep.subr.bf16.mxu0 %v1578
    %1630 = vmatpush1.bf16.msra.mxu0 %v1577
    %1631 = vmatprep.subr.bf16.mxu0 %v1582
    %1632 = vmatpush1.bf16.msra.mxu0 %v1581
    %1633 = vmatprep.subr.bf16.mxu0 0
    %1634 = vmatpush1.bf16.msra.mxu0 0
    %1635 = vmatprep.subr.bf16.mxu0 0
    %1636 = vmatpush1.bf16.msra.mxu0 0
    %1637 = vmatprep.subr.bf16.mxu0 0
    %1638 = vmatpush1.bf16.msra.mxu0 0
    %1639 = vmatprep.subr.bf16.mxu0 0
    %1640 = vmatpush1.bf16.msra.mxu0 0
    %1641 = vmatprep.subr.bf16.mxu0 0
    %1642 = vmatpush1.bf16.msra.mxu0 0
    %1643 = vmatprep.subr.bf16.mxu0 0
    %1644 = vmatpush1.bf16.msra.mxu0 0
    %1645 = vmatprep.subr.bf16.mxu0 0
    %1646 = vmatpush1.bf16.msra.mxu0 0
    %1647 = vmatprep.subr.bf16.mxu0 0
    %1648 = vmatpush1.bf16.msra.mxu0 0
    %1649 = vmatprep.mubr.bf16.mxu0 0
    %1650 = vmatmul.mubr.bf16.gmra.mrb[0].mxu0 0
    %v1651 = vpop.f32.mrb[0].mxu0
    %v1652 = vadd.f32 0.0, %v1651
    %v1653 = vpop.f32.mrb[0].mxu0
    %v1654 = vadd.f32 0.0, %v1653
    %v1655 = vpop.f32.mrb[0].mxu0
    %v1656 = vpop.f32.mrb[0].mxu0
    %1657 = vdwg.mxu0
    %1658 = vmatprep.subr.bf16.mxu0 %v1556
    %1659 = vmatpush1.bf16.msra.mxu0 %v1555
    %1660 = vmatprep.subr.bf16.mxu0 %v1560
    %1661 = vmatpush1.bf16.msra.mxu0 %v1559
    %1662 = vmatprep.subr.bf16.mxu0 %v1564
    %1663 = vmatpush1.bf16.msra.mxu0 %v1563
    %1664 = vmatprep.subr.bf16.mxu0 %v1568
    %1665 = vmatpush1.bf16.msra.mxu0 %v1567
    %1666 = vmatprep.subr.bf16.mxu0 %v1572
    %1667 = vmatpush1.bf16.msra.mxu0 %v1571
    %1668 = vmatprep.subr.bf16.mxu0 %v1576
    %1669 = vmatpush1.bf16.msra.mxu0 %v1575
    %1670 = vmatprep.subr.bf16.mxu0 %v1580
    %1671 = vmatpush1.bf16.msra.mxu0 %v1579
    %1672 = vmatprep.subr.bf16.mxu0 %v1584
    %1673 = vmatpush1.bf16.msra.mxu0 %v1583
    %1674 = vmatprep.subr.bf16.mxu0 0
    %1675 = vmatpush1.bf16.msra.mxu0 0
    %1676 = vmatprep.subr.bf16.mxu0 0
    %1677 = vmatpush1.bf16.msra.mxu0 0
    %1678 = vmatprep.subr.bf16.mxu0 0
    %1679 = vmatpush1.bf16.msra.mxu0 0
    %1680 = vmatprep.subr.bf16.mxu0 0
    %1681 = vmatpush1.bf16.msra.mxu0 0
    %1682 = vmatprep.subr.bf16.mxu0 0
    %1683 = vmatpush1.bf16.msra.mxu0 0
    %1684 = vmatprep.subr.bf16.mxu0 0
    %1685 = vmatpush1.bf16.msra.mxu0 0
    %1686 = vmatprep.subr.bf16.mxu0 0
    %1687 = vmatpush1.bf16.msra.mxu0 0
    %1688 = vmatprep.subr.bf16.mxu0 0
    %1689 = vmatpush1.bf16.msra.mxu0 0
    %1690 = vmatprep.mubr.bf16.mxu0 0
    %1691 = vmatmul.mubr.bf16.gmra.mrb[0].mxu0 0
    %v1692 = vpop.f32.mrb[0].mxu0
    %v1693 = vadd.f32 0.0, %v1692
    %v1694 = vpop.f32.mrb[0].mxu0
    %v1695 = vadd.f32 0.0, %v1694
    %v1696 = vpop.f32.mrb[0].mxu0
    %v1697 = vpop.f32.mrb[0].mxu0
    %1698 = vdwg.mxu0
    %v1699 = vadd.f32 %v1374, %v1652
    %v1700 = vadd.f32 %v1376, %v1654
    %v1701 = vadd.f32 %v1417, %v1693
    %v1702 = vadd.f32 %v1419, %v1695
    %v1703 = vxor.u32 %v1699, 2147483648
    %v1704 = vxor.u32 %v1700, 2147483648
    %v1705 = vxor.u32 %v1701, 2147483648
    %v1706 = vmul.f32 %v1703, 1.442695
    %v1707 = vpow.pop %v1706
    %v1708 = vmul.f32 %v1704, 1.442695
    %v1709 = vpow.pop %v1708
    %v1710 = vmul.f32 %v1705, 1.442695
    %v1711 = vpow.pop %v1710
    %v1712 = vadd.f32 %v1707, 1.0
    %v1713 = vadd.f32 %v1709, 1.0
    %v1714 = vadd.f32 %v1711, 1.0
    %v1715 = vrcp.pop %v1712
    %v1716 = vmul.f32 1.0, %v1715
    %v1717 = vrcp.pop %v1713
    %v1718 = vmul.f32 1.0, %v1717
    %v1719 = vrcp.pop %v1714
    %v1720 = vmul.f32 1.0, %v1719
    %v1721 = vtanh.pop %v1702
    %v1722 = vmul.f32 %v1718, 0.0
    %v1723 = vmul.f32 %v1716, %v1721
    %v1724 = vadd.f32 %v1722, %v1723
    %v1725 = vtanh.pop %v1724
    %v1726 = vmul.f32 %v1720, %v1725
    %v1727 = vpack.c.bf16 %v1726, %v1726
    %1728 = vmatprep.subr.bf16.mxu0 %v1554
    %1729 = vmatpush1.bf16.msra.mxu0 %v1553
    %1730 = vmatprep.subr.bf16.mxu0 %v1558
    %1731 = vmatpush1.bf16.msra.mxu0 %v1557
    %1732 = vmatprep.subr.bf16.mxu0 %v1562
    %1733 = vmatpush1.bf16.msra.mxu0 %v1561
    %1734 = vmatprep.subr.bf16.mxu0 %v1566
    %1735 = vmatpush1.bf16.msra.mxu0 %v1565
    %1736 = vmatprep.subr.bf16.mxu0 %v1570
    %1737 = vmatpush1.bf16.msra.mxu0 %v1569
    %1738 = vmatprep.subr.bf16.mxu0 %v1574
    %1739 = vmatpush1.bf16.msra.mxu0 %v1573
    %1740 = vmatprep.subr.bf16.mxu0 %v1578
    %1741 = vmatpush1.bf16.msra.mxu0 %v1577
    %1742 = vmatprep.subr.bf16.mxu0 %v1582
    %1743 = vmatpush1.bf16.msra.mxu0 %v1581
    %1744 = vmatprep.subr.bf16.mxu0 0
    %1745 = vmatpush1.bf16.msra.mxu0 0
    %1746 = vmatprep.subr.bf16.mxu0 0
    %1747 = vmatpush1.bf16.msra.mxu0 0
    %1748 = vmatprep.subr.bf16.mxu0 0
    %1749 = vmatpush1.bf16.msra.mxu0 0
    %1750 = vmatprep.subr.bf16.mxu0 0
    %1751 = vmatpush1.bf16.msra.mxu0 0
    %1752 = vmatprep.subr.bf16.mxu0 0
    %1753 = vmatpush1.bf16.msra.mxu0 0
    %1754 = vmatprep.subr.bf16.mxu0 0
    %1755 = vmatpush1.bf16.msra.mxu0 0
    %1756 = vmatprep.subr.bf16.mxu0 0
    %1757 = vmatpush1.bf16.msra.mxu0 0
    %1758 = vmatprep.subr.bf16.mxu0 0
    %1759 = vmatpush1.bf16.msra.mxu0 0
    %1760 = vmatprep.mubr.bf16.mxu0 0
    %1761 = vmatmul.mubr.bf16.gmra.mrb[0].mxu0 %v1727
    %v1762 = vpop.f32.mrb[0].mxu0
    %v1763 = vadd.f32 0.0, %v1762
    %v1764 = vpop.f32.mrb[0].mxu0
    %v1765 = vadd.f32 0.0, %v1764
    %v1766 = vpop.f32.mrb[0].mxu0
    %v1767 = vpop.f32.mrb[0].mxu0
    %1768 = vdwg.mxu0
    %1769 = vmatprep.subr.bf16.mxu0 %v1556
    %1770 = vmatpush1.bf16.msra.mxu0 %v1555
    %1771 = vmatprep.subr.bf16.mxu0 %v1560
    %1772 = vmatpush1.bf16.msra.mxu0 %v1559
    %1773 = vmatprep.subr.bf16.mxu0 %v1564
    %1774 = vmatpush1.bf16.msra.mxu0 %v1563
    %1775 = vmatprep.subr.bf16.mxu0 %v1568
    %1776 = vmatpush1.bf16.msra.mxu0 %v1567
    %1777 = vmatprep.subr.bf16.mxu0 %v1572
    %1778 = vmatpush1.bf16.msra.mxu0 %v1571
    %1779 = vmatprep.subr.bf16.mxu0 %v1576
    %1780 = vmatpush1.bf16.msra.mxu0 %v1575
    %1781 = vmatprep.subr.bf16.mxu0 %v1580
    %1782 = vmatpush1.bf16.msra.mxu0 %v1579
    %1783 = vmatprep.subr.bf16.mxu0 %v1584
    %1784 = vmatpush1.bf16.msra.mxu0 %v1583
    %1785 = vmatprep.subr.bf16.mxu0 0
    %1786 = vmatpush1.bf16.msra.mxu0 0
    %1787 = vmatprep.subr.bf16.mxu0 0
    %1788 = vmatpush1.bf16.msra.mxu0 0
    %1789 = vmatprep.subr.bf16.mxu0 0
    %1790 = vmatpush1.bf16.msra.mxu0 0
    %1791 = vmatprep.subr.bf16.mxu0 0
    %1792 = vmatpush1.bf16.msra.mxu0 0
    %1793 = vmatprep.subr.bf16.mxu0 0
    %1794 = vmatpush1.bf16.msra.mxu0 0
    %1795 = vmatprep.subr.bf16.mxu0 0
    %1796 = vmatpush1.bf16.msra.mxu0 0
    %1797 = vmatprep.subr.bf16.mxu0 0
    %1798 = vmatpush1.bf16.msra.mxu0 0
    %1799 = vmatprep.subr.bf16.mxu0 0
    %1800 = vmatpush1.bf16.msra.mxu0 0
    %1801 = vmatprep.mubr.bf16.mxu0 0
    %1802 = vmatmul.mubr.bf16.gmra.mrb[0].mxu0 %v1727
    %v1803 = vpop.f32.mrb[0].mxu0
    %v1804 = vadd.f32 0.0, %v1803
    %v1805 = vpop.f32.mrb[0].mxu0
    %v1806 = vadd.f32 0.0, %v1805
    %v1807 = vpop.f32.mrb[0].mxu0
    %v1808 = vpop.f32.mrb[0].mxu0
    %1809 = vdwg.mxu0
    %v1814 = vrot.slane %v1763, 6
    %v1815 = vrot.slane %v1765, 6
    %v1816 = vrot.slane %v1804, 6
    %v1817 = vrot.slane %v1806, 6
    %v1822 = vadd.f32 %v1374, %v1814
    %v1823 = vadd.f32 %v1376, %v1815
    %v1824 = vadd.f32 %v1417, %v1816
    %v1825 = vadd.f32 %v1419, %v1817
    %v1826 = vxor.u32 %v1822, 2147483648
    %v1827 = vxor.u32 %v1823, 2147483648
    %v1828 = vxor.u32 %v1824, 2147483648
    %v1829 = vmul.f32 %v1826, 1.442695
    %v1830 = vpow.pop %v1829
    %v1831 = vmul.f32 %v1827, 1.442695
    %v1832 = vpow.pop %v1831
    %v1833 = vmul.f32 %v1828, 1.442695
    %v1834 = vpow.pop %v1833
    %v1835 = vadd.f32 %v1830, 1.0
    %v1836 = vadd.f32 %v1832, 1.0
    %v1837 = vadd.f32 %v1834, 1.0
    %v1838 = vrcp.pop %v1835
    %v1839 = vmul.f32 1.0, %v1838
    %v1840 = vrcp.pop %v1836
    %v1841 = vmul.f32 1.0, %v1840
    %v1842 = vrcp.pop %v1837
    %v1843 = vmul.f32 1.0, %v1842
    %v1844 = vtanh.pop %v1825
    %v1846 = vrot.slane %v1724, 6
    %v1848 = vmul.f32 %v1841, %v1846
    %v1849 = vmul.f32 %v1839, %v1844
    %v1850 = vadd.f32 %v1848, %v1849
    %v1851 = vtanh.pop %v1850
    %v1852 = vmul.f32 %v1843, %v1851
    %v1853 = vpack.c.bf16 %v1852, %v1852
    %v1855 = vrot.slane %v1853, 1
    %1857 = vmatprep.subr.bf16.mxu0 %v1554
    %1858 = vmatpush1.bf16.msra.mxu0 %v1553
    %1859 = vmatprep.subr.bf16.mxu0 %v1558
    %1860 = vmatpush1.bf16.msra.mxu0 %v1557
    %1861 = vmatprep.subr.bf16.mxu0 %v1562
    %1862 = vmatpush1.bf16.msra.mxu0 %v1561
    %1863 = vmatprep.subr.bf16.mxu0 %v1566
    %1864 = vmatpush1.bf16.msra.mxu0 %v1565
    %1865 = vmatprep.subr.bf16.mxu0 %v1570
    %1866 = vmatpush1.bf16.msra.mxu0 %v1569
    %1867 = vmatprep.subr.bf16.mxu0 %v1574
    %1868 = vmatpush1.bf16.msra.mxu0 %v1573
    %1869 = vmatprep.subr.bf16.mxu0 %v1578
    %1870 = vmatpush1.bf16.msra.mxu0 %v1577
    %1871 = vmatprep.subr.bf16.mxu0 %v1582
    %1872 = vmatpush1.bf16.msra.mxu0 %v1581
    %1873 = vmatprep.subr.bf16.mxu0 0
    %1874 = vmatpush1.bf16.msra.mxu0 0
    %1875 = vmatprep.subr.bf16.mxu0 0
    %1876 = vmatpush1.bf16.msra.mxu0 0
    %1877 = vmatprep.subr.bf16.mxu0 0
    %1878 = vmatpush1.bf16.msra.mxu0 0
    %1879 = vmatprep.subr.bf16.mxu0 0
    %1880 = vmatpush1.bf16.msra.mxu0 0
    %1881 = vmatprep.subr.bf16.mxu0 0
    %1882 = vmatpush1.bf16.msra.mxu0 0
    %1883 = vmatprep.subr.bf16.mxu0 0
    %1884 = vmatpush1.bf16.msra.mxu0 0
    %1885 = vmatprep.subr.bf16.mxu0 0
    %1886 = vmatpush1.bf16.msra.mxu0 0
    %1887 = vmatprep.subr.bf16.mxu0 0
    %1888 = vmatpush1.bf16.msra.mxu0 0
    %1889 = vmatprep.mubr.bf16.mxu0 0
    %1890 = vmatmul.mubr.bf16.gmra.mrb[0].mxu0 %v1855
    %v1891 = vpop.f32.mrb[0].mxu0
    %v1892 = vadd.f32 0.0, %v1891
    %v1893 = vpop.f32.mrb[0].mxu0
    %v1894 = vadd.f32 0.0, %v1893
    %v1895 = vpop.f32.mrb[0].mxu0
    %v1896 = vpop.f32.mrb[0].mxu0
    %1897 = vdwg.mxu0
    %1898 = vmatprep.subr.bf16.mxu0 %v1556
    %1899 = vmatpush1.bf16.msra.mxu0 %v1555
    %1900 = vmatprep.subr.bf16.mxu0 %v1560
    %1901 = vmatpush1.bf16.msra.mxu0 %v1559
    %1902 = vmatprep.subr.bf16.mxu0 %v1564
    %1903 = vmatpush1.bf16.msra.mxu0 %v1563
    %1904 = vmatprep.subr.bf16.mxu0 %v1568
    %1905 = vmatpush1.bf16.msra.mxu0 %v1567
    %1906 = vmatprep.subr.bf16.mxu0 %v1572
    %1907 = vmatpush1.bf16.msra.mxu0 %v1571
    %1908 = vmatprep.subr.bf16.mxu0 %v1576
    %1909 = vmatpush1.bf16.msra.mxu0 %v1575
    %1910 = vmatprep.subr.bf16.mxu0 %v1580
    %1911 = vmatpush1.bf16.msra.mxu0 %v1579
    %1912 = vmatprep.subr.bf16.mxu0 %v1584
    %1913 = vmatpush1.bf16.msra.mxu0 %v1583
    %1914 = vmatprep.subr.bf16.mxu0 0
    %1915 = vmatpush1.bf16.msra.mxu0 0
    %1916 = vmatprep.subr.bf16.mxu0 0
    %1917 = vmatpush1.bf16.msra.mxu0 0
    %1918 = vmatprep.subr.bf16.mxu0 0
    %1919 = vmatpush1.bf16.msra.mxu0 0
    %1920 = vmatprep.subr.bf16.mxu0 0
    %1921 = vmatpush1.bf16.msra.mxu0 0
    %1922 = vmatprep.subr.bf16.mxu0 0
    %1923 = vmatpush1.bf16.msra.mxu0 0
    %1924 = vmatprep.subr.bf16.mxu0 0
    %1925 = vmatpush1.bf16.msra.mxu0 0
    %1926 = vmatprep.subr.bf16.mxu0 0
    %1927 = vmatpush1.bf16.msra.mxu0 0
    %1928 = vmatprep.subr.bf16.mxu0 0
    %1929 = vmatpush1.bf16.msra.mxu0 0
    %1930 = vmatprep.mubr.bf16.mxu0 0
    %1931 = vmatmul.mubr.bf16.gmra.mrb[0].mxu0 %v1855
    %v1932 = vpop.f32.mrb[0].mxu0
    %v1933 = vadd.f32 0.0, %v1932
    %v1934 = vpop.f32.mrb[0].mxu0
    %v1935 = vadd.f32 0.0, %v1934
    %v1936 = vpop.f32.mrb[0].mxu0
    %v1937 = vpop.f32.mrb[0].mxu0
    %1938 = vdwg.mxu0
    %v1943 = vrot.slane %v1892, 4
    %v1944 = vrot.slane %v1894, 4
    %v1945 = vrot.slane %v1933, 4
    %v1946 = vrot.slane %v1935, 4
    %v1951 = vadd.f32 %v1374, %v1943
    %v1952 = vadd.f32 %v1376, %v1944
    %v1953 = vadd.f32 %v1417, %v1945
    %v1954 = vadd.f32 %v1419, %v1946
    %v1955 = vxor.u32 %v1951, 2147483648
    %v1956 = vxor.u32 %v1952, 2147483648
    %v1957 = vxor.u32 %v1953, 2147483648
    %v1958 = vmul.f32 %v1955, 1.442695
    %v1959 = vpow.pop %v1958
    %v1960 = vmul.f32 %v1956, 1.442695
    %v1961 = vpow.pop %v1960
    %v1962 = vmul.f32 %v1957, 1.442695
    %v1963 = vpow.pop %v1962
    %v1964 = vadd.f32 %v1959, 1.0
    %v1965 = vadd.f32 %v1961, 1.0
    %v1966 = vadd.f32 %v1963, 1.0
    %v1967 = vrcp.pop %v1964
    %v1968 = vmul.f32 1.0, %v1967
    %v1969 = vrcp.pop %v1965
    %v1970 = vmul.f32 1.0, %v1969
    %v1971 = vrcp.pop %v1966
    %v1972 = vmul.f32 1.0, %v1971
    %v1973 = vtanh.pop %v1954
    %v1975 = vrot.slane %v1850, 6
    %v1977 = vmul.f32 %v1970, %v1975
    %v1978 = vmul.f32 %v1968, %v1973
    %v1979 = vadd.f32 %v1977, %v1978
    %v1980 = vtanh.pop %v1979
    %v1981 = vmul.f32 %v1972, %v1980
    %v1982 = vpack.c.bf16 %v1981, %v1981
    %v1984 = vrot.slane %v1982, 2
    %1986 = vmatprep.subr.bf16.mxu0 %v1554
    %1987 = vmatpush1.bf16.msra.mxu0 %v1553
    %1988 = vmatprep.subr.bf16.mxu0 %v1558
    %1989 = vmatpush1.bf16.msra.mxu0 %v1557
    %1990 = vmatprep.subr.bf16.mxu0 %v1562
    %1991 = vmatpush1.bf16.msra.mxu0 %v1561
    %1992 = vmatprep.subr.bf16.mxu0 %v1566
    %1993 = vmatpush1.bf16.msra.mxu0 %v1565
    %1994 = vmatprep.subr.bf16.mxu0 %v1570
    %1995 = vmatpush1.bf16.msra.mxu0 %v1569
    %1996 = vmatprep.subr.bf16.mxu0 %v1574
    %1997 = vmatpush1.bf16.msra.mxu0 %v1573
    %1998 = vmatprep.subr.bf16.mxu0 %v1578
    %1999 = vmatpush1.bf16.msra.mxu0 %v1577
    %2000 = vmatprep.subr.bf16.mxu0 %v1582
    %2001 = vmatpush1.bf16.msra.mxu0 %v1581
    %2002 = vmatprep.subr.bf16.mxu0 0
    %2003 = vmatpush1.bf16.msra.mxu0 0
    %2004 = vmatprep.subr.bf16.mxu0 0
    %2005 = vmatpush1.bf16.msra.mxu0 0
    %2006 = vmatprep.subr.bf16.mxu0 0
    %2007 = vmatpush1.bf16.msra.mxu0 0
    %2008 = vmatprep.subr.bf16.mxu0 0
    %2009 = vmatpush1.bf16.msra.mxu0 0
    %2010 = vmatprep.subr.bf16.mxu0 0
    %2011 = vmatpush1.bf16.msra.mxu0 0
    %2012 = vmatprep.subr.bf16.mxu0 0
    %2013 = vmatpush1.bf16.msra.mxu0 0
    %2014 = vmatprep.subr.bf16.mxu0 0
    %2015 = vmatpush1.bf16.msra.mxu0 0
    %2016 = vmatprep.subr.bf16.mxu0 0
    %2017 = vmatpush1.bf16.msra.mxu0 0
    %2018 = vmatprep.mubr.bf16.mxu0 0
    %2019 = vmatmul.mubr.bf16.gmra.mrb[0].mxu0 %v1984
    %v2020 = vpop.f32.mrb[0].mxu0
    %v2021 = vadd.f32 0.0, %v2020
    %v2022 = vpop.f32.mrb[0].mxu0
    %v2023 = vadd.f32 0.0, %v2022
    %v2024 = vpop.f32.mrb[0].mxu0
    %v2025 = vpop.f32.mrb[0].mxu0
    %2026 = vdwg.mxu0
    %2027 = vmatprep.subr.bf16.mxu0 %v1556
    %2028 = vmatpush1.bf16.msra.mxu0 %v1555
    %2029 = vmatprep.subr.bf16.mxu0 %v1560
    %2030 = vmatpush1.bf16.msra.mxu0 %v1559
    %2031 = vmatprep.subr.bf16.mxu0 %v1564
    %2032 = vmatpush1.bf16.msra.mxu0 %v1563
    %2033 = vmatprep.subr.bf16.mxu0 %v1568
    %2034 = vmatpush1.bf16.msra.mxu0 %v1567
    %2035 = vmatprep.subr.bf16.mxu0 %v1572
    %2036 = vmatpush1.bf16.msra.mxu0 %v1571
    %2037 = vmatprep.subr.bf16.mxu0 %v1576
    %2038 = vmatpush1.bf16.msra.mxu0 %v1575
    %2039 = vmatprep.subr.bf16.mxu0 %v1580
    %2040 = vmatpush1.bf16.msra.mxu0 %v1579
    %2041 = vmatprep.subr.bf16.mxu0 %v1584
    %2042 = vmatpush1.bf16.msra.mxu0 %v1583
    %2043 = vmatprep.subr.bf16.mxu0 0
    %2044 = vmatpush1.bf16.msra.mxu0 0
    %2045 = vmatprep.subr.bf16.mxu0 0
    %2046 = vmatpush1.bf16.msra.mxu0 0
    %2047 = vmatprep.subr.bf16.mxu0 0
    %2048 = vmatpush1.bf16.msra.mxu0 0
    %2049 = vmatprep.subr.bf16.mxu0 0
    %2050 = vmatpush1.bf16.msra.mxu0 0
    %2051 = vmatprep.subr.bf16.mxu0 0
    %2052 = vmatpush1.bf16.msra.mxu0 0
    %2053 = vmatprep.subr.bf16.mxu0 0
    %2054 = vmatpush1.bf16.msra.mxu0 0
    %2055 = vmatprep.subr.bf16.mxu0 0
    %2056 = vmatpush1.bf16.msra.mxu0 0
    %2057 = vmatprep.subr.bf16.mxu0 0
    %2058 = vmatpush1.bf16.msra.mxu0 0
    %2059 = vmatprep.mubr.bf16.mxu0 0
    %2060 = vmatmul.mubr.bf16.gmra.mrb[0].mxu0 %v1984
    %v2061 = vpop.f32.mrb[0].mxu0
    %v2062 = vadd.f32 0.0, %v2061
    %v2063 = vpop.f32.mrb[0].mxu0
    %v2064 = vadd.f32 0.0, %v2063
    %v2065 = vpop.f32.mrb[0].mxu0
    %v2066 = vpop.f32.mrb[0].mxu0
    %2067 = vdwg.mxu0
    %v2072 = vrot.slane %v2021, 2
    %v2073 = vrot.slane %v2023, 2
    %v2074 = vrot.slane %v2062, 2
    %v2075 = vrot.slane %v2064, 2
    %v2080 = vadd.f32 %v1374, %v2072
    %v2081 = vadd.f32 %v1376, %v2073
    %v2082 = vadd.f32 %v1417, %v2074
    %v2083 = vadd.f32 %v1419, %v2075
    %v2084 = vxor.u32 %v2080, 2147483648
    %v2085 = vxor.u32 %v2081, 2147483648
    %v2086 = vxor.u32 %v2082, 2147483648
    %v2087 = vmul.f32 %v2084, 1.442695
    %v2088 = vpow.pop %v2087
    %v2089 = vmul.f32 %v2085, 1.442695
    %v2090 = vpow.pop %v2089
    %v2091 = vmul.f32 %v2086, 1.442695
    %v2092 = vpow.pop %v2091
    %v2093 = vadd.f32 %v2088, 1.0
    %v2094 = vadd.f32 %v2090, 1.0
    %v2095 = vadd.f32 %v2092, 1.0
    %v2096 = vrcp.pop %v2093
    %v2097 = vmul.f32 1.0, %v2096
    %v2098 = vrcp.pop %v2094
    %v2099 = vmul.f32 1.0, %v2098
    %v2100 = vrcp.pop %v2095
    %v2101 = vmul.f32 1.0, %v2100
    %v2102 = vtanh.pop %v2083
    %v2104 = vrot.slane %v1979, 6
    %v2106 = vmul.f32 %v2099, %v2104
    %v2107 = vmul.f32 %v2097, %v2102
    %v2108 = vadd.f32 %v2106, %v2107
    %v2109 = vtanh.pop %v2108
    %v2110 = vmul.f32 %v2101, %v2109
    %v2111 = vpack.c.bf16 %v2110, %v2110
    %v2113 = vrot.slane %v2111, 3
    %2115 = vmatprep.subr.bf16.mxu0 %v1554
    %2116 = vmatpush1.bf16.msra.mxu0 %v1553
    %2117 = vmatprep.subr.bf16.mxu0 %v1558
    %2118 = vmatpush1.bf16.msra.mxu0 %v1557
    %2119 = vmatprep.subr.bf16.mxu0 %v1562
    %2120 = vmatpush1.bf16.msra.mxu0 %v1561
    %2121 = vmatprep.subr.bf16.mxu0 %v1566
    %2122 = vmatpush1.bf16.msra.mxu0 %v1565
    %2123 = vmatprep.subr.bf16.mxu0 %v1570
    %2124 = vmatpush1.bf16.msra.mxu0 %v1569
    %2125 = vmatprep.subr.bf16.mxu0 %v1574
    %2126 = vmatpush1.bf16.msra.mxu0 %v1573
    %2127 = vmatprep.subr.bf16.mxu0 %v1578
    %2128 = vmatpush1.bf16.msra.mxu0 %v1577
    %2129 = vmatprep.subr.bf16.mxu0 %v1582
    %2130 = vmatpush1.bf16.msra.mxu0 %v1581
    %2131 = vmatprep.subr.bf16.mxu0 0
    %2132 = vmatpush1.bf16.msra.mxu0 0
    %2133 = vmatprep.subr.bf16.mxu0 0
    %2134 = vmatpush1.bf16.msra.mxu0 0
    %2135 = vmatprep.subr.bf16.mxu0 0
    %2136 = vmatpush1.bf16.msra.mxu0 0
    %2137 = vmatprep.subr.bf16.mxu0 0
    %2138 = vmatpush1.bf16.msra.mxu0 0
    %2139 = vmatprep.subr.bf16.mxu0 0
    %2140 = vmatpush1.bf16.msra.mxu0 0
    %2141 = vmatprep.subr.bf16.mxu0 0
    %2142 = vmatpush1.bf16.msra.mxu0 0
    %2143 = vmatprep.subr.bf16.mxu0 0
    %2144 = vmatpush1.bf16.msra.mxu0 0
    %2145 = vmatprep.subr.bf16.mxu0 0
    %2146 = vmatpush1.bf16.msra.mxu0 0
    %2147 = vmatprep.mubr.bf16.mxu0 0
    %2148 = vmatmul.mubr.bf16.gmra.mrb[0].mxu0 %v2113
    %v2149 = vpop.f32.mrb[0].mxu0
    %v2150 = vadd.f32 0.0, %v2149
    %v2151 = vpop.f32.mrb[0].mxu0
    %v2152 = vadd.f32 0.0, %v2151
    %v2153 = vpop.f32.mrb[0].mxu0
    %v2154 = vpop.f32.mrb[0].mxu0
    %2155 = vdwg.mxu0
    %2156 = vmatprep.subr.bf16.mxu0 %v1556
    %2157 = vmatpush1.bf16.msra.mxu0 %v1555
    %2158 = vmatprep.subr.bf16.mxu0 %v1560
    %2159 = vmatpush1.bf16.msra.mxu0 %v1559
    %2160 = vmatprep.subr.bf16.mxu0 %v1564
    %2161 = vmatpush1.bf16.msra.mxu0 %v1563
    %2162 = vmatprep.subr.bf16.mxu0 %v1568
    %2163 = vmatpush1.bf16.msra.mxu0 %v1567
    %2164 = vmatprep.subr.bf16.mxu0 %v1572
    %2165 = vmatpush1.bf16.msra.mxu0 %v1571
    %2166 = vmatprep.subr.bf16.mxu0 %v1576
    %2167 = vmatpush1.bf16.msra.mxu0 %v1575
    %2168 = vmatprep.subr.bf16.mxu0 %v1580
    %2169 = vmatpush1.bf16.msra.mxu0 %v1579
    %2170 = vmatprep.subr.bf16.mxu0 %v1584
    %2171 = vmatpush1.bf16.msra.mxu0 %v1583
    %2172 = vmatprep.subr.bf16.mxu0 0
    %2173 = vmatpush1.bf16.msra.mxu0 0
    %2174 = vmatprep.subr.bf16.mxu0 0
    %2175 = vmatpush1.bf16.msra.mxu0 0
    %2176 = vmatprep.subr.bf16.mxu0 0
    %2177 = vmatpush1.bf16.msra.mxu0 0
    %2178 = vmatprep.subr.bf16.mxu0 0
    %2179 = vmatpush1.bf16.msra.mxu0 0
    %2180 = vmatprep.subr.bf16.mxu0 0
    %2181 = vmatpush1.bf16.msra.mxu0 0
    %2182 = vmatprep.subr.bf16.mxu0 0
    %2183 = vmatpush1.bf16.msra.mxu0 0
    %2184 = vmatprep.subr.bf16.mxu0 0
    %2185 = vmatpush1.bf16.msra.mxu0 0
    %2186 = vmatprep.subr.bf16.mxu0 0
    %2187 = vmatpush1.bf16.msra.mxu0 0
    %2188 = vmatprep.mubr.bf16.mxu0 0
    %2189 = vmatmul.mubr.bf16.gmra.mrb[0].mxu0 %v2113
    %v2190 = vpop.f32.mrb[0].mxu0
    %v2191 = vadd.f32 0.0, %v2190
    %v2192 = vpop.f32.mrb[0].mxu0
    %v2193 = vadd.f32 0.0, %v2192
    %v2194 = vpop.f32.mrb[0].mxu0
    %v2195 = vpop.f32.mrb[0].mxu0
    %2196 = vdwg.mxu0
    %v2197 = vadd.f32 %v1378, %v2150
    %v2198 = vadd.f32 %v1380, %v2152
    %v2199 = vadd.f32 %v1421, %v2191
    %v2200 = vadd.f32 %v1423, %v2193
    %v2201 = vxor.u32 %v2197, 2147483648
    %v2202 = vxor.u32 %v2198, 2147483648
    %v2203 = vxor.u32 %v2199, 2147483648
    %v2204 = vmul.f32 %v2201, 1.442695
    %v2205 = vpow.pop %v2204
    %v2206 = vmul.f32 %v2202, 1.442695
    %v2207 = vpow.pop %v2206
    %v2208 = vmul.f32 %v2203, 1.442695
    %v2209 = vpow.pop %v2208
    %v2210 = vadd.f32 %v2205, 1.0
    %v2211 = vadd.f32 %v2207, 1.0
    %v2212 = vadd.f32 %v2209, 1.0
    %v2213 = vrcp.pop %v2210
    %v2214 = vmul.f32 1.0, %v2213
    %v2215 = vrcp.pop %v2211
    %v2216 = vmul.f32 1.0, %v2215
    %v2217 = vrcp.pop %v2212
    %v2218 = vmul.f32 1.0, %v2217
    %v2219 = vtanh.pop %v2200
    %v2221 = vrot.slane %v2108, 6
    %v2223 = vmul.f32 %v2216, %v2221
    %v2224 = vmul.f32 %v2214, %v2219
    %v2225 = vadd.f32 %v2223, %v2224
    %v2226 = vtanh.pop %v2225
    %v2227 = vmul.f32 %v2218, %v2226
    %v2228 = vpack.c.bf16 %v2227, %v2227
    %2229 = vmatprep.subr.bf16.mxu0 %v1554
    %2230 = vmatpush1.bf16.msra.mxu0 %v1553
    %2231 = vmatprep.subr.bf16.mxu0 %v1558
    %2232 = vmatpush1.bf16.msra.mxu0 %v1557
    %2233 = vmatprep.subr.bf16.mxu0 %v1562
    %2234 = vmatpush1.bf16.msra.mxu0 %v1561
    %2235 = vmatprep.subr.bf16.mxu0 %v1566
    %2236 = vmatpush1.bf16.msra.mxu0 %v1565
    %2237 = vmatprep.subr.bf16.mxu0 %v1570
    %2238 = vmatpush1.bf16.msra.mxu0 %v1569
    %2239 = vmatprep.subr.bf16.mxu0 %v1574
    %2240 = vmatpush1.bf16.msra.mxu0 %v1573
    %2241 = vmatprep.subr.bf16.mxu0 %v1578
    %2242 = vmatpush1.bf16.msra.mxu0 %v1577
    %2243 = vmatprep.subr.bf16.mxu0 %v1582
    %2244 = vmatpush1.bf16.msra.mxu0 %v1581
    %2245 = vmatprep.subr.bf16.mxu0 0
    %2246 = vmatpush1.bf16.msra.mxu0 0
    %2247 = vmatprep.subr.bf16.mxu0 0
    %2248 = vmatpush1.bf16.msra.mxu0 0
    %2249 = vmatprep.subr.bf16.mxu0 0
    %2250 = vmatpush1.bf16.msra.mxu0 0
    %2251 = vmatprep.subr.bf16.mxu0 0
    %2252 = vmatpush1.bf16.msra.mxu0 0
    %2253 = vmatprep.subr.bf16.mxu0 0
    %2254 = vmatpush1.bf16.msra.mxu0 0
    %2255 = vmatprep.subr.bf16.mxu0 0
    %2256 = vmatpush1.bf16.msra.mxu0 0
    %2257 = vmatprep.subr.bf16.mxu0 0
    %2258 = vmatpush1.bf16.msra.mxu0 0
    %2259 = vmatprep.subr.bf16.mxu0 0
    %2260 = vmatpush1.bf16.msra.mxu0 0
    %2261 = vmatprep.mubr.bf16.mxu0 0
    %2262 = vmatmul.mubr.bf16.gmra.mrb[0].mxu0 %v2228
    %v2263 = vpop.f32.mrb[0].mxu0
    %v2264 = vadd.f32 0.0, %v2263
    %v2265 = vpop.f32.mrb[0].mxu0
    %v2266 = vadd.f32 0.0, %v2265
    %v2267 = vpop.f32.mrb[0].mxu0
    %v2268 = vpop.f32.mrb[0].mxu0
    %2269 = vdwg.mxu0
    %2270 = vmatprep.subr.bf16.mxu0 %v1556
    %2271 = vmatpush1.bf16.msra.mxu0 %v1555
    %2272 = vmatprep.subr.bf16.mxu0 %v1560
    %2273 = vmatpush1.bf16.msra.mxu0 %v1559
    %2274 = vmatprep.subr.bf16.mxu0 %v1564
    %2275 = vmatpush1.bf16.msra.mxu0 %v1563
    %2276 = vmatprep.subr.bf16.mxu0 %v1568
    %2277 = vmatpush1.bf16.msra.mxu0 %v1567
    %2278 = vmatprep.subr.bf16.mxu0 %v1572
    %2279 = vmatpush1.bf16.msra.mxu0 %v1571
    %2280 = vmatprep.subr.bf16.mxu0 %v1576
    %2281 = vmatpush1.bf16.msra.mxu0 %v1575
    %2282 = vmatprep.subr.bf16.mxu0 %v1580
    %2283 = vmatpush1.bf16.msra.mxu0 %v1579
    %2284 = vmatprep.subr.bf16.mxu0 %v1584
    %2285 = vmatpush1.bf16.msra.mxu0 %v1583
    %2286 = vmatprep.subr.bf16.mxu0 0
    %2287 = vmatpush1.bf16.msra.mxu0 0
    %2288 = vmatprep.subr.bf16.mxu0 0
    %2289 = vmatpush1.bf16.msra.mxu0 0
    %2290 = vmatprep.subr.bf16.mxu0 0
    %2291 = vmatpush1.bf16.msra.mxu0 0
    %2292 = vmatprep.subr.bf16.mxu0 0
    %2293 = vmatpush1.bf16.msra.mxu0 0
    %2294 = vmatprep.subr.bf16.mxu0 0
    %2295 = vmatpush1.bf16.msra.mxu0 0
    %2296 = vmatprep.subr.bf16.mxu0 0
    %2297 = vmatpush1.bf16.msra.mxu0 0
    %2298 = vmatprep.subr.bf16.mxu0 0
    %2299 = vmatpush1.bf16.msra.mxu0 0
    %2300 = vmatprep.subr.bf16.mxu0 0
    %2301 = vmatpush1.bf16.msra.mxu0 0
    %2302 = vmatprep.mubr.bf16.mxu0 0
    %2303 = vmatmul.mubr.bf16.gmra.mrb[0].mxu0 %v2228
    %v2304 = vpop.f32.mrb[0].mxu0
    %v2305 = vadd.f32 0.0, %v2304
    %v2306 = vpop.f32.mrb[0].mxu0
    %v2307 = vadd.f32 0.0, %v2306
    %v2308 = vpop.f32.mrb[0].mxu0
    %v2309 = vpop.f32.mrb[0].mxu0
    %2310 = vdwg.mxu0
    %v2315 = vrot.slane %v2264, 6
    %v2316 = vrot.slane %v2266, 6
    %v2317 = vrot.slane %v2305, 6
    %v2318 = vrot.slane %v2307, 6
    %v2323 = vadd.f32 %v1378, %v2315
    %v2324 = vadd.f32 %v1380, %v2316
    %v2325 = vadd.f32 %v1421, %v2317
    %v2326 = vadd.f32 %v1423, %v2318
    %v2327 = vxor.u32 %v2323, 2147483648
    %v2328 = vxor.u32 %v2324, 2147483648
    %v2329 = vxor.u32 %v2325, 2147483648
    %v2330 = vmul.f32 %v2327, 1.442695
    %v2331 = vpow.pop %v2330
    %v2332 = vmul.f32 %v2328, 1.442695
    %v2333 = vpow.pop %v2332
    %v2334 = vmul.f32 %v2329, 1.442695
    %v2335 = vpow.pop %v2334
    %v2336 = vadd.f32 %v2331, 1.0
    %v2337 = vadd.f32 %v2333, 1.0
    %v2338 = vadd.f32 %v2335, 1.0
    %v2339 = vrcp.pop %v2336
    %v2340 = vmul.f32 1.0, %v2339
    %v2341 = vrcp.pop %v2337
    %v2342 = vmul.f32 1.0, %v2341
    %v2343 = vrcp.pop %v2338
    %v2344 = vmul.f32 1.0, %v2343
    %v2345 = vtanh.pop %v2326
    %v2347 = vrot.slane %v2225, 6
    %v2349 = vmul.f32 %v2342, %v2347
    %v2350 = vmul.f32 %v2340, %v2345
    %v2351 = vadd.f32 %v2349, %v2350
    %v2352 = vtanh.pop %v2351
    %v2353 = vmul.f32 %v2344, %v2352
    %v2354 = vpack.c.bf16 %v2353, %v2353
    %v2356 = vrot.slane %v2354, 1
    %2358 = vmatprep.subr.bf16.mxu0 %v1554
    %2359 = vmatpush1.bf16.msra.mxu0 %v1553
    %2360 = vmatprep.subr.bf16.mxu0 %v1558
    %2361 = vmatpush1.bf16.msra.mxu0 %v1557
    %2362 = vmatprep.subr.bf16.mxu0 %v1562
    %2363 = vmatpush1.bf16.msra.mxu0 %v1561
    %2364 = vmatprep.subr.bf16.mxu0 %v1566
    %2365 = vmatpush1.bf16.msra.mxu0 %v1565
    %2366 = vmatprep.subr.bf16.mxu0 %v1570
    %2367 = vmatpush1.bf16.msra.mxu0 %v1569
    %2368 = vmatprep.subr.bf16.mxu0 %v1574
    %2369 = vmatpush1.bf16.msra.mxu0 %v1573
    %2370 = vmatprep.subr.bf16.mxu0 %v1578
    %2371 = vmatpush1.bf16.msra.mxu0 %v1577
    %2372 = vmatprep.subr.bf16.mxu0 %v1582
    %2373 = vmatpush1.bf16.msra.mxu0 %v1581
    %2374 = vmatprep.subr.bf16.mxu0 0
    %2375 = vmatpush1.bf16.msra.mxu0 0
    %2376 = vmatprep.subr.bf16.mxu0 0
    %2377 = vmatpush1.bf16.msra.mxu0 0
    %2378 = vmatprep.subr.bf16.mxu0 0
    %2379 = vmatpush1.bf16.msra.mxu0 0
    %2380 = vmatprep.subr.bf16.mxu0 0
    %2381 = vmatpush1.bf16.msra.mxu0 0
    %2382 = vmatprep.subr.bf16.mxu0 0
    %2383 = vmatpush1.bf16.msra.mxu0 0
    %2384 = vmatprep.subr.bf16.mxu0 0
    %2385 = vmatpush1.bf16.msra.mxu0 0
    %2386 = vmatprep.subr.bf16.mxu0 0
    %2387 = vmatpush1.bf16.msra.mxu0 0
    %2388 = vmatprep.subr.bf16.mxu0 0
    %2389 = vmatpush1.bf16.msra.mxu0 0
    %2390 = vmatprep.mubr.bf16.mxu0 0
    %2391 = vmatmul.mubr.bf16.gmra.mrb[0].mxu0 %v2356
    %v2392 = vpop.f32.mrb[0].mxu0
    %v2393 = vadd.f32 0.0, %v2392
    %v2394 = vpop.f32.mrb[0].mxu0
    %v2395 = vadd.f32 0.0, %v2394
    %v2396 = vpop.f32.mrb[0].mxu0
    %v2397 = vpop.f32.mrb[0].mxu0
    %2398 = vdwg.mxu0
    %2399 = vmatprep.subr.bf16.mxu0 %v1556
    %2400 = vmatpush1.bf16.msra.mxu0 %v1555
    %2401 = vmatprep.subr.bf16.mxu0 %v1560
    %2402 = vmatpush1.bf16.msra.mxu0 %v1559
    %2403 = vmatprep.subr.bf16.mxu0 %v1564
    %2404 = vmatpush1.bf16.msra.mxu0 %v1563
    %2405 = vmatprep.subr.bf16.mxu0 %v1568
    %2406 = vmatpush1.bf16.msra.mxu0 %v1567
    %2407 = vmatprep.subr.bf16.mxu0 %v1572
    %2408 = vmatpush1.bf16.msra.mxu0 %v1571
    %2409 = vmatprep.subr.bf16.mxu0 %v1576
    %2410 = vmatpush1.bf16.msra.mxu0 %v1575
    %2411 = vmatprep.subr.bf16.mxu0 %v1580
    %2412 = vmatpush1.bf16.msra.mxu0 %v1579
    %2413 = vmatprep.subr.bf16.mxu0 %v1584
    %2414 = vmatpush1.bf16.msra.mxu0 %v1583
    %2415 = vmatprep.subr.bf16.mxu0 0
    %2416 = vmatpush1.bf16.msra.mxu0 0
    %2417 = vmatprep.subr.bf16.mxu0 0
    %2418 = vmatpush1.bf16.msra.mxu0 0
    %2419 = vmatprep.subr.bf16.mxu0 0
    %2420 = vmatpush1.bf16.msra.mxu0 0
    %2421 = vmatprep.subr.bf16.mxu0 0
    %2422 = vmatpush1.bf16.msra.mxu0 0
    %2423 = vmatprep.subr.bf16.mxu0 0
    %2424 = vmatpush1.bf16.msra.mxu0 0
    %2425 = vmatprep.subr.bf16.mxu0 0
    %2426 = vmatpush1.bf16.msra.mxu0 0
    %2427 = vmatprep.subr.bf16.mxu0 0
    %2428 = vmatpush1.bf16.msra.mxu0 0
    %2429 = vmatprep.subr.bf16.mxu0 0
    %2430 = vmatpush1.bf16.msra.mxu0 0
    %2431 = vmatprep.mubr.bf16.mxu0 0
    %2432 = vmatmul.mubr.bf16.gmra.mrb[0].mxu0 %v2356
    %v2433 = vpop.f32.mrb[0].mxu0
    %v2434 = vadd.f32 0.0, %v2433
    %v2435 = vpop.f32.mrb[0].mxu0
    %v2436 = vadd.f32 0.0, %v2435
    %v2437 = vpop.f32.mrb[0].mxu0
    %v2438 = vpop.f32.mrb[0].mxu0
    %2439 = vdwg.mxu0
    %v2444 = vrot.slane %v2393, 4
    %v2445 = vrot.slane %v2395, 4
    %v2446 = vrot.slane %v2434, 4
    %v2447 = vrot.slane %v2436, 4
    %v2452 = vadd.f32 %v1378, %v2444
    %v2453 = vadd.f32 %v1380, %v2445
    %v2454 = vadd.f32 %v1421, %v2446
    %v2455 = vadd.f32 %v1423, %v2447
    %v2456 = vxor.u32 %v2452, 2147483648
    %v2457 = vxor.u32 %v2453, 2147483648
    %v2458 = vxor.u32 %v2454, 2147483648
    %v2459 = vmul.f32 %v2456, 1.442695
    %v2460 = vpow.pop %v2459
    %v2461 = vmul.f32 %v2457, 1.442695
    %v2462 = vpow.pop %v2461
    %v2463 = vmul.f32 %v2458, 1.442695
    %v2464 = vpow.pop %v2463
    %v2465 = vadd.f32 %v2460, 1.0
    %v2466 = vadd.f32 %v2462, 1.0
    %v2467 = vadd.f32 %v2464, 1.0
    %v2468 = vrcp.pop %v2465
    %v2469 = vmul.f32 1.0, %v2468
    %v2470 = vrcp.pop %v2466
    %v2471 = vmul.f32 1.0, %v2470
    %v2472 = vrcp.pop %v2467
    %v2473 = vmul.f32 1.0, %v2472
    %v2474 = vtanh.pop %v2455
    %v2476 = vrot.slane %v2351, 6
    %v2478 = vmul.f32 %v2471, %v2476
    %v2479 = vmul.f32 %v2469, %v2474
    %v2480 = vadd.f32 %v2478, %v2479
    %v2481 = vtanh.pop %v2480
    %v2482 = vmul.f32 %v2473, %v2481
    %v2483 = vpack.c.bf16 %v2482, %v2482
    %v2485 = vrot.slane %v2483, 2
    %2487 = vmatprep.subr.bf16.mxu0 %v1554
    %2488 = vmatpush1.bf16.msra.mxu0 %v1553
    %2489 = vmatprep.subr.bf16.mxu0 %v1558
    %2490 = vmatpush1.bf16.msra.mxu0 %v1557
    %2491 = vmatprep.subr.bf16.mxu0 %v1562
    %2492 = vmatpush1.bf16.msra.mxu0 %v1561
    %2493 = vmatprep.subr.bf16.mxu0 %v1566
    %2494 = vmatpush1.bf16.msra.mxu0 %v1565
    %2495 = vmatprep.subr.bf16.mxu0 %v1570
    %2496 = vmatpush1.bf16.msra.mxu0 %v1569
    %2497 = vmatprep.subr.bf16.mxu0 %v1574
    %2498 = vmatpush1.bf16.msra.mxu0 %v1573
    %2499 = vmatprep.subr.bf16.mxu0 %v1578
    %2500 = vmatpush1.bf16.msra.mxu0 %v1577
    %2501 = vmatprep.subr.bf16.mxu0 %v1582
    %2502 = vmatpush1.bf16.msra.mxu0 %v1581
    %2503 = vmatprep.subr.bf16.mxu0 0
    %2504 = vmatpush1.bf16.msra.mxu0 0
    %2505 = vmatprep.subr.bf16.mxu0 0
    %2506 = vmatpush1.bf16.msra.mxu0 0
    %2507 = vmatprep.subr.bf16.mxu0 0
    %2508 = vmatpush1.bf16.msra.mxu0 0
    %2509 = vmatprep.subr.bf16.mxu0 0
    %2510 = vmatpush1.bf16.msra.mxu0 0
    %2511 = vmatprep.subr.bf16.mxu0 0
    %2512 = vmatpush1.bf16.msra.mxu0 0
    %2513 = vmatprep.subr.bf16.mxu0 0
    %2514 = vmatpush1.bf16.msra.mxu0 0
    %2515 = vmatprep.subr.bf16.mxu0 0
    %2516 = vmatpush1.bf16.msra.mxu0 0
    %2517 = vmatprep.subr.bf16.mxu0 0
    %2518 = vmatpush1.bf16.msra.mxu0 0
    %2519 = vmatprep.mubr.bf16.mxu0 0
    %2520 = vmatmul.mubr.bf16.gmra.mrb[0].mxu0 %v2485
    %v2521 = vpop.f32.mrb[0].mxu0
    %v2522 = vadd.f32 0.0, %v2521
    %v2523 = vpop.f32.mrb[0].mxu0
    %v2524 = vadd.f32 0.0, %v2523
    %v2525 = vpop.f32.mrb[0].mxu0
    %v2526 = vpop.f32.mrb[0].mxu0
    %2527 = vdwg.mxu0
    %2528 = vmatprep.subr.bf16.mxu0 %v1556
    %2529 = vmatpush1.bf16.msra.mxu0 %v1555
    %2530 = vmatprep.subr.bf16.mxu0 %v1560
    %2531 = vmatpush1.bf16.msra.mxu0 %v1559
    %2532 = vmatprep.subr.bf16.mxu0 %v1564
    %2533 = vmatpush1.bf16.msra.mxu0 %v1563
    %2534 = vmatprep.subr.bf16.mxu0 %v1568
    %2535 = vmatpush1.bf16.msra.mxu0 %v1567
    %2536 = vmatprep.subr.bf16.mxu0 %v1572
    %2537 = vmatpush1.bf16.msra.mxu0 %v1571
    %2538 = vmatprep.subr.bf16.mxu0 %v1576
    %2539 = vmatpush1.bf16.msra.mxu0 %v1575
    %2540 = vmatprep.subr.bf16.mxu0 %v1580
    %2541 = vmatpush1.bf16.msra.mxu0 %v1579
    %2542 = vmatprep.subr.bf16.mxu0 %v1584
    %2543 = vmatpush1.bf16.msra.mxu0 %v1583
    %2544 = vmatprep.subr.bf16.mxu0 0
    %2545 = vmatpush1.bf16.msra.mxu0 0
    %2546 = vmatprep.subr.bf16.mxu0 0
    %2547 = vmatpush1.bf16.msra.mxu0 0
    %2548 = vmatprep.subr.bf16.mxu0 0
    %2549 = vmatpush1.bf16.msra.mxu0 0
    %2550 = vmatprep.subr.bf16.mxu0 0
    %2551 = vmatpush1.bf16.msra.mxu0 0
    %2552 = vmatprep.subr.bf16.mxu0 0
    %2553 = vmatpush1.bf16.msra.mxu0 0
    %2554 = vmatprep.subr.bf16.mxu0 0
    %2555 = vmatpush1.bf16.msra.mxu0 0
    %2556 = vmatprep.subr.bf16.mxu0 0
    %2557 = vmatpush1.bf16.msra.mxu0 0
    %2558 = vmatprep.subr.bf16.mxu0 0
    %2559 = vmatpush1.bf16.msra.mxu0 0
    %2560 = vmatprep.mubr.bf16.mxu0 0
    %2561 = vmatmul.mubr.bf16.gmra.mrb[0].mxu0 %v2485
    %v2562 = vpop.f32.mrb[0].mxu0
    %v2563 = vadd.f32 0.0, %v2562
    %v2564 = vpop.f32.mrb[0].mxu0
    %v2565 = vadd.f32 0.0, %v2564
    %v2566 = vpop.f32.mrb[0].mxu0
    %v2567 = vpop.f32.mrb[0].mxu0
    %2568 = vdwg.mxu0
    %v2573 = vrot.slane %v2522, 2
    %v2574 = vrot.slane %v2524, 2
    %v2575 = vrot.slane %v2563, 2
    %v2576 = vrot.slane %v2565, 2
    %v2581 = vadd.f32 %v1378, %v2573
    %v2582 = vadd.f32 %v1380, %v2574
    %v2583 = vadd.f32 %v1421, %v2575
    %v2584 = vadd.f32 %v1423, %v2576
    %v2585 = vxor.u32 %v2581, 2147483648
    %v2586 = vxor.u32 %v2582, 2147483648
    %v2587 = vxor.u32 %v2583, 2147483648
    %v2588 = vmul.f32 %v2585, 1.442695
    %v2589 = vpow.pop %v2588
    %v2590 = vmul.f32 %v2586, 1.442695
    %v2591 = vpow.pop %v2590
    %v2592 = vmul.f32 %v2587, 1.442695
    %v2593 = vpow.pop %v2592
    %v2594 = vadd.f32 %v2589, 1.0
    %v2595 = vadd.f32 %v2591, 1.0
    %v2596 = vadd.f32 %v2593, 1.0
    %v2597 = vrcp.pop %v2594
    %v2598 = vmul.f32 1.0, %v2597
    %v2599 = vrcp.pop %v2595
    %v2600 = vmul.f32 1.0, %v2599
    %v2601 = vrcp.pop %v2596
    %v2602 = vmul.f32 1.0, %v2601
    %v2603 = vtanh.pop %v2584
    %v2605 = vrot.slane %v2480, 6
    %v2607 = vmul.f32 %v2600, %v2605
    %v2608 = vmul.f32 %v2598, %v2603
    %v2609 = vadd.f32 %v2607, %v2608
    %v2610 = vtanh.pop %v2609
    %v2611 = vmul.f32 %v2602, %v2610
    %v2612 = vld [vmem:[%s8] sm:$0xff]
    %v2613 = vld [vmem:[%s8 + $0x8] sm:$0xff]
    %v2614 = vld [vmem:[%s8 + $0x10] sm:$0xff]
    %v2615 = vld [vmem:[%s8 + $0x18] sm:$0xff]
    %v2616 = vld [vmem:[%s8 + $0x20] sm:$0xff]
    %v2617 = vld [vmem:[%s8 + $0x28] sm:$0xff]
    %v2618 = vld [vmem:[%s8 + $0x30] sm:$0xff]
    %v2619 = vld [vmem:[%s8 + $0x38] sm:$0xff]
    %v2620 = vld [vmem:[%s8 + $0x40] sm:$0xff]
    %v2621 = vld [vmem:[%s8 + $0x48] sm:$0xff]
    %v2622 = vld [vmem:[%s8 + $0x50] sm:$0xff]
    %v2623 = vld [vmem:[%s8 + $0x58] sm:$0xff]
    %v2624 = vld [vmem:[%s8 + $0x60] sm:$0xff]
    %v2625 = vld [vmem:[%s8 + $0x68] sm:$0xff]
    %v2626 = vld [vmem:[%s8 + $0x70] sm:$0xff]
    %v2627 = vld [vmem:[%s8 + $0x78] sm:$0xff]
    %v2628 = vld [vmem:[%s9] sm:$0x1]
    %v2630 = vlaneseq
    %v2631 = vshrl.u32 %v2630, 7
    %v2632 = vsub.s32 0, %v2631
    %v2633 = vrot.slane %v2628, %v2632
    %v2636 = vrot.slane %v2611, 6
    %2638 = vmatprep.subr.mxu0 0.0
    %2639 = vmatpush1.msra.mxu0 %v2612
    %2640 = vmatprep.subr.mxu0 0.0
    %2641 = vmatpush1.msra.mxu0 %v2613
    %2642 = vmatprep.subr.mxu0 0.0
    %2643 = vmatpush1.msra.mxu0 %v2614
    %2644 = vmatprep.subr.mxu0 0.0
    %2645 = vmatpush1.msra.mxu0 %v2615
    %2646 = vmatprep.subr.mxu0 0.0
    %2647 = vmatpush1.msra.mxu0 %v2616
    %2648 = vmatprep.subr.mxu0 0.0
    %2649 = vmatpush1.msra.mxu0 %v2617
    %2650 = vmatprep.subr.mxu0 0.0
    %2651 = vmatpush1.msra.mxu0 %v2618
    %2652 = vmatprep.subr.mxu0 0.0
    %2653 = vmatpush1.msra.mxu0 %v2619
    %2654 = vmatprep.subr.mxu0 0.0
    %2655 = vmatpush1.msra.mxu0 %v2620
    %2656 = vmatprep.subr.mxu0 0.0
    %2657 = vmatpush1.msra.mxu0 %v2621
    %2658 = vmatprep.subr.mxu0 0.0
    %2659 = vmatpush1.msra.mxu0 %v2622
    %2660 = vmatprep.subr.mxu0 0.0
    %2661 = vmatpush1.msra.mxu0 %v2623
    %2662 = vmatprep.subr.mxu0 0.0
    %2663 = vmatpush1.msra.mxu0 %v2624
    %2664 = vmatprep.subr.mxu0 0.0
    %2665 = vmatpush1.msra.mxu0 %v2625
    %2666 = vmatprep.subr.mxu0 0.0
    %2667 = vmatpush1.msra.mxu0 %v2626
    %2668 = vmatprep.subr.mxu0 0.0
    %2669 = vmatpush1.msra.mxu0 %v2627
    %2670 = vmatprep.subr.mxu0 0.0
    %2671 = vmatpush1.msra.mxu0 0.0
    %2672 = vmatprep.subr.mxu0 0.0
    %2673 = vmatpush1.msra.mxu0 0.0
    %2674 = vmatprep.subr.mxu0 0.0
    %2675 = vmatpush1.msra.mxu0 0.0
    %2676 = vmatprep.subr.mxu0 0.0
    %2677 = vmatpush1.msra.mxu0 0.0
    %2678 = vmatprep.subr.mxu0 0.0
    %2679 = vmatpush1.msra.mxu0 0.0
    %2680 = vmatprep.subr.mxu0 0.0
    %2681 = vmatpush1.msra.mxu0 0.0
    %2682 = vmatprep.subr.mxu0 0.0
    %2683 = vmatpush1.msra.mxu0 0.0
    %2684 = vmatprep.subr.mxu0 0.0
    %2685 = vmatpush1.msra.mxu0 0.0
    %2686 = vmatprep.subr.mxu0 0.0
    %2687 = vmatpush1.msra.mxu0 0.0
    %2688 = vmatprep.subr.mxu0 0.0
    %2689 = vmatpush1.msra.mxu0 0.0
    %2690 = vmatprep.subr.mxu0 0.0
    %2691 = vmatpush1.msra.mxu0 0.0
    %2692 = vmatprep.subr.mxu0 0.0
    %2693 = vmatpush1.msra.mxu0 0.0
    %2694 = vmatprep.subr.mxu0 0.0
    %2695 = vmatpush1.msra.mxu0 0.0
    %2696 = vmatprep.subr.mxu0 0.0
    %2697 = vmatpush1.msra.mxu0 0.0
    %2698 = vmatprep.subr.mxu0 0.0
    %2699 = vmatpush1.msra.mxu0 0.0
    %2700 = vmatprep.subr.mxu0 0.0
    %2701 = vmatpush1.msra.mxu0 0.0
    %2702 = vmatprep.mubr.f32.mxu0 0.0
    %2703 = vmatmul.mubr.f32.gmra.mrb[0].mxu0 %v2636
    %v2704 = vpop.f32.mrb[0].mxu0
    %v2705 = vadd.f32 %v2633, %v2704
    %v2706 = vpop.f32.mrb[0].mxu0
    %2707 = vdwg.mxu0
    %vm2708 = vcmask 33792
    %2709 = vst.msk [vmem:[#allocation9] sm:$0x3] %vm2708, %v2705
    // Predicated region
    $region54: #{classifier_forward.1} parent=1 // pred_check
      _
    $region55: #{classifier_forward.1} parent=1 // pred_check_branch
      %2711 = sbr.rel (0) target = $region57
    $region56: #{classifier_forward.1} parent=1 // pred_region
      %s2713 = ssub.s32 32, 32
      %2714 = vsyncadd [#allocation4], %s2713
      %s2716 = sshll.u32 [#allocation9], 4
      %s2717 = int_to_ptr.vmem [resolvable:$true] %s2716
      %2719 = dma.vmem_to_hbm [thread:$0]  %s2717, 32, %s10, [#allocation4]
    $region57: #{classifier_forward.1} parent=1 // pred_fallthru
      _
    // Predicated region
    $region58: #{classifier_forward.1} parent=1 // pred_check
      _
    $region59: #{classifier_forward.1} parent=1 // pred_check_branch
      %2721 = sbr.rel (0) target = $region61
    $region60: #{classifier_forward.1} parent=1 // pred_region
      %2722 = dma.done [#allocation4], 32
    $region61: #{classifier_forward.1} parent=1 // pred_fallthru
      _
    %2723 = vsyncpa [#allocation3], 1
    %2724 = vsyncpa [#allocation8], 1
    %2725 = vsyncpa [#allocation4], 1
    %2726 = vsyncpa [#allocation5], 1

</llo_original>
